<compile_context>
chip_gen: v6e
topology: v6e:2x2x1
jax: 0.10.0
libtpu: 0.0.40
codegen_flags: <defaults>
</compile_context>

<pallas_src>
import functools
import math

import jax
import jax.numpy as jnp
from jax.experimental import pallas as pl
from jax.experimental.pallas import tpu as pltpu

EPS = 1e-6  # LayerNormalization eps


# ----------------------------- kernel helpers -----------------------------

def _layernorm(v, g, b):
    # v: (L, D); g, b broadcastable to (L, D). All f32.
    mu = jnp.mean(v, axis=-1, keepdims=True)
    var = jnp.mean((v - mu) ** 2, axis=-1, keepdims=True)
    return (v - mu) * jax.lax.rsqrt(var + EPS) * g + b


def _dot(a, w):
    # bf16 operands, f32 accumulation (MXU-native on all generations).
    return jnp.dot(a.astype(jnp.bfloat16), w.astype(jnp.bfloat16),
                   preferred_element_type=jnp.float32)


def _attention(q, k, v, bias, num_heads):
    # q: (Lq, D) f32 (already scaled by 1/sqrt(dh)), k/v: (Lk, D) f32,
    # bias: (Lq, Lk) additive f32 (0 = attend, -1e9 = masked).
    Lq, D = q.shape
    Lk = k.shape[0]
    dh = D // num_heads
    qh = q.reshape(Lq, num_heads, dh).transpose(1, 0, 2).astype(jnp.bfloat16)
    kh = k.reshape(Lk, num_heads, dh).transpose(1, 0, 2).astype(jnp.bfloat16)
    vh = v.reshape(Lk, num_heads, dh).transpose(1, 0, 2).astype(jnp.bfloat16)

    s = jnp.einsum('hqd,hkd->hqk', qh, kh,
                   preferred_element_type=jnp.float32)            # (H, Lq, Lk)
    s = s + bias[None, :, :]
    s = s - jnp.max(s, axis=-1, keepdims=True)                    # stable softmax
    p = jnp.exp(s)
    p = p * pl.reciprocal(jnp.sum(p, axis=-1, keepdims=True), approx=True)

    ctx = jnp.einsum('hqk,hkd->hqd', p.astype(jnp.bfloat16), vh,
                     preferred_element_type=jnp.float32)          # (H, Lq, dh)
    return ctx.transpose(1, 0, 2).reshape(Lq, D)


# ----------------------------- fused stack kernel -----------------------------

def decoder_stack_kernel(
        x_ref, e_ref, dbias_ref, ebias_ref,
        ln1_g, ln1_b, wqkv1, bqkv1, wo1, bo1,
        ln2_g, ln2_b, wq2, bq2, wkv2, bkv2, wo2, bo2,
        ln3_g, ln3_b, w1, b1, w2, b2,
        lnf_g, lnf_b,
        out_ref,
        x_acc,
        *, num_heads):
    layer = pl.program_id(1)
    D = x_ref.shape[-1]
    dh = D // num_heads
    scale = jnp.float32(1.0 / math.sqrt(dh))

    # Load decoder activations into the VMEM-resident accumulator at layer 0.
    @pl.when(layer == 0)
    def _():
        x_acc[...] = x_ref[0]

    x = x_acc[...]            # (L, D) f32, resident across the layer axis
    e = e_ref[0]              # (Le, D) f32
    d_bias = dbias_ref[0]     # (L, L)  f32 additive
    e_bias = ebias_ref[0]     # (L, Le) f32 additive

    # ---- masked self-attention block ----
    x1 = _layernorm(x, ln1_g[0], ln1_b[0])
    qkv = _dot(x1, wqkv1[0]) + bqkv1[0]                 # fused (L, 3D)
    q = qkv[:, :D] * scale
    k = qkv[:, D:2 * D]
    v = qkv[:, 2 * D:]
    ctx = _attention(q, k, v, d_bias, num_heads)
    x = x + (_dot(ctx, wo1[0]) + bo1[0])                # dropout_1 == identity

    # ---- cross-attention block ----
    x2 = _layernorm(x, ln2_g[0], ln2_b[0])
    q2 = (_dot(x2, wq2[0]) + bq2[0]) * scale
    kv = _dot(e, wkv2[0]) + bkv2[0]                     # fused (Le, 2D)
    k2 = kv[:, :D]
    v2 = kv[:, D:]
    ctx2 = _attention(q2, k2, v2, e_bias, num_heads)
    x = x + (_dot(ctx2, wo2[0]) + bo2[0])               # dropout_2 == identity

    # ---- feed-forward block ----
    x3 = _layernorm(x, ln3_g[0], ln3_b[0])
    h = jnp.maximum(_dot(x3, w1[0]) + b1[0], 0.0)       # ReLU; FF dropout == id
    x = x + (_dot(h, w2[0]) + b2[0])                    # dropout_3 == identity

    x_acc[...] = x

    # Final LayerNormalization folded into the last layer iteration.
    @pl.when(layer == pl.num_programs(1) - 1)
    def _():
        out_ref[0] = _layernorm(x, lnf_g[...], lnf_b[...])


# ----------------------------- pallas wrapper -----------------------------

_STACKED_NAMES = ("ln1_g", "ln1_b", "wqkv1", "bqkv1", "wo1", "bo1",
                  "ln2_g", "ln2_b", "wq2", "bq2", "wkv2", "bkv2", "wo2", "bo2",
                  "ln3_g", "ln3_b", "w1", "b1", "w2", "b2")


def _nbytes(a):
    return int(a.size) * int(a.dtype.itemsize)


def _layer_spec(arr):
    # Stacked per-layer parameter: leading axis is the layer index.
    n_rest = arr.ndim - 1
    return pl.BlockSpec((1,) + tuple(arr.shape[1:]),
                        lambda b, l, _n=n_rest: (l,) + (0,) * _n)


def _const_spec(arr):
    nd = arr.ndim
    return pl.BlockSpec(tuple(arr.shape), lambda b, l, _n=nd: (0,) * _n)


def decoder_forward(x, e_output, e_mask, d_mask, params, num_heads):
    B, L, D = x.shape
    _, Le, _ = e_output.shape
    num_layers = params["wqkv1"].shape[0]
    d_ff = params["w1"].shape[-1]

    # Precompute additive mask biases ONCE (matches masked_fill(mask==0, -1e9)).
    neg = jnp.float32(-1e9)
    zero = jnp.float32(0.0)
    d_bias = jnp.where(d_mask != 0, zero, neg).astype(jnp.float32)
    e_bias = jnp.where(e_mask != 0, zero, neg).astype(jnp.float32)

    stacked = [params[n] for n in _STACKED_NAMES]
    lnf_g, lnf_b = params["lnf_g"], params["lnf_b"]

    in_specs = [
        pl.BlockSpec((1, L, D), lambda b, l: (b, 0, 0)),    # x
        pl.BlockSpec((1, Le, D), lambda b, l: (b, 0, 0)),   # encoder output
        pl.BlockSpec((1, L, L), lambda b, l: (b, 0, 0)),    # self-attn bias
        pl.BlockSpec((1, L, Le), lambda b, l: (b, 0, 0)),   # cross-attn bias
    ] + [_layer_spec(w) for w in stacked] + [_const_spec(lnf_g), _const_spec(lnf_b)]

    # Advisory cost estimate (per-step flops * grid size).
    flops_step = (2 * L * D * (3 * D) + 4 * L * L * D + 2 * L * D * D        # self
                  + 2 * L * D * D + 2 * Le * D * (2 * D) + 4 * L * Le * D
                  + 2 * L * D * D                                            # cross
                  + 4 * L * D * d_ff)                                        # FF
    cost = pl.CostEstimate(
        flops=int(B * num_layers * flops_step),
        transcendentals=int(B * num_layers * num_heads * L * (L + Le)),
        bytes_accessed=int(2 * _nbytes(x) + _nbytes(e_output)
                           + B * L * L * 4 + B * L * Le * 4
                           + sum(_nbytes(w) for w in stacked)
                           + _nbytes(lnf_g) + _nbytes(lnf_b)),
    )

    kernel = functools.partial(decoder_stack_kernel, num_heads=num_heads)
    return pl.pallas_call(
        kernel,
        out_shape=jax.ShapeDtypeStruct((B, L, D), jnp.float32),
        grid=(B, num_layers),
        in_specs=in_specs,
        out_specs=pl.BlockSpec((1, L, D), lambda b, l: (b, 0, 0)),
        scratch_shapes=[pltpu.VMEM((L, D), jnp.float32)],   # resident activations
        compiler_params=pltpu.CompilerParams(
            dimension_semantics=("parallel", "arbitrary")),
        cost_estimate=cost,
    )(x, e_output, d_bias, e_bias, *stacked, lnf_g, lnf_b)


# ----------------------------- pure-JAX reference -----------------------------

def decoder_reference(x, e_output, e_mask, d_mask, params, num_heads):
    B, L, D = x.shape
    dh = D // num_heads
    scale = 1.0 / math.sqrt(dh)
    d_bias = jnp.where(d_mask != 0, 0.0, -1e9).astype(jnp.float32)
    e_bias = jnp.where(e_mask != 0, 0.0, -1e9).astype(jnp.float32)

    def dot(a, w):
        return jnp.dot(a.astype(jnp.bfloat16), w.astype(jnp.bfloat16),
                       preferred_element_type=jnp.float32)

    def ln(v, g, b):
        mu = jnp.mean(v, -1, keepdims=True)
        var = jnp.mean((v - mu) ** 2, -1, keepdims=True)
        return (v - mu) * jax.lax.rsqrt(var + EPS) * g + b

    def attn(q, k, v, bias):
        Lq, Lk = q.shape[1], k.shape[1]
        qh = q.reshape(B, Lq, num_heads, dh).transpose(0, 2, 1, 3).astype(jnp.bfloat16)
        kh = k.reshape(B, Lk, num_heads, dh).transpose(0, 2, 1, 3).astype(jnp.bfloat16)
        vh = v.reshape(B, Lk, num_heads, dh).transpose(0, 2, 1, 3).astype(jnp.bfloat16)
        s = jnp.einsum('bhqd,bhkd->bhqk', qh, kh, preferred_element_type=jnp.float32)
        s = s + bias[:, None]
        s = s - jnp.max(s, -1, keepdims=True)
        p = jnp.exp(s)
        p = p / jnp.sum(p, -1, keepdims=True)
        ctx = jnp.einsum('bhqk,bhkd->bhqd', p.astype(jnp.bfloat16), vh,
                         preferred_element_type=jnp.float32)
        return ctx.transpose(0, 2, 1, 3).reshape(B, Lq, D)

    num_layers = params["wqkv1"].shape[0]
    for i in range(num_layers):
        x1 = ln(x, params["ln1_g"][i], params["ln1_b"][i])
        qkv = dot(x1, params["wqkv1"][i]) + params["bqkv1"][i]
        q, k, v = qkv[..., :D] * scale, qkv[..., D:2 * D], qkv[..., 2 * D:]
        x = x + dot(attn(q, k, v, d_bias), params["wo1"][i]) + params["bo1"][i]

        x2 = ln(x, params["ln2_g"][i], params["ln2_b"][i])
        q2 = (dot(x2, params["wq2"][i]) + params["bq2"][i]) * scale
        kv = dot(e_output, params["wkv2"][i]) + params["bkv2"][i]
        x = x + dot(attn(q2, kv[..., :D], kv[..., D:], e_bias),
                    params["wo2"][i]) + params["bo2"][i]

        x3 = ln(x, params["ln3_g"][i], params["ln3_b"][i])
        h = jnp.maximum(dot(x3, params["w1"][i]) + params["b1"][i], 0.0)
        x = x + dot(h, params["w2"][i]) + params["b2"][i]
    return ln(x, params["lnf_g"], params["lnf_b"])


# ----------------------------- parameter init -----------------------------

def init_params(key, num_layers, d_model, d_ff):
    def lin(k, din, dout):
        kw, kb = jax.random.split(k)
        w = (jax.random.normal(kw, (num_layers, din, dout), jnp.float32)
             / jnp.sqrt(din)).astype(jnp.bfloat16)           # bf16 weights in HBM
        b = jax.random.normal(kb, (num_layers, 1, dout), jnp.float32) * 0.01
        return w, b

    keys = jax.random.split(key, 7)
    wqkv1, bqkv1 = lin(keys[0], d_model, 3 * d_model)
    wo1, bo1 = lin(keys[1], d_model, d_model)
    wq2, bq2 = lin(keys[2], d_model, d_model)
    wkv2, bkv2 = lin(keys[3], d_model, 2 * d_model)
    wo2, bo2 = lin(keys[4], d_model, d_model)
    w1, b1 = lin(keys[5], d_model, d_ff)
    w2, b2 = lin(keys[6], d_ff, d_model)
    ones = jnp.ones((num_layers, 1, d_model), jnp.float32)
    zeros = jnp.zeros((num_layers, 1, d_model), jnp.float32)
    return dict(
        ln1_g=ones, ln1_b=zeros,
        wqkv1=wqkv1, bqkv1=bqkv1, wo1=wo1, bo1=bo1,
        ln2_g=ones, ln2_b=zeros,
        wq2=wq2, bq2=bq2, wkv2=wkv2, bkv2=bkv2, wo2=wo2, bo2=bo2,
        ln3_g=ones, ln3_b=zeros,
        w1=w1, b1=b1, w2=w2, b2=b2,
        lnf_g=jnp.ones((1, d_model), jnp.float32),
        lnf_b=jnp.zeros((1, d_model), jnp.float32),
    )


# ----------------------------- main -----------------------------

if __name__ == "__main__":
    num_layers, d_model, num_heads, d_ff = 2, 128, 4, 256
    B, L_dec, L_enc = 2, 16, 16

    key = jax.random.PRNGKey(0)
    k_p, k_x, k_e = jax.random.split(key, 3)

    params = init_params(k_p, num_layers, d_model, d_ff)
    x = jax.random.normal(k_x, (B, L_dec, d_model), jnp.float32)
    e_output = jax.random.normal(k_e, (B, L_enc, d_model), jnp.float32)

    # encoder padding mask: all keys valid -> ones; decoder mask: causal.
    e_mask = jnp.ones((B, L_dec, L_enc), jnp.float32)
    causal = jnp.tril(jnp.ones((L_dec, L_dec), jnp.float32))
    d_mask = jnp.broadcast_to(causal, (B, L_dec, L_dec))

    fwd = jax.jit(functools.partial(decoder_forward, num_heads=num_heads))
    out = jax.block_until_ready(fwd(x, e_output, e_mask, d_mask, params))

    ref = jax.block_until_ready(
        decoder_reference(x, e_output, e_mask, d_mask, params, num_heads))

    assert out.shape == (B, L_dec, d_model)
    assert bool(jnp.all(jnp.isfinite(out)))
    assert float(jnp.max(jnp.abs(out - ref))) < 1e-1
    print("KERNEL_OK")
</pallas_src>

<mosaic_0001>
module attributes {stable_mosaic.version = 11 : i64} {
  func.func @decoder_stack_kernel(%arg0: i32, %arg1: i32, %arg2: memref<1x16x128xf32, #tpu.memory_space<vmem>>, %arg3: memref<1x16x128xf32, #tpu.memory_space<vmem>>, %arg4: memref<1x16x16xf32, #tpu.memory_space<vmem>>, %arg5: memref<1x16x16xf32, #tpu.memory_space<vmem>>, %arg6: memref<1x1x128xf32, #tpu.memory_space<vmem>>, %arg7: memref<1x1x128xf32, #tpu.memory_space<vmem>>, %arg8: memref<1x128x384xbf16, #tpu.memory_space<vmem>>, %arg9: memref<1x1x384xf32, #tpu.memory_space<vmem>>, %arg10: memref<1x128x128xbf16, #tpu.memory_space<vmem>>, %arg11: memref<1x1x128xf32, #tpu.memory_space<vmem>>, %arg12: memref<1x1x128xf32, #tpu.memory_space<vmem>>, %arg13: memref<1x1x128xf32, #tpu.memory_space<vmem>>, %arg14: memref<1x128x128xbf16, #tpu.memory_space<vmem>>, %arg15: memref<1x1x128xf32, #tpu.memory_space<vmem>>, %arg16: memref<1x128x256xbf16, #tpu.memory_space<vmem>>, %arg17: memref<1x1x256xf32, #tpu.memory_space<vmem>>, %arg18: memref<1x128x128xbf16, #tpu.memory_space<vmem>>, %arg19: memref<1x1x128xf32, #tpu.memory_space<vmem>>, %arg20: memref<1x1x128xf32, #tpu.memory_space<vmem>>, %arg21: memref<1x1x128xf32, #tpu.memory_space<vmem>>, %arg22: memref<1x128x256xbf16, #tpu.memory_space<vmem>>, %arg23: memref<1x1x256xf32, #tpu.memory_space<vmem>>, %arg24: memref<1x256x128xbf16, #tpu.memory_space<vmem>>, %arg25: memref<1x1x128xf32, #tpu.memory_space<vmem>>, %arg26: memref<1x128xf32, #tpu.memory_space<vmem>>, %arg27: memref<1x128xf32, #tpu.memory_space<vmem>>, %arg28: memref<1x16x128xf32, #tpu.memory_space<vmem>>, %arg29: memref<16x128xf32, #tpu.memory_space<vmem>>) attributes {dimension_semantics = [#tpu.dimension_semantics<parallel>, #tpu.dimension_semantics<arbitrary>], iteration_bounds = array<i64: 2, 2>, scalar_prefetch = 0 : i64, scratch_operands = 1 : i64, tpu.core_type = #tpu.core_type<tc>, window_params = [{transform_indices = @transform_0, window_bounds = array<i64: 1, 16, 128>}, {transform_indices = @transform_1, window_bounds = array<i64: 1, 16, 128>}, {transform_indices = @transform_2, window_bounds = array<i64: 1, 16, 16>}, {transform_indices = @transform_3, window_bounds = array<i64: 1, 16, 16>}, {transform_indices = @transform_4, window_bounds = array<i64: 1, 1, 128>}, {transform_indices = @transform_5, window_bounds = array<i64: 1, 1, 128>}, {transform_indices = @transform_6, window_bounds = array<i64: 1, 128, 384>}, {transform_indices = @transform_7, window_bounds = array<i64: 1, 1, 384>}, {transform_indices = @transform_8, window_bounds = array<i64: 1, 128, 128>}, {transform_indices = @transform_9, window_bounds = array<i64: 1, 1, 128>}, {transform_indices = @transform_10, window_bounds = array<i64: 1, 1, 128>}, {transform_indices = @transform_11, window_bounds = array<i64: 1, 1, 128>}, {transform_indices = @transform_12, window_bounds = array<i64: 1, 128, 128>}, {transform_indices = @transform_13, window_bounds = array<i64: 1, 1, 128>}, {transform_indices = @transform_14, window_bounds = array<i64: 1, 128, 256>}, {transform_indices = @transform_15, window_bounds = array<i64: 1, 1, 256>}, {transform_indices = @transform_16, window_bounds = array<i64: 1, 128, 128>}, {transform_indices = @transform_17, window_bounds = array<i64: 1, 1, 128>}, {transform_indices = @transform_18, window_bounds = array<i64: 1, 1, 128>}, {transform_indices = @transform_19, window_bounds = array<i64: 1, 1, 128>}, {transform_indices = @transform_20, window_bounds = array<i64: 1, 128, 256>}, {transform_indices = @transform_21, window_bounds = array<i64: 1, 1, 256>}, {transform_indices = @transform_22, window_bounds = array<i64: 1, 256, 128>}, {transform_indices = @transform_23, window_bounds = array<i64: 1, 1, 128>}, {pipeline_mode = #tpu.pipeline_mode<synchronous>, transform_indices = @transform_24, window_bounds = array<i64: 1, 128>}, {pipeline_mode = #tpu.pipeline_mode<synchronous>, transform_indices = @transform_25, window_bounds = array<i64: 1, 128>}, {transform_indices = @transform_26, window_bounds = array<i64: 1, 16, 128>}]} {
    %c0_i32 = arith.constant 0 : i32
    %0 = arith.cmpi eq, %arg1, %c0_i32 : i32
    %1 = arith.extui %0 : i1 to i32
    %c0_i32_0 = arith.constant 0 : i32
    %2 = arith.cmpi ne, %1, %c0_i32_0 : i32
    scf.if %2 {
      %c0_106 = arith.constant 0 : index
      %c0_107 = arith.constant 0 : index
      %c0_108 = arith.constant 0 : index
      %216 = vector.load %arg2[%c0_106, %c0_107, %c0_108] : memref<1x16x128xf32, #tpu.memory_space<vmem>>, vector<1x16x128xf32>
      %217 = vector.shape_cast %216 : vector<1x16x128xf32> to vector<16x128xf32>
      %c0_109 = arith.constant 0 : index
      %c0_110 = arith.constant 0 : index
      %218 = vector.load %arg29[%c0_109, %c0_110] : memref<16x128xf32, #tpu.memory_space<vmem>>, vector<16x128xf32>
      tpu.vector_store %arg29[%c0_109, %c0_110], %217 {strides = array<i32>} : memref<16x128xf32, #tpu.memory_space<vmem>>, vector<16x128xf32>,
    } else {
    }
    %c0 = arith.constant 0 : index
    %c0_1 = arith.constant 0 : index
    %3 = vector.load %arg29[%c0, %c0_1] : memref<16x128xf32, #tpu.memory_space<vmem>>, vector<16x128xf32>
    %c0_2 = arith.constant 0 : index
    %c0_3 = arith.constant 0 : index
    %c0_4 = arith.constant 0 : index
    %4 = vector.load %arg3[%c0_2, %c0_3, %c0_4] : memref<1x16x128xf32, #tpu.memory_space<vmem>>, vector<1x16x128xf32>
    %5 = vector.shape_cast %4 : vector<1x16x128xf32> to vector<16x128xf32>
    %c0_5 = arith.constant 0 : index
    %c0_6 = arith.constant 0 : index
    %c0_7 = arith.constant 0 : index
    %6 = vector.load %arg4[%c0_5, %c0_6, %c0_7] : memref<1x16x16xf32, #tpu.memory_space<vmem>>, vector<1x16x16xf32>
    %7 = vector.shape_cast %6 : vector<1x16x16xf32> to vector<16x16xf32>
    %c0_8 = arith.constant 0 : index
    %c0_9 = arith.constant 0 : index
    %c0_10 = arith.constant 0 : index
    %8 = vector.load %arg5[%c0_8, %c0_9, %c0_10] : memref<1x16x16xf32, #tpu.memory_space<vmem>>, vector<1x16x16xf32>
    %9 = vector.shape_cast %8 : vector<1x16x16xf32> to vector<16x16xf32>
    %c0_11 = arith.constant 0 : index
    %c0_12 = arith.constant 0 : index
    %c0_13 = arith.constant 0 : index
    %10 = vector.load %arg6[%c0_11, %c0_12, %c0_13] : memref<1x1x128xf32, #tpu.memory_space<vmem>>, vector<1x1x128xf32>
    %11 = vector.shape_cast %10 : vector<1x1x128xf32> to vector<1x128xf32>
    %c0_14 = arith.constant 0 : index
    %c0_15 = arith.constant 0 : index
    %c0_16 = arith.constant 0 : index
    %12 = vector.load %arg7[%c0_14, %c0_15, %c0_16] : memref<1x1x128xf32, #tpu.memory_space<vmem>>, vector<1x1x128xf32>
    %13 = vector.shape_cast %12 : vector<1x1x128xf32> to vector<1x128xf32>
    %cst = arith.constant dense<0.000000e+00> : vector<16xf32>
    %14 = vector.multi_reduction <add>, %3, %cst [1] : vector<16x128xf32> to vector<16xf32>
    %15 = vector.shape_cast %14 : vector<16xf32> to vector<16x1xf32>
    %cst_17 = arith.constant 1.280000e+02 : f32
    %16 = vector.broadcast %cst_17 : f32 to vector<16x1xf32>
    %17 = arith.divf %15, %16 : vector<16x1xf32>
    %18 = vector.broadcast %17 : vector<16x1xf32> to vector<16x128xf32>
    %19 = arith.subf %3, %18 : vector<16x128xf32>
    %20 = arith.mulf %19, %19 : vector<16x128xf32>
    %cst_18 = arith.constant dense<0.000000e+00> : vector<16xf32>
    %21 = vector.multi_reduction <add>, %20, %cst_18 [1] : vector<16x128xf32> to vector<16xf32>
    %22 = vector.shape_cast %21 : vector<16xf32> to vector<16x1xf32>
    %cst_19 = arith.constant 1.280000e+02 : f32
    %23 = vector.broadcast %cst_19 : f32 to vector<16x1xf32>
    %24 = arith.divf %22, %23 : vector<16x1xf32>
    %25 = vector.broadcast %17 : vector<16x1xf32> to vector<16x128xf32>
    %26 = arith.subf %3, %25 : vector<16x128xf32>
    %cst_20 = arith.constant 9.99999997E-7 : f32
    %27 = vector.broadcast %cst_20 : f32 to vector<16x1xf32>
    %28 = arith.addf %24, %27 : vector<16x1xf32>
    %29 = math.rsqrt %28 : vector<16x1xf32>
    %30 = vector.broadcast %29 : vector<16x1xf32> to vector<16x128xf32>
    %31 = arith.mulf %26, %30 : vector<16x128xf32>
    %32 = vector.broadcast %11 : vector<1x128xf32> to vector<16x128xf32>
    %33 = arith.mulf %31, %32 : vector<16x128xf32>
    %34 = vector.broadcast %13 : vector<1x128xf32> to vector<16x128xf32>
    %35 = arith.addf %33, %34 : vector<16x128xf32>
    %c0_21 = arith.constant 0 : index
    %c0_22 = arith.constant 0 : index
    %c0_23 = arith.constant 0 : index
    %36 = vector.load %arg8[%c0_21, %c0_22, %c0_23] : memref<1x128x384xbf16, #tpu.memory_space<vmem>>, vector<1x128x384xbf16>
    %37 = vector.shape_cast %36 : vector<1x128x384xbf16> to vector<128x384xbf16>
    %38 = arith.truncf %35 : vector<16x128xf32> to vector<16x128xbf16>
    %cst_24 = arith.constant dense<0.000000e+00> : vector<16x384xf32>
    %39 = tpu.matmul %38, %37, %cst_24 {dimension_numbers = #tpu.dot_dimension_numbers<[1], [0], [0], [1], [0, 0, 1, 1], [], []>} : vector<16x128xbf16>, vector<128x384xbf16>, vector<16x384xf32> -> vector<16x384xf32>
    %c0_25 = arith.constant 0 : index
    %c0_26 = arith.constant 0 : index
    %c0_27 = arith.constant 0 : index
    %40 = vector.load %arg9[%c0_25, %c0_26, %c0_27] : memref<1x1x384xf32, #tpu.memory_space<vmem>>, vector<1x1x384xf32>
    %41 = vector.shape_cast %40 : vector<1x1x384xf32> to vector<1x384xf32>
    %42 = vector.broadcast %41 : vector<1x384xf32> to vector<16x384xf32>
    %43 = arith.addf %39, %42 : vector<16x384xf32>
    %44 = vector.extract_strided_slice %43 {offsets = [0, 0], sizes = [16, 128], strides = [1, 1]} : vector<16x384xf32> to vector<16x128xf32>
    %cst_28 = arith.constant 0.176776692 : f32
    %45 = vector.broadcast %cst_28 : f32 to vector<16x128xf32>
    %46 = arith.mulf %44, %45 : vector<16x128xf32>
    %47 = vector.extract_strided_slice %43 {offsets = [0, 128], sizes = [16, 128], strides = [1, 1]} : vector<16x384xf32> to vector<16x128xf32>
    %48 = vector.extract_strided_slice %43 {offsets = [0, 256], sizes = [16, 128], strides = [1, 1]} : vector<16x384xf32> to vector<16x128xf32>
    %49 = vector.shape_cast %46 : vector<16x128xf32> to vector<16x4x32xf32>
    %50 = tpu.transpose %49, [1, 0, 2] : vector<16x4x32xf32> -> vector<4x16x32xf32>
    %51 = arith.truncf %50 : vector<4x16x32xf32> to vector<4x16x32xbf16>
    %52 = vector.shape_cast %47 : vector<16x128xf32> to vector<16x4x32xf32>
    %53 = tpu.transpose %52, [1, 0, 2] : vector<16x4x32xf32> -> vector<4x16x32xf32>
    %54 = arith.truncf %53 : vector<4x16x32xf32> to vector<4x16x32xbf16>
    %55 = vector.shape_cast %48 : vector<16x128xf32> to vector<16x4x32xf32>
    %56 = tpu.transpose %55, [1, 0, 2] : vector<16x4x32xf32> -> vector<4x16x32xf32>
    %57 = arith.truncf %56 : vector<4x16x32xf32> to vector<4x16x32xbf16>
    "tpu.trace_start"() <{level = 10 : i32, message = "hqd,hkd->hqk"}> : () -> ()
    %cst_29 = arith.constant dense<0.000000e+00> : vector<4x16x16xf32>
    %58 = tpu.matmul %51, %54, %cst_29 {dimension_numbers = #tpu.dot_dimension_numbers<[2], [2], [1], [1], [0, 0, 0, 1, 1, 1], [0], [0]>} : vector<4x16x32xbf16>, vector<4x16x32xbf16>, vector<4x16x16xf32> -> vector<4x16x16xf32>
    "tpu.trace_stop"() : () -> ()
    %59 = vector.shape_cast %7 : vector<16x16xf32> to vector<1x16x16xf32>
    %60 = vector.broadcast %59 : vector<1x16x16xf32> to vector<4x16x16xf32>
    %61 = arith.addf %58, %60 : vector<4x16x16xf32>
    %cst_30 = arith.constant dense<0xFF800000> : vector<4x16xf32>
    %62 = vector.multi_reduction <maximumf>, %61, %cst_30 [2] : vector<4x16x16xf32> to vector<4x16xf32>
    %63 = vector.shape_cast %62 : vector<4x16xf32> to vector<4x16x1xf32>
    %64 = vector.broadcast %63 : vector<4x16x1xf32> to vector<4x16x16xf32>
    %65 = arith.subf %61, %64 : vector<4x16x16xf32>
    %66 = math.exp %65 : vector<4x16x16xf32>
    %cst_31 = arith.constant dense<0.000000e+00> : vector<4x16xf32>
    %67 = vector.multi_reduction <add>, %66, %cst_31 [2] : vector<4x16x16xf32> to vector<4x16xf32>
    %68 = vector.shape_cast %67 : vector<4x16xf32> to vector<4x16x1xf32>
    %69 = tpu.reciprocal %68 {approx = true} : vector<4x16x1xf32> -> vector<4x16x1xf32>
    %70 = vector.broadcast %69 : vector<4x16x1xf32> to vector<4x16x16xf32>
    %71 = arith.mulf %66, %70 : vector<4x16x16xf32>
    %72 = arith.truncf %71 : vector<4x16x16xf32> to vector<4x16x16xbf16>
    "tpu.trace_start"() <{level = 10 : i32, message = "hqk,hkd->hqd"}> : () -> ()
    %cst_32 = arith.constant dense<0.000000e+00> : vector<4x16x32xf32>
    %73 = tpu.matmul %72, %57, %cst_32 {dimension_numbers = #tpu.dot_dimension_numbers<[2], [1], [1], [2], [0, 0, 0, 1, 1, 2], [0], [0]>} : vector<4x16x16xbf16>, vector<4x16x32xbf16>, vector<4x16x32xf32> -> vector<4x16x32xf32>
    "tpu.trace_stop"() : () -> ()
    %74 = tpu.transpose %73, [1, 0, 2] : vector<4x16x32xf32> -> vector<16x4x32xf32>
    %75 = vector.shape_cast %74 : vector<16x4x32xf32> to vector<16x128xf32>
    %c0_33 = arith.constant 0 : index
    %c0_34 = arith.constant 0 : index
    %c0_35 = arith.constant 0 : index
    %76 = vector.load %arg10[%c0_33, %c0_34, %c0_35] : memref<1x128x128xbf16, #tpu.memory_space<vmem>>, vector<1x128x128xbf16>
    %77 = vector.shape_cast %76 : vector<1x128x128xbf16> to vector<128x128xbf16>
    %78 = arith.truncf %75 : vector<16x128xf32> to vector<16x128xbf16>
    %cst_36 = arith.constant dense<0.000000e+00> : vector<16x128xf32>
    %79 = tpu.matmul %78, %77, %cst_36 {dimension_numbers = #tpu.dot_dimension_numbers<[1], [0], [0], [1], [0, 0, 1, 1], [], []>} : vector<16x128xbf16>, vector<128x128xbf16>, vector<16x128xf32> -> vector<16x128xf32>
    %c0_37 = arith.constant 0 : index
    %c0_38 = arith.constant 0 : index
    %c0_39 = arith.constant 0 : index
    %80 = vector.load %arg11[%c0_37, %c0_38, %c0_39] : memref<1x1x128xf32, #tpu.memory_space<vmem>>, vector<1x1x128xf32>
    %81 = vector.shape_cast %80 : vector<1x1x128xf32> to vector<1x128xf32>
    %82 = vector.broadcast %81 : vector<1x128xf32> to vector<16x128xf32>
    %83 = arith.addf %79, %82 : vector<16x128xf32>
    %84 = arith.addf %3, %83 : vector<16x128xf32>
    %c0_40 = arith.constant 0 : index
    %c0_41 = arith.constant 0 : index
    %c0_42 = arith.constant 0 : index
    %85 = vector.load %arg12[%c0_40, %c0_41, %c0_42] : memref<1x1x128xf32, #tpu.memory_space<vmem>>, vector<1x1x128xf32>
    %86 = vector.shape_cast %85 : vector<1x1x128xf32> to vector<1x128xf32>
    %c0_43 = arith.constant 0 : index
    %c0_44 = arith.constant 0 : index
    %c0_45 = arith.constant 0 : index
    %87 = vector.load %arg13[%c0_43, %c0_44, %c0_45] : memref<1x1x128xf32, #tpu.memory_space<vmem>>, vector<1x1x128xf32>
    %88 = vector.shape_cast %87 : vector<1x1x128xf32> to vector<1x128xf32>
    %cst_46 = arith.constant dense<0.000000e+00> : vector<16xf32>
    %89 = vector.multi_reduction <add>, %84, %cst_46 [1] : vector<16x128xf32> to vector<16xf32>
    %90 = vector.shape_cast %89 : vector<16xf32> to vector<16x1xf32>
    %cst_47 = arith.constant 1.280000e+02 : f32
    %91 = vector.broadcast %cst_47 : f32 to vector<16x1xf32>
    %92 = arith.divf %90, %91 : vector<16x1xf32>
    %93 = vector.broadcast %92 : vector<16x1xf32> to vector<16x128xf32>
    %94 = arith.subf %84, %93 : vector<16x128xf32>
    %95 = arith.mulf %94, %94 : vector<16x128xf32>
    %cst_48 = arith.constant dense<0.000000e+00> : vector<16xf32>
    %96 = vector.multi_reduction <add>, %95, %cst_48 [1] : vector<16x128xf32> to vector<16xf32>
    %97 = vector.shape_cast %96 : vector<16xf32> to vector<16x1xf32>
    %cst_49 = arith.constant 1.280000e+02 : f32
    %98 = vector.broadcast %cst_49 : f32 to vector<16x1xf32>
    %99 = arith.divf %97, %98 : vector<16x1xf32>
    %100 = vector.broadcast %92 : vector<16x1xf32> to vector<16x128xf32>
    %101 = arith.subf %84, %100 : vector<16x128xf32>
    %cst_50 = arith.constant 9.99999997E-7 : f32
    %102 = vector.broadcast %cst_50 : f32 to vector<16x1xf32>
    %103 = arith.addf %99, %102 : vector<16x1xf32>
    %104 = math.rsqrt %103 : vector<16x1xf32>
    %105 = vector.broadcast %104 : vector<16x1xf32> to vector<16x128xf32>
    %106 = arith.mulf %101, %105 : vector<16x128xf32>
    %107 = vector.broadcast %86 : vector<1x128xf32> to vector<16x128xf32>
    %108 = arith.mulf %106, %107 : vector<16x128xf32>
    %109 = vector.broadcast %88 : vector<1x128xf32> to vector<16x128xf32>
    %110 = arith.addf %108, %109 : vector<16x128xf32>
    %c0_51 = arith.constant 0 : index
    %c0_52 = arith.constant 0 : index
    %c0_53 = arith.constant 0 : index
    %111 = vector.load %arg14[%c0_51, %c0_52, %c0_53] : memref<1x128x128xbf16, #tpu.memory_space<vmem>>, vector<1x128x128xbf16>
    %112 = vector.shape_cast %111 : vector<1x128x128xbf16> to vector<128x128xbf16>
    %113 = arith.truncf %110 : vector<16x128xf32> to vector<16x128xbf16>
    %cst_54 = arith.constant dense<0.000000e+00> : vector<16x128xf32>
    %114 = tpu.matmul %113, %112, %cst_54 {dimension_numbers = #tpu.dot_dimension_numbers<[1], [0], [0], [1], [0, 0, 1, 1], [], []>} : vector<16x128xbf16>, vector<128x128xbf16>, vector<16x128xf32> -> vector<16x128xf32>
    %c0_55 = arith.constant 0 : index
    %c0_56 = arith.constant 0 : index
    %c0_57 = arith.constant 0 : index
    %115 = vector.load %arg15[%c0_55, %c0_56, %c0_57] : memref<1x1x128xf32, #tpu.memory_space<vmem>>, vector<1x1x128xf32>
    %116 = vector.shape_cast %115 : vector<1x1x128xf32> to vector<1x128xf32>
    %117 = vector.broadcast %116 : vector<1x128xf32> to vector<16x128xf32>
    %118 = arith.addf %114, %117 : vector<16x128xf32>
    %cst_58 = arith.constant 0.176776692 : f32
    %119 = vector.broadcast %cst_58 : f32 to vector<16x128xf32>
    %120 = arith.mulf %118, %119 : vector<16x128xf32>
    %c0_59 = arith.constant 0 : index
    %c0_60 = arith.constant 0 : index
    %c0_61 = arith.constant 0 : index
    %121 = vector.load %arg16[%c0_59, %c0_60, %c0_61] : memref<1x128x256xbf16, #tpu.memory_space<vmem>>, vector<1x128x256xbf16>
    %122 = vector.shape_cast %121 : vector<1x128x256xbf16> to vector<128x256xbf16>
    %123 = arith.truncf %5 : vector<16x128xf32> to vector<16x128xbf16>
    %cst_62 = arith.constant dense<0.000000e+00> : vector<16x256xf32>
    %124 = tpu.matmul %123, %122, %cst_62 {dimension_numbers = #tpu.dot_dimension_numbers<[1], [0], [0], [1], [0, 0, 1, 1], [], []>} : vector<16x128xbf16>, vector<128x256xbf16>, vector<16x256xf32> -> vector<16x256xf32>
    %c0_63 = arith.constant 0 : index
    %c0_64 = arith.constant 0 : index
    %c0_65 = arith.constant 0 : index
    %125 = vector.load %arg17[%c0_63, %c0_64, %c0_65] : memref<1x1x256xf32, #tpu.memory_space<vmem>>, vector<1x1x256xf32>
    %126 = vector.shape_cast %125 : vector<1x1x256xf32> to vector<1x256xf32>
    %127 = vector.broadcast %126 : vector<1x256xf32> to vector<16x256xf32>
    %128 = arith.addf %124, %127 : vector<16x256xf32>
    %129 = vector.extract_strided_slice %128 {offsets = [0, 0], sizes = [16, 128], strides = [1, 1]} : vector<16x256xf32> to vector<16x128xf32>
    %130 = vector.extract_strided_slice %128 {offsets = [0, 128], sizes = [16, 128], strides = [1, 1]} : vector<16x256xf32> to vector<16x128xf32>
    %131 = vector.shape_cast %120 : vector<16x128xf32> to vector<16x4x32xf32>
    %132 = tpu.transpose %131, [1, 0, 2] : vector<16x4x32xf32> -> vector<4x16x32xf32>
    %133 = arith.truncf %132 : vector<4x16x32xf32> to vector<4x16x32xbf16>
    %134 = vector.shape_cast %129 : vector<16x128xf32> to vector<16x4x32xf32>
    %135 = tpu.transpose %134, [1, 0, 2] : vector<16x4x32xf32> -> vector<4x16x32xf32>
    %136 = arith.truncf %135 : vector<4x16x32xf32> to vector<4x16x32xbf16>
    %137 = vector.shape_cast %130 : vector<16x128xf32> to vector<16x4x32xf32>
    %138 = tpu.transpose %137, [1, 0, 2] : vector<16x4x32xf32> -> vector<4x16x32xf32>
    %139 = arith.truncf %138 : vector<4x16x32xf32> to vector<4x16x32xbf16>
    "tpu.trace_start"() <{level = 10 : i32, message = "hqd,hkd->hqk"}> : () -> ()
    %cst_66 = arith.constant dense<0.000000e+00> : vector<4x16x16xf32>
    %140 = tpu.matmul %133, %136, %cst_66 {dimension_numbers = #tpu.dot_dimension_numbers<[2], [2], [1], [1], [0, 0, 0, 1, 1, 1], [0], [0]>} : vector<4x16x32xbf16>, vector<4x16x32xbf16>, vector<4x16x16xf32> -> vector<4x16x16xf32>
    "tpu.trace_stop"() : () -> ()
    %141 = vector.shape_cast %9 : vector<16x16xf32> to vector<1x16x16xf32>
    %142 = vector.broadcast %141 : vector<1x16x16xf32> to vector<4x16x16xf32>
    %143 = arith.addf %140, %142 : vector<4x16x16xf32>
    %cst_67 = arith.constant dense<0xFF800000> : vector<4x16xf32>
    %144 = vector.multi_reduction <maximumf>, %143, %cst_67 [2] : vector<4x16x16xf32> to vector<4x16xf32>
    %145 = vector.shape_cast %144 : vector<4x16xf32> to vector<4x16x1xf32>
    %146 = vector.broadcast %145 : vector<4x16x1xf32> to vector<4x16x16xf32>
    %147 = arith.subf %143, %146 : vector<4x16x16xf32>
    %148 = math.exp %147 : vector<4x16x16xf32>
    %cst_68 = arith.constant dense<0.000000e+00> : vector<4x16xf32>
    %149 = vector.multi_reduction <add>, %148, %cst_68 [2] : vector<4x16x16xf32> to vector<4x16xf32>
    %150 = vector.shape_cast %149 : vector<4x16xf32> to vector<4x16x1xf32>
    %151 = tpu.reciprocal %150 {approx = true} : vector<4x16x1xf32> -> vector<4x16x1xf32>
    %152 = vector.broadcast %151 : vector<4x16x1xf32> to vector<4x16x16xf32>
    %153 = arith.mulf %148, %152 : vector<4x16x16xf32>
    %154 = arith.truncf %153 : vector<4x16x16xf32> to vector<4x16x16xbf16>
    "tpu.trace_start"() <{level = 10 : i32, message = "hqk,hkd->hqd"}> : () -> ()
    %cst_69 = arith.constant dense<0.000000e+00> : vector<4x16x32xf32>
    %155 = tpu.matmul %154, %139, %cst_69 {dimension_numbers = #tpu.dot_dimension_numbers<[2], [1], [1], [2], [0, 0, 0, 1, 1, 2], [0], [0]>} : vector<4x16x16xbf16>, vector<4x16x32xbf16>, vector<4x16x32xf32> -> vector<4x16x32xf32>
    "tpu.trace_stop"() : () -> ()
    %156 = tpu.transpose %155, [1, 0, 2] : vector<4x16x32xf32> -> vector<16x4x32xf32>
    %157 = vector.shape_cast %156 : vector<16x4x32xf32> to vector<16x128xf32>
    %c0_70 = arith.constant 0 : index
    %c0_71 = arith.constant 0 : index
    %c0_72 = arith.constant 0 : index
    %158 = vector.load %arg18[%c0_70, %c0_71, %c0_72] : memref<1x128x128xbf16, #tpu.memory_space<vmem>>, vector<1x128x128xbf16>
    %159 = vector.shape_cast %158 : vector<1x128x128xbf16> to vector<128x128xbf16>
    %160 = arith.truncf %157 : vector<16x128xf32> to vector<16x128xbf16>
    %cst_73 = arith.constant dense<0.000000e+00> : vector<16x128xf32>
    %161 = tpu.matmul %160, %159, %cst_73 {dimension_numbers = #tpu.dot_dimension_numbers<[1], [0], [0], [1], [0, 0, 1, 1], [], []>} : vector<16x128xbf16>, vector<128x128xbf16>, vector<16x128xf32> -> vector<16x128xf32>
    %c0_74 = arith.constant 0 : index
    %c0_75 = arith.constant 0 : index
    %c0_76 = arith.constant 0 : index
    %162 = vector.load %arg19[%c0_74, %c0_75, %c0_76] : memref<1x1x128xf32, #tpu.memory_space<vmem>>, vector<1x1x128xf32>
    %163 = vector.shape_cast %162 : vector<1x1x128xf32> to vector<1x128xf32>
    %164 = vector.broadcast %163 : vector<1x128xf32> to vector<16x128xf32>
    %165 = arith.addf %161, %164 : vector<16x128xf32>
    %166 = arith.addf %84, %165 : vector<16x128xf32>
    %c0_77 = arith.constant 0 : index
    %c0_78 = arith.constant 0 : index
    %c0_79 = arith.constant 0 : index
    %167 = vector.load %arg20[%c0_77, %c0_78, %c0_79] : memref<1x1x128xf32, #tpu.memory_space<vmem>>, vector<1x1x128xf32>
    %168 = vector.shape_cast %167 : vector<1x1x128xf32> to vector<1x128xf32>
    %c0_80 = arith.constant 0 : index
    %c0_81 = arith.constant 0 : index
    %c0_82 = arith.constant 0 : index
    %169 = vector.load %arg21[%c0_80, %c0_81, %c0_82] : memref<1x1x128xf32, #tpu.memory_space<vmem>>, vector<1x1x128xf32>
    %170 = vector.shape_cast %169 : vector<1x1x128xf32> to vector<1x128xf32>
    %cst_83 = arith.constant dense<0.000000e+00> : vector<16xf32>
    %171 = vector.multi_reduction <add>, %166, %cst_83 [1] : vector<16x128xf32> to vector<16xf32>
    %172 = vector.shape_cast %171 : vector<16xf32> to vector<16x1xf32>
    %cst_84 = arith.constant 1.280000e+02 : f32
    %173 = vector.broadcast %cst_84 : f32 to vector<16x1xf32>
    %174 = arith.divf %172, %173 : vector<16x1xf32>
    %175 = vector.broadcast %174 : vector<16x1xf32> to vector<16x128xf32>
    %176 = arith.subf %166, %175 : vector<16x128xf32>
    %177 = arith.mulf %176, %176 : vector<16x128xf32>
    %cst_85 = arith.constant dense<0.000000e+00> : vector<16xf32>
    %178 = vector.multi_reduction <add>, %177, %cst_85 [1] : vector<16x128xf32> to vector<16xf32>
    %179 = vector.shape_cast %178 : vector<16xf32> to vector<16x1xf32>
    %cst_86 = arith.constant 1.280000e+02 : f32
    %180 = vector.broadcast %cst_86 : f32 to vector<16x1xf32>
    %181 = arith.divf %179, %180 : vector<16x1xf32>
    %182 = vector.broadcast %174 : vector<16x1xf32> to vector<16x128xf32>
    %183 = arith.subf %166, %182 : vector<16x128xf32>
    %cst_87 = arith.constant 9.99999997E-7 : f32
    %184 = vector.broadcast %cst_87 : f32 to vector<16x1xf32>
    %185 = arith.addf %181, %184 : vector<16x1xf32>
    %186 = math.rsqrt %185 : vector<16x1xf32>
    %187 = vector.broadcast %186 : vector<16x1xf32> to vector<16x128xf32>
    %188 = arith.mulf %183, %187 : vector<16x128xf32>
    %189 = vector.broadcast %168 : vector<1x128xf32> to vector<16x128xf32>
    %190 = arith.mulf %188, %189 : vector<16x128xf32>
    %191 = vector.broadcast %170 : vector<1x128xf32> to vector<16x128xf32>
    %192 = arith.addf %190, %191 : vector<16x128xf32>
    %c0_88 = arith.constant 0 : index
    %c0_89 = arith.constant 0 : index
    %c0_90 = arith.constant 0 : index
    %193 = vector.load %arg22[%c0_88, %c0_89, %c0_90] : memref<1x128x256xbf16, #tpu.memory_space<vmem>>, vector<1x128x256xbf16>
    %194 = vector.shape_cast %193 : vector<1x128x256xbf16> to vector<128x256xbf16>
    %195 = arith.truncf %192 : vector<16x128xf32> to vector<16x128xbf16>
    %cst_91 = arith.constant dense<0.000000e+00> : vector<16x256xf32>
    %196 = tpu.matmul %195, %194, %cst_91 {dimension_numbers = #tpu.dot_dimension_numbers<[1], [0], [0], [1], [0, 0, 1, 1], [], []>} : vector<16x128xbf16>, vector<128x256xbf16>, vector<16x256xf32> -> vector<16x256xf32>
    %c0_92 = arith.constant 0 : index
    %c0_93 = arith.constant 0 : index
    %c0_94 = arith.constant 0 : index
    %197 = vector.load %arg23[%c0_92, %c0_93, %c0_94] : memref<1x1x256xf32, #tpu.memory_space<vmem>>, vector<1x1x256xf32>
    %198 = vector.shape_cast %197 : vector<1x1x256xf32> to vector<1x256xf32>
    %199 = vector.broadcast %198 : vector<1x256xf32> to vector<16x256xf32>
    %200 = arith.addf %196, %199 : vector<16x256xf32>
    %cst_95 = arith.constant 0.000000e+00 : f32
    %201 = vector.broadcast %cst_95 : f32 to vector<16x256xf32>
    %202 = arith.maximumf %200, %201 : vector<16x256xf32>
    %c0_96 = arith.constant 0 : index
    %c0_97 = arith.constant 0 : index
    %c0_98 = arith.constant 0 : index
    %203 = vector.load %arg24[%c0_96, %c0_97, %c0_98] : memref<1x256x128xbf16, #tpu.memory_space<vmem>>, vector<1x256x128xbf16>
    %204 = vector.shape_cast %203 : vector<1x256x128xbf16> to vector<256x128xbf16>
    %205 = arith.truncf %202 : vector<16x256xf32> to vector<16x256xbf16>
    %cst_99 = arith.constant dense<0.000000e+00> : vector<16x128xf32>
    %206 = tpu.matmul %205, %204, %cst_99 {dimension_numbers = #tpu.dot_dimension_numbers<[1], [0], [0], [1], [0, 0, 1, 1], [], []>} : vector<16x256xbf16>, vector<256x128xbf16>, vector<16x128xf32> -> vector<16x128xf32>
    %c0_100 = arith.constant 0 : index
    %c0_101 = arith.constant 0 : index
    %c0_102 = arith.constant 0 : index
    %207 = vector.load %arg25[%c0_100, %c0_101, %c0_102] : memref<1x1x128xf32, #tpu.memory_space<vmem>>, vector<1x1x128xf32>
    %208 = vector.shape_cast %207 : vector<1x1x128xf32> to vector<1x128xf32>
    %209 = vector.broadcast %208 : vector<1x128xf32> to vector<16x128xf32>
    %210 = arith.addf %206, %209 : vector<16x128xf32>
    %211 = arith.addf %166, %210 : vector<16x128xf32>
    %c0_103 = arith.constant 0 : index
    %c0_104 = arith.constant 0 : index
    %212 = vector.load %arg29[%c0_103, %c0_104] : memref<16x128xf32, #tpu.memory_space<vmem>>, vector<16x128xf32>
    tpu.vector_store %arg29[%c0_103, %c0_104], %211 {strides = array<i32>} : memref<16x128xf32, #tpu.memory_space<vmem>>, vector<16x128xf32>,
    %c1_i32 = arith.constant 1 : i32
    %213 = arith.cmpi eq, %arg1, %c1_i32 : i32
    %214 = arith.extui %213 : i1 to i32
    %c0_i32_105 = arith.constant 0 : i32
    %215 = arith.cmpi ne, %214, %c0_i32_105 : i32
    scf.if %215 {
      %c0_106 = arith.constant 0 : index
      %c0_107 = arith.constant 0 : index
      %216 = vector.load %arg26[%c0_106, %c0_107] : memref<1x128xf32, #tpu.memory_space<vmem>>, vector<1x128xf32>
      %c0_108 = arith.constant 0 : index
      %c0_109 = arith.constant 0 : index
      %217 = vector.load %arg27[%c0_108, %c0_109] : memref<1x128xf32, #tpu.memory_space<vmem>>, vector<1x128xf32>
      %cst_110 = arith.constant dense<0.000000e+00> : vector<16xf32>
      %218 = vector.multi_reduction <add>, %211, %cst_110 [1] : vector<16x128xf32> to vector<16xf32>
      %219 = vector.shape_cast %218 : vector<16xf32> to vector<16x1xf32>
      %cst_111 = arith.constant 1.280000e+02 : f32
      %220 = vector.broadcast %cst_111 : f32 to vector<16x1xf32>
      %221 = arith.divf %219, %220 : vector<16x1xf32>
      %222 = vector.broadcast %221 : vector<16x1xf32> to vector<16x128xf32>
      %223 = arith.subf %211, %222 : vector<16x128xf32>
      %224 = arith.mulf %223, %223 : vector<16x128xf32>
      %cst_112 = arith.constant dense<0.000000e+00> : vector<16xf32>
      %225 = vector.multi_reduction <add>, %224, %cst_112 [1] : vector<16x128xf32> to vector<16xf32>
      %226 = vector.shape_cast %225 : vector<16xf32> to vector<16x1xf32>
      %cst_113 = arith.constant 1.280000e+02 : f32
      %227 = vector.broadcast %cst_113 : f32 to vector<16x1xf32>
      %228 = arith.divf %226, %227 : vector<16x1xf32>
      %229 = vector.broadcast %221 : vector<16x1xf32> to vector<16x128xf32>
      %230 = arith.subf %211, %229 : vector<16x128xf32>
      %cst_114 = arith.constant 9.99999997E-7 : f32
      %231 = vector.broadcast %cst_114 : f32 to vector<16x1xf32>
      %232 = arith.addf %228, %231 : vector<16x1xf32>
      %233 = math.rsqrt %232 : vector<16x1xf32>
      %234 = vector.broadcast %233 : vector<16x1xf32> to vector<16x128xf32>
      %235 = arith.mulf %230, %234 : vector<16x128xf32>
      %236 = vector.broadcast %216 : vector<1x128xf32> to vector<16x128xf32>
      %237 = arith.mulf %235, %236 : vector<16x128xf32>
      %238 = vector.broadcast %217 : vector<1x128xf32> to vector<16x128xf32>
      %239 = arith.addf %237, %238 : vector<16x128xf32>
      %c0_115 = arith.constant 0 : index
      %c0_116 = arith.constant 0 : index
      %c0_117 = arith.constant 0 : index
      %240 = vector.load %arg28[%c0_115, %c0_116, %c0_117] : memref<1x16x128xf32, #tpu.memory_space<vmem>>, vector<1x16x128xf32>
      %241 = vector.shape_cast %240 : vector<1x16x128xf32> to vector<16x128xf32>
      %242 = vector.shape_cast %239 : vector<16x128xf32> to vector<1x16x128xf32>
      tpu.vector_store %arg28[%c0_115, %c0_116, %c0_117], %242 {strides = array<i32>} : memref<1x16x128xf32, #tpu.memory_space<vmem>>, vector<1x16x128xf32>,
    } else {
    }
    return
  }
  func.func @transform_0(%arg0: i32, %arg1: i32) -> (i32, i32, i32) {
    %c0_i32 = arith.constant 0 : i32
    %c0_i32_0 = arith.constant 0 : i32
    %c0_i32_1 = arith.constant 0 : i32
    return %arg0, %c0_i32, %c0_i32_0 : i32, i32, i32
  }
  func.func @transform_1(%arg0: i32, %arg1: i32) -> (i32, i32, i32) {
    %c0_i32 = arith.constant 0 : i32
    %c0_i32_0 = arith.constant 0 : i32
    %c0_i32_1 = arith.constant 0 : i32
    return %arg0, %c0_i32, %c0_i32_0 : i32, i32, i32
  }
  func.func @transform_2(%arg0: i32, %arg1: i32) -> (i32, i32, i32) {
    %c0_i32 = arith.constant 0 : i32
    %c0_i32_0 = arith.constant 0 : i32
    %c0_i32_1 = arith.constant 0 : i32
    return %arg0, %c0_i32, %c0_i32_0 : i32, i32, i32
  }
  func.func @transform_3(%arg0: i32, %arg1: i32) -> (i32, i32, i32) {
    %c0_i32 = arith.constant 0 : i32
    %c0_i32_0 = arith.constant 0 : i32
    %c0_i32_1 = arith.constant 0 : i32
    return %arg0, %c0_i32, %c0_i32_0 : i32, i32, i32
  }
  func.func @transform_4(%arg0: i32, %arg1: i32) -> (i32, i32, i32) {
    %c0_i32 = arith.constant 0 : i32
    %c0_i32_0 = arith.constant 0 : i32
    %c0_i32_1 = arith.constant 0 : i32
    return %arg1, %c0_i32, %c0_i32_0 : i32, i32, i32
  }
  func.func @transform_5(%arg0: i32, %arg1: i32) -> (i32, i32, i32) {
    %c0_i32 = arith.constant 0 : i32
    %c0_i32_0 = arith.constant 0 : i32
    %c0_i32_1 = arith.constant 0 : i32
    return %arg1, %c0_i32, %c0_i32_0 : i32, i32, i32
  }
  func.func @transform_6(%arg0: i32, %arg1: i32) -> (i32, i32, i32) {
    %c0_i32 = arith.constant 0 : i32
    %c0_i32_0 = arith.constant 0 : i32
    %c0_i32_1 = arith.constant 0 : i32
    return %arg1, %c0_i32, %c0_i32_0 : i32, i32, i32
  }
  func.func @transform_7(%arg0: i32, %arg1: i32) -> (i32, i32, i32) {
    %c0_i32 = arith.constant 0 : i32
    %c0_i32_0 = arith.constant 0 : i32
    %c0_i32_1 = arith.constant 0 : i32
    return %arg1, %c0_i32, %c0_i32_0 : i32, i32, i32
  }
  func.func @transform_8(%arg0: i32, %arg1: i32) -> (i32, i32, i32) {
    %c0_i32 = arith.constant 0 : i32
    %c0_i32_0 = arith.constant 0 : i32
    %c0_i32_1 = arith.constant 0 : i32
    return %arg1, %c0_i32, %c0_i32_0 : i32, i32, i32
  }
  func.func @transform_9(%arg0: i32, %arg1: i32) -> (i32, i32, i32) {
    %c0_i32 = arith.constant 0 : i32
    %c0_i32_0 = arith.constant 0 : i32
    %c0_i32_1 = arith.constant 0 : i32
    return %arg1, %c0_i32, %c0_i32_0 : i32, i32, i32
  }
  func.func @transform_10(%arg0: i32, %arg1: i32) -> (i32, i32, i32) {
    %c0_i32 = arith.constant 0 : i32
    %c0_i32_0 = arith.constant 0 : i32
    %c0_i32_1 = arith.constant 0 : i32
    return %arg1, %c0_i32, %c0_i32_0 : i32, i32, i32
  }
  func.func @transform_11(%arg0: i32, %arg1: i32) -> (i32, i32, i32) {
    %c0_i32 = arith.constant 0 : i32
    %c0_i32_0 = arith.constant 0 : i32
    %c0_i32_1 = arith.constant 0 : i32
    return %arg1, %c0_i32, %c0_i32_0 : i32, i32, i32
  }
  func.func @transform_12(%arg0: i32, %arg1: i32) -> (i32, i32, i32) {
    %c0_i32 = arith.constant 0 : i32
    %c0_i32_0 = arith.constant 0 : i32
    %c0_i32_1 = arith.constant 0 : i32
    return %arg1, %c0_i32, %c0_i32_0 : i32, i32, i32
  }
  func.func @transform_13(%arg0: i32, %arg1: i32) -> (i32, i32, i32) {
    %c0_i32 = arith.constant 0 : i32
    %c0_i32_0 = arith.constant 0 : i32
    %c0_i32_1 = arith.constant 0 : i32
    return %arg1, %c0_i32, %c0_i32_0 : i32, i32, i32
  }
  func.func @transform_14(%arg0: i32, %arg1: i32) -> (i32, i32, i32) {
    %c0_i32 = arith.constant 0 : i32
    %c0_i32_0 = arith.constant 0 : i32
    %c0_i32_1 = arith.constant 0 : i32
    return %arg1, %c0_i32, %c0_i32_0 : i32, i32, i32
  }
  func.func @transform_15(%arg0: i32, %arg1: i32) -> (i32, i32, i32) {
    %c0_i32 = arith.constant 0 : i32
    %c0_i32_0 = arith.constant 0 : i32
    %c0_i32_1 = arith.constant 0 : i32
    return %arg1, %c0_i32, %c0_i32_0 : i32, i32, i32
  }
  func.func @transform_16(%arg0: i32, %arg1: i32) -> (i32, i32, i32) {
    %c0_i32 = arith.constant 0 : i32
    %c0_i32_0 = arith.constant 0 : i32
    %c0_i32_1 = arith.constant 0 : i32
    return %arg1, %c0_i32, %c0_i32_0 : i32, i32, i32
  }
  func.func @transform_17(%arg0: i32, %arg1: i32) -> (i32, i32, i32) {
    %c0_i32 = arith.constant 0 : i32
    %c0_i32_0 = arith.constant 0 : i32
    %c0_i32_1 = arith.constant 0 : i32
    return %arg1, %c0_i32, %c0_i32_0 : i32, i32, i32
  }
  func.func @transform_18(%arg0: i32, %arg1: i32) -> (i32, i32, i32) {
    %c0_i32 = arith.constant 0 : i32
    %c0_i32_0 = arith.constant 0 : i32
    %c0_i32_1 = arith.constant 0 : i32
    return %arg1, %c0_i32, %c0_i32_0 : i32, i32, i32
  }
  func.func @transform_19(%arg0: i32, %arg1: i32) -> (i32, i32, i32) {
    %c0_i32 = arith.constant 0 : i32
    %c0_i32_0 = arith.constant 0 : i32
    %c0_i32_1 = arith.constant 0 : i32
    return %arg1, %c0_i32, %c0_i32_0 : i32, i32, i32
  }
  func.func @transform_20(%arg0: i32, %arg1: i32) -> (i32, i32, i32) {
    %c0_i32 = arith.constant 0 : i32
    %c0_i32_0 = arith.constant 0 : i32
    %c0_i32_1 = arith.constant 0 : i32
    return %arg1, %c0_i32, %c0_i32_0 : i32, i32, i32
  }
  func.func @transform_21(%arg0: i32, %arg1: i32) -> (i32, i32, i32) {
    %c0_i32 = arith.constant 0 : i32
    %c0_i32_0 = arith.constant 0 : i32
    %c0_i32_1 = arith.constant 0 : i32
    return %arg1, %c0_i32, %c0_i32_0 : i32, i32, i32
  }
  func.func @transform_22(%arg0: i32, %arg1: i32) -> (i32, i32, i32) {
    %c0_i32 = arith.constant 0 : i32
    %c0_i32_0 = arith.constant 0 : i32
    %c0_i32_1 = arith.constant 0 : i32
    return %arg1, %c0_i32, %c0_i32_0 : i32, i32, i32
  }
  func.func @transform_23(%arg0: i32, %arg1: i32) -> (i32, i32, i32) {
    %c0_i32 = arith.constant 0 : i32
    %c0_i32_0 = arith.constant 0 : i32
    %c0_i32_1 = arith.constant 0 : i32
    return %arg1, %c0_i32, %c0_i32_0 : i32, i32, i32
  }
  func.func @transform_24(%arg0: i32, %arg1: i32) -> (i32, i32) {
    %c0_i32 = arith.constant 0 : i32
    %c0_i32_0 = arith.constant 0 : i32
    %c0_i32_1 = arith.constant 0 : i32
    return %c0_i32, %c0_i32_0 : i32, i32
  }
  func.func @transform_25(%arg0: i32, %arg1: i32) -> (i32, i32) {
    %c0_i32 = arith.constant 0 : i32
    %c0_i32_0 = arith.constant 0 : i32
    %c0_i32_1 = arith.constant 0 : i32
    return %c0_i32, %c0_i32_0 : i32, i32
  }
  func.func @transform_26(%arg0: i32, %arg1: i32) -> (i32, i32, i32) {
    %c0_i32 = arith.constant 0 : i32
    %c0_i32_0 = arith.constant 0 : i32
    %c0_i32_1 = arith.constant 0 : i32
    return %arg0, %c0_i32, %c0_i32_0 : i32, i32, i32
  }
}

</mosaic_0001>

<llo_original>
// kernel: decoder_forward.1
$region0: #{decoder_forward.1}
  #allocation0 [shape = 'u32[]', space=smem, size = 0x4, offset = 0x4, fixed_abs, tag = 'smem constant byte address 0x4 - core index']
  #allocation1 [shape = 'u32[144,128]{1,0:T(1,128)}', space=vmem, size = 0x12000, scoped, tag = 'internal scratch']
  #allocation2 [shape = 'f32[16,128]{1,0:T(8,128)}', space=vmem, size = 0x2000, scoped, tag = 'scratch operand']
  %s0 = inlined_call_operand.vmem [shape: f32[2,16,128], index: 0, kind: input, shape index: {}]
  %s1 = inlined_call_operand.hbm [shape: f32[2,16,128], index: 1, kind: input, shape index: {}]
  %s2 = inlined_call_operand.vmem [shape: f32[2,16,16], index: 2, kind: input, shape index: {}]
  %s3 = inlined_call_operand.vmem [shape: f32[2,16,16], index: 3, kind: input, shape index: {}]
  %s4 = inlined_call_operand.hbm [shape: f32[2,1,128], index: 4, kind: input, shape index: {}]
  %s5 = inlined_call_operand.hbm [shape: f32[2,1,128], index: 5, kind: input, shape index: {}]
  %s6 = inlined_call_operand.hbm [shape: bf16[2,128,384], index: 6, kind: input, shape index: {}]
  %s7 = inlined_call_operand.vmem [shape: f32[2,1,384], index: 7, kind: input, shape index: {}]
  %s8 = inlined_call_operand.vmem [shape: bf16[2,128,128], index: 8, kind: input, shape index: {}]
  %s9 = inlined_call_operand.hbm [shape: f32[2,1,128], index: 9, kind: input, shape index: {}]
  %s10 = inlined_call_operand.hbm [shape: f32[2,1,128], index: 10, kind: input, shape index: {}]
  %s11 = inlined_call_operand.hbm [shape: f32[2,1,128], index: 11, kind: input, shape index: {}]
  %s12 = inlined_call_operand.hbm [shape: bf16[2,128,128], index: 12, kind: input, shape index: {}]
  %s13 = inlined_call_operand.hbm [shape: f32[2,1,128], index: 13, kind: input, shape index: {}]
  %s14 = inlined_call_operand.hbm [shape: bf16[2,128,256], index: 14, kind: input, shape index: {}]
  %s15 = inlined_call_operand.vmem [shape: f32[2,1,256], index: 15, kind: input, shape index: {}]
  %s16 = inlined_call_operand.hbm [shape: bf16[2,128,128], index: 16, kind: input, shape index: {}]
  %s17 = inlined_call_operand.hbm [shape: f32[2,1,128], index: 17, kind: input, shape index: {}]
  %s18 = inlined_call_operand.hbm [shape: f32[2,1,128], index: 18, kind: input, shape index: {}]
  %s19 = inlined_call_operand.hbm [shape: f32[2,1,128], index: 19, kind: input, shape index: {}]
  %s20 = inlined_call_operand.hbm [shape: bf16[2,128,256], index: 20, kind: input, shape index: {}]
  %s21 = inlined_call_operand.hbm [shape: f32[2,1,256], index: 21, kind: input, shape index: {}]
  %s22 = inlined_call_operand.hbm [shape: bf16[2,256,128], index: 22, kind: input, shape index: {}]
  %s23 = inlined_call_operand.hbm [shape: f32[2,1,128], index: 23, kind: input, shape index: {}]
  %s24 = inlined_call_operand.vmem [shape: f32[1,128], index: 24, kind: input, shape index: {}]
  %s25 = inlined_call_operand.hbm [shape: f32[1,128], index: 25, kind: input, shape index: {}]
  %s26 = inlined_call_operand.hbm [shape: f32[2,16,128], index: 26, kind: output, shape index: {}]
  %s27 = sld [smem:[#allocation0]]
  $region221: #{decoder_forward.1} parent=0
    _
  %s29 = ssub.s32 1, %s27
  %s30 = scalar_select 0, %s29, %s27
  $region1: #{decoder_forward.1} parent=0
    #allocation3 [shape = 'u8[16384]{0}', space=vmem, size = 0x4000, scoped, tag = 'input window, operand 1']
    #allocation4 [shape = 's32[2]{0}', space=sflag, size = 0x8, scoped, tag = 'scoped memory for decoder_forward.1']
    #allocation5 [shape = 's32[2]{0}', space=sflag, size = 0x8, scoped, tag = 'scoped memory for decoder_forward.1']
    #allocation6 [shape = 'u8[1024]{0}', space=vmem, size = 0x400, scoped, tag = 'input window, operand 4']
    #allocation7 [shape = 's32[2]{0}', space=sflag, size = 0x8, scoped, tag = 'scoped memory for decoder_forward.1']
    #allocation8 [shape = 'u8[1024]{0}', space=vmem, size = 0x400, scoped, tag = 'input window, operand 5']
    #allocation9 [shape = 'u8[196608]{0}', space=vmem, size = 0x30000, scoped, tag = 'input window, operand 6']
    #allocation10 [shape = 's32[2]{0}', space=sflag, size = 0x8, scoped, tag = 'scoped memory for decoder_forward.1']
    #allocation11 [shape = 'u8[1024]{0}', space=vmem, size = 0x400, scoped, tag = 'input window, operand 9']
    #allocation12 [shape = 'u8[1024]{0}', space=vmem, size = 0x400, scoped, tag = 'input window, operand 10']
    #allocation13 [shape = 's32[2]{0}', space=sflag, size = 0x8, scoped, tag = 'scoped memory for decoder_forward.1']
    #allocation14 [shape = 'u8[1024]{0}', space=vmem, size = 0x400, scoped, tag = 'input window, operand 11']
    #allocation15 [shape = 'u8[65536]{0}', space=vmem, size = 0x10000, scoped, tag = 'input window, operand 12']
    #allocation16 [shape = 's32[2]{0}', space=sflag, size = 0x8, scoped, tag = 'scoped memory for decoder_forward.1']
    #allocation17 [shape = 'u8[1024]{0}', space=vmem, size = 0x400, scoped, tag = 'input window, operand 13']
    #allocation18 [shape = 'u8[131072]{0}', space=vmem, size = 0x20000, scoped, tag = 'input window, operand 14']
    #allocation19 [shape = 's32[2]{0}', space=sflag, size = 0x8, scoped, tag = 'scoped memory for decoder_forward.1']
    #allocation20 [shape = 'u8[65536]{0}', space=vmem, size = 0x10000, scoped, tag = 'input window, operand 16']
    #allocation21 [shape = 'u8[1024]{0}', space=vmem, size = 0x400, scoped, tag = 'input window, operand 17']
    #allocation22 [shape = 's32[2]{0}', space=sflag, size = 0x8, scoped, tag = 'scoped memory for decoder_forward.1']
    #allocation23 [shape = 'u8[1024]{0}', space=vmem, size = 0x400, scoped, tag = 'input window, operand 18']
    #allocation24 [shape = 'u8[1024]{0}', space=vmem, size = 0x400, scoped, tag = 'input window, operand 19']
    #allocation25 [shape = 's32[2]{0}', space=sflag, size = 0x8, scoped, tag = 'scoped memory for decoder_forward.1']
    #allocation26 [shape = 'u8[131072]{0}', space=vmem, size = 0x20000, scoped, tag = 'input window, operand 20']
    #allocation27 [shape = 'u8[2048]{0}', space=vmem, size = 0x800, scoped, tag = 'input window, operand 21']
    #allocation28 [shape = 's32[2]{0}', space=sflag, size = 0x8, scoped, tag = 'scoped memory for decoder_forward.1']
    #allocation29 [shape = 'u8[131072]{0}', space=vmem, size = 0x20000, scoped, tag = 'input window, operand 22']
    #allocation30 [shape = 'u8[1024]{0}', space=vmem, size = 0x400, scoped, tag = 'input window, operand 23']
    #allocation31 [shape = 's32[2]{0}', space=sflag, size = 0x8, scoped, tag = 'scoped memory for decoder_forward.1']
    #allocation32 [shape = 'u8[512]{0}', space=vmem, size = 0x400, scoped, tag = 'input window, operand 25, single buffered']
    #allocation33 [shape = 'u8[16384]{0}', space=vmem, size = 0x4000, scoped, tag = 'output window, operand 0']
    %31 = vsyncpa [#allocation4], 0
    %s32 = scalar_lea.sflag [#allocation4], 1
    %33 = vsyncpa %s32, 0
    %34 = vsyncpa [#allocation7], 0
    %s35 = scalar_lea.sflag [#allocation7], 1
    %36 = vsyncpa %s35, 0
    %37 = vsyncpa [#allocation10], 0
    %s38 = scalar_lea.sflag [#allocation10], 1
    %39 = vsyncpa %s38, 0
    %40 = vsyncpa [#allocation13], 0
    %s41 = scalar_lea.sflag [#allocation13], 1
    %42 = vsyncpa %s41, 0
    %43 = vsyncpa [#allocation16], 0
    %s44 = scalar_lea.sflag [#allocation16], 1
    %45 = vsyncpa %s44, 0
    %46 = vsyncpa [#allocation19], 0
    %s47 = scalar_lea.sflag [#allocation19], 1
    %48 = vsyncpa %s47, 0
    %49 = vsyncpa [#allocation22], 0
    %s50 = scalar_lea.sflag [#allocation22], 1
    %51 = vsyncpa %s50, 0
    %52 = vsyncpa [#allocation25], 0
    %s53 = scalar_lea.sflag [#allocation25], 1
    %54 = vsyncpa %s53, 0
    %55 = vsyncpa [#allocation28], 0
    %s56 = scalar_lea.sflag [#allocation28], 1
    %57 = vsyncpa %s56, 0
    %58 = vsyncpa [#allocation31], 0
    %s59 = scalar_lea.sflag [#allocation31], 1
    %60 = vsyncpa %s59, 0
    %61 = vsyncpa [#allocation5], 0
    %s62 = scalar_lea.sflag [#allocation5], 1
    %63 = vsyncpa %s62, 0
    loop: start=0, step=1, limit=6
    $region2: #{decoder_forward.1} parent=1 // loop_pre_header
      _
    $region3: #{decoder_forward.1} parent=1 // loop_header
      %s65 = sphi 0, %s69
      %p66 = scmp.ge.s32.totalorder %s65, 6
      %s72 = sphi 0, %s84
      %s73 = sphi 0, %s80
      %s74 = sphi 0, %s72
      %s75 = sphi 0, %s73
      %s76 = sphi 0, %s74
      %s77 = sphi 0, %s75
      %s87 = sphi 0, %s89
      %s90 = sphi 0, %s87
      %s91 = sphi 0, %s90
      %s107 = sphi 0, %s91
      %s113 = sphi 0, %s115
      %s116 = sphi 0, %s113
      %s117 = sphi 0, %s116
      %s133 = sphi 0, %s117
      %s139 = sphi 0, %s141
      %s142 = sphi 0, %s139
      %s143 = sphi 0, %s142
      %s159 = sphi 0, %s143
      %s165 = sphi 0, %s167
      %s168 = sphi 0, %s165
      %s169 = sphi 0, %s168
      %s185 = sphi 0, %s169
      %s191 = sphi 0, %s193
      %s194 = sphi 0, %s191
      %s195 = sphi 0, %s194
      %s211 = sphi 0, %s195
      %s217 = sphi 0, %s219
      %s220 = sphi 0, %s217
      %s221 = sphi 0, %s220
      %s237 = sphi 0, %s221
      %s243 = sphi 0, %s245
      %s246 = sphi 0, %s243
      %s247 = sphi 0, %s246
      %s263 = sphi 0, %s247
      %s269 = sphi 0, %s271
      %s272 = sphi 0, %s269
      %s273 = sphi 0, %s272
      %s289 = sphi 0, %s273
      %s295 = sphi 0, %s297
      %s298 = sphi 0, %s295
      %s299 = sphi 0, %s298
      %s315 = sphi 0, %s299
      %s321 = sphi 0, %s323
      %s324 = sphi 0, %s321
      %s325 = sphi 0, %s324
      %s341 = sphi 0, %s325
      %s347 = sphi 0, %s349
      %s350 = sphi 0, %s347
      %s351 = sphi 0, %s350
      %s367 = sphi 0, %s351
      %s373 = sphi 0, %s375
      %s376 = sphi 0, %s373
      %s377 = sphi 0, %s376
      %s393 = sphi 0, %s377
      %s399 = sphi 0, %s401
      %s402 = sphi 0, %s399
      %s403 = sphi 0, %s402
      %s419 = sphi 0, %s403
      %s425 = sphi 0, %s427
      %s428 = sphi 0, %s425
      %s429 = sphi 0, %s428
      %s445 = sphi 0, %s429
      %s451 = sphi 0, %s453
      %s454 = sphi 0, %s451
      %s455 = sphi 0, %s454
      %s471 = sphi 0, %s455
      %s477 = sphi 0, %s479
      %s480 = sphi 0, %s477
      %s481 = sphi 0, %s480
      %s497 = sphi 0, %s481
      %s503 = sphi 0, %s505
      %s506 = sphi 0, %s503
      %s507 = sphi 0, %s506
      %s523 = sphi 0, %s507
      %s529 = sphi 0, %s531
      %s532 = sphi 0, %s529
      %s533 = sphi 0, %s532
      %s549 = sphi 0, %s533
      %s555 = sphi 0, %s557
      %s558 = sphi 0, %s555
      %s559 = sphi 0, %s558
      %s575 = sphi 0, %s559
      %s581 = sphi 0, %s583
      %s584 = sphi 0, %s581
      %s585 = sphi 0, %s584
      %s601 = sphi 0, %s585
      %s607 = sphi 0, %s609
      %s610 = sphi 0, %s607
      %s611 = sphi 0, %s610
      %s627 = sphi 0, %s611
      %s633 = sphi 0, %s635
      %s636 = sphi 0, %s633
      %s637 = sphi 0, %s636
      %s653 = sphi 0, %s637
      %s659 = sphi 0, %s661
      %s662 = sphi 0, %s659
      %s663 = sphi 0, %s662
      %s679 = sphi 0, %s663
      %s685 = sphi 0, %s687
      %s688 = sphi 0, %s685
      %s689 = sphi 0, %s688
      %s705 = sphi 0, %s689
      %s709 = sphi 0, %s709
      %s711 = sphi 0, %s709
      %s712 = sphi 0, %s711
      %s726 = sphi 0, %s712
      %s730 = sphi 0, %s730
      %s732 = sphi 0, %s730
      %s733 = sphi 0, %s732
      %s747 = sphi 0, %s733
      %s753 = sphi 0, %s755
      %s756 = sphi 0, %s753
      %s757 = sphi 0, %s756
      %s773 = sphi 0, %s757
    $region4: #{decoder_forward.1} parent=1 // loop_header_branch
      %68 = sbr.rel (%p66) target = $region8
    $region5: #{decoder_forward.1} parent=1 // loop_body
      %s70 = ssub.s32 %s65, 1
      %s71 = ssub.s32 %s65, 2
      %s78 = sadd.s32 1, %s73
      %p79 = scmp.ge.s32.totalorder %s78, 2
      %s80 = scalar_select %p79, 0, %s78
      %s81 = sadd.s32 1, %s72
      %s82 = scalar_select %p79, %s81, %s72
      %p83 = scmp.ge.s32.totalorder %s82, 2
      %s84 = scalar_select %p83, 0, %s82
      %s85 = ssub.s32 %s72, %s84
      %p86 = scmp.eq.s32.totalorder %s85, 0
      %s88 = sadd.s32 %s87, 1
      %s89 = scalar_select %p86, %s87, %s88
      %p92 = pneg %p86
      %p93 = scmp.eq.s32.totalorder %s65, 3
      %p94 = por %p92, %p93
      %p95 = scmp.ne.s32.totalorder %s87, %s90
      %p96 = scmp.eq.s32.totalorder %s65, 0
      %p97 = por %p95, %p96
      %p98 = scmp.ne.s32.totalorder %s87, %s90
      %p99 = scmp.eq.s32.totalorder %s70, 3
      %p100 = por %p98, %p99
      %p101 = scmp.ne.s32.totalorder %s90, %s91
      %p102 = scmp.eq.s32.totalorder %s70, 0
      %p103 = por %p101, %p102
      %p104 = scmp.ne.s32.totalorder %s90, %s91
      %p105 = scmp.eq.s32.totalorder %s71, 3
      %p106 = por %p104, %p105
      %p108 = scmp.ne.s32.totalorder %s91, %s107
      %p109 = scmp.eq.s32.totalorder %s71, 0
      %p110 = por %p108, %p109
      %s111 = ssub.s32 %s72, %s84
      %p112 = scmp.eq.s32.totalorder %s111, 0
      %s114 = sadd.s32 %s113, 1
      %s115 = scalar_select %p112, %s113, %s114
      %p118 = pneg %p112
      %p119 = scmp.eq.s32.totalorder %s65, 3
      %p120 = por %p118, %p119
      %p121 = scmp.ne.s32.totalorder %s113, %s116
      %p122 = scmp.eq.s32.totalorder %s65, 0
      %p123 = por %p121, %p122
      %p124 = scmp.ne.s32.totalorder %s113, %s116
      %p125 = scmp.eq.s32.totalorder %s70, 3
      %p126 = por %p124, %p125
      %p127 = scmp.ne.s32.totalorder %s116, %s117
      %p128 = scmp.eq.s32.totalorder %s70, 0
      %p129 = por %p127, %p128
      %p130 = scmp.ne.s32.totalorder %s116, %s117
      %p131 = scmp.eq.s32.totalorder %s71, 3
      %p132 = por %p130, %p131
      %p134 = scmp.ne.s32.totalorder %s117, %s133
      %p135 = scmp.eq.s32.totalorder %s71, 0
      %p136 = por %p134, %p135
      %s137 = ssub.s32 %s72, %s84
      %p138 = scmp.eq.s32.totalorder %s137, 0
      %s140 = sadd.s32 %s139, 1
      %s141 = scalar_select %p138, %s139, %s140
      %p144 = pneg %p138
      %p145 = scmp.eq.s32.totalorder %s65, 3
      %p146 = por %p144, %p145
      %p147 = scmp.ne.s32.totalorder %s139, %s142
      %p148 = scmp.eq.s32.totalorder %s65, 0
      %p149 = por %p147, %p148
      %p150 = scmp.ne.s32.totalorder %s139, %s142
      %p151 = scmp.eq.s32.totalorder %s70, 3
      %p152 = por %p150, %p151
      %p153 = scmp.ne.s32.totalorder %s142, %s143
      %p154 = scmp.eq.s32.totalorder %s70, 0
      %p155 = por %p153, %p154
      %p156 = scmp.ne.s32.totalorder %s142, %s143
      %p157 = scmp.eq.s32.totalorder %s71, 3
      %p158 = por %p156, %p157
      %p160 = scmp.ne.s32.totalorder %s143, %s159
      %p161 = scmp.eq.s32.totalorder %s71, 0
      %p162 = por %p160, %p161
      %s163 = ssub.s32 %s72, %s84
      %p164 = scmp.eq.s32.totalorder %s163, 0
      %s166 = sadd.s32 %s165, 1
      %s167 = scalar_select %p164, %s165, %s166
      %p170 = pneg %p164
      %p171 = scmp.eq.s32.totalorder %s65, 3
      %p172 = por %p170, %p171
      %p173 = scmp.ne.s32.totalorder %s165, %s168
      %p174 = scmp.eq.s32.totalorder %s65, 0
      %p175 = por %p173, %p174
      %p176 = scmp.ne.s32.totalorder %s165, %s168
      %p177 = scmp.eq.s32.totalorder %s70, 3
      %p178 = por %p176, %p177
      %p179 = scmp.ne.s32.totalorder %s168, %s169
      %p180 = scmp.eq.s32.totalorder %s70, 0
      %p181 = por %p179, %p180
      %p182 = scmp.ne.s32.totalorder %s168, %s169
      %p183 = scmp.eq.s32.totalorder %s71, 3
      %p184 = por %p182, %p183
      %p186 = scmp.ne.s32.totalorder %s169, %s185
      %p187 = scmp.eq.s32.totalorder %s71, 0
      %p188 = por %p186, %p187
      %s189 = ssub.s32 %s73, %s80
      %p190 = scmp.eq.s32.totalorder %s189, 0
      %s192 = sadd.s32 %s191, 1
      %s193 = scalar_select %p190, %s191, %s192
      %p196 = pneg %p190
      %p197 = scmp.eq.s32.totalorder %s65, 3
      %p198 = por %p196, %p197
      %p199 = scmp.ne.s32.totalorder %s191, %s194
      %p200 = scmp.eq.s32.totalorder %s65, 0
      %p201 = por %p199, %p200
      %p202 = scmp.ne.s32.totalorder %s191, %s194
      %p203 = scmp.eq.s32.totalorder %s70, 3
      %p204 = por %p202, %p203
      %p205 = scmp.ne.s32.totalorder %s194, %s195
      %p206 = scmp.eq.s32.totalorder %s70, 0
      %p207 = por %p205, %p206
      %p208 = scmp.ne.s32.totalorder %s194, %s195
      %p209 = scmp.eq.s32.totalorder %s71, 3
      %p210 = por %p208, %p209
      %p212 = scmp.ne.s32.totalorder %s195, %s211
      %p213 = scmp.eq.s32.totalorder %s71, 0
      %p214 = por %p212, %p213
      %s215 = ssub.s32 %s73, %s80
      %p216 = scmp.eq.s32.totalorder %s215, 0
      %s218 = sadd.s32 %s217, 1
      %s219 = scalar_select %p216, %s217, %s218
      %p222 = pneg %p216
      %p223 = scmp.eq.s32.totalorder %s65, 3
      %p224 = por %p222, %p223
      %p225 = scmp.ne.s32.totalorder %s217, %s220
      %p226 = scmp.eq.s32.totalorder %s65, 0
      %p227 = por %p225, %p226
      %p228 = scmp.ne.s32.totalorder %s217, %s220
      %p229 = scmp.eq.s32.totalorder %s70, 3
      %p230 = por %p228, %p229
      %p231 = scmp.ne.s32.totalorder %s220, %s221
      %p232 = scmp.eq.s32.totalorder %s70, 0
      %p233 = por %p231, %p232
      %p234 = scmp.ne.s32.totalorder %s220, %s221
      %p235 = scmp.eq.s32.totalorder %s71, 3
      %p236 = por %p234, %p235
      %p238 = scmp.ne.s32.totalorder %s221, %s237
      %p239 = scmp.eq.s32.totalorder %s71, 0
      %p240 = por %p238, %p239
      %s241 = ssub.s32 %s73, %s80
      %p242 = scmp.eq.s32.totalorder %s241, 0
      %s244 = sadd.s32 %s243, 1
      %s245 = scalar_select %p242, %s243, %s244
      %p248 = pneg %p242
      %p249 = scmp.eq.s32.totalorder %s65, 3
      %p250 = por %p248, %p249
      %p251 = scmp.ne.s32.totalorder %s243, %s246
      %p252 = scmp.eq.s32.totalorder %s65, 0
      %p253 = por %p251, %p252
      %p254 = scmp.ne.s32.totalorder %s243, %s246
      %p255 = scmp.eq.s32.totalorder %s70, 3
      %p256 = por %p254, %p255
      %p257 = scmp.ne.s32.totalorder %s246, %s247
      %p258 = scmp.eq.s32.totalorder %s70, 0
      %p259 = por %p257, %p258
      %p260 = scmp.ne.s32.totalorder %s246, %s247
      %p261 = scmp.eq.s32.totalorder %s71, 3
      %p262 = por %p260, %p261
      %p264 = scmp.ne.s32.totalorder %s247, %s263
      %p265 = scmp.eq.s32.totalorder %s71, 0
      %p266 = por %p264, %p265
      %s267 = ssub.s32 %s73, %s80
      %p268 = scmp.eq.s32.totalorder %s267, 0
      %s270 = sadd.s32 %s269, 1
      %s271 = scalar_select %p268, %s269, %s270
      %p274 = pneg %p268
      %p275 = scmp.eq.s32.totalorder %s65, 3
      %p276 = por %p274, %p275
      %p277 = scmp.ne.s32.totalorder %s269, %s272
      %p278 = scmp.eq.s32.totalorder %s65, 0
      %p279 = por %p277, %p278
      %p280 = scmp.ne.s32.totalorder %s269, %s272
      %p281 = scmp.eq.s32.totalorder %s70, 3
      %p282 = por %p280, %p281
      %p283 = scmp.ne.s32.totalorder %s272, %s273
      %p284 = scmp.eq.s32.totalorder %s70, 0
      %p285 = por %p283, %p284
      %p286 = scmp.ne.s32.totalorder %s272, %s273
      %p287 = scmp.eq.s32.totalorder %s71, 3
      %p288 = por %p286, %p287
      %p290 = scmp.ne.s32.totalorder %s273, %s289
      %p291 = scmp.eq.s32.totalorder %s71, 0
      %p292 = por %p290, %p291
      %s293 = ssub.s32 %s73, %s80
      %p294 = scmp.eq.s32.totalorder %s293, 0
      %s296 = sadd.s32 %s295, 1
      %s297 = scalar_select %p294, %s295, %s296
      %p300 = pneg %p294
      %p301 = scmp.eq.s32.totalorder %s65, 3
      %p302 = por %p300, %p301
      %p303 = scmp.ne.s32.totalorder %s295, %s298
      %p304 = scmp.eq.s32.totalorder %s65, 0
      %p305 = por %p303, %p304
      %p306 = scmp.ne.s32.totalorder %s295, %s298
      %p307 = scmp.eq.s32.totalorder %s70, 3
      %p308 = por %p306, %p307
      %p309 = scmp.ne.s32.totalorder %s298, %s299
      %p310 = scmp.eq.s32.totalorder %s70, 0
      %p311 = por %p309, %p310
      %p312 = scmp.ne.s32.totalorder %s298, %s299
      %p313 = scmp.eq.s32.totalorder %s71, 3
      %p314 = por %p312, %p313
      %p316 = scmp.ne.s32.totalorder %s299, %s315
      %p317 = scmp.eq.s32.totalorder %s71, 0
      %p318 = por %p316, %p317
      %s319 = ssub.s32 %s73, %s80
      %p320 = scmp.eq.s32.totalorder %s319, 0
      %s322 = sadd.s32 %s321, 1
      %s323 = scalar_select %p320, %s321, %s322
      %p326 = pneg %p320
      %p327 = scmp.eq.s32.totalorder %s65, 3
      %p328 = por %p326, %p327
      %p329 = scmp.ne.s32.totalorder %s321, %s324
      %p330 = scmp.eq.s32.totalorder %s65, 0
      %p331 = por %p329, %p330
      %p332 = scmp.ne.s32.totalorder %s321, %s324
      %p333 = scmp.eq.s32.totalorder %s70, 3
      %p334 = por %p332, %p333
      %p335 = scmp.ne.s32.totalorder %s324, %s325
      %p336 = scmp.eq.s32.totalorder %s70, 0
      %p337 = por %p335, %p336
      %p338 = scmp.ne.s32.totalorder %s324, %s325
      %p339 = scmp.eq.s32.totalorder %s71, 3
      %p340 = por %p338, %p339
      %p342 = scmp.ne.s32.totalorder %s325, %s341
      %p343 = scmp.eq.s32.totalorder %s71, 0
      %p344 = por %p342, %p343
      %s345 = ssub.s32 %s73, %s80
      %p346 = scmp.eq.s32.totalorder %s345, 0
      %s348 = sadd.s32 %s347, 1
      %s349 = scalar_select %p346, %s347, %s348
      %p352 = pneg %p346
      %p353 = scmp.eq.s32.totalorder %s65, 3
      %p354 = por %p352, %p353
      %p355 = scmp.ne.s32.totalorder %s347, %s350
      %p356 = scmp.eq.s32.totalorder %s65, 0
      %p357 = por %p355, %p356
      %p358 = scmp.ne.s32.totalorder %s347, %s350
      %p359 = scmp.eq.s32.totalorder %s70, 3
      %p360 = por %p358, %p359
      %p361 = scmp.ne.s32.totalorder %s350, %s351
      %p362 = scmp.eq.s32.totalorder %s70, 0
      %p363 = por %p361, %p362
      %p364 = scmp.ne.s32.totalorder %s350, %s351
      %p365 = scmp.eq.s32.totalorder %s71, 3
      %p366 = por %p364, %p365
      %p368 = scmp.ne.s32.totalorder %s351, %s367
      %p369 = scmp.eq.s32.totalorder %s71, 0
      %p370 = por %p368, %p369
      %s371 = ssub.s32 %s73, %s80
      %p372 = scmp.eq.s32.totalorder %s371, 0
      %s374 = sadd.s32 %s373, 1
      %s375 = scalar_select %p372, %s373, %s374
      %p378 = pneg %p372
      %p379 = scmp.eq.s32.totalorder %s65, 3
      %p380 = por %p378, %p379
      %p381 = scmp.ne.s32.totalorder %s373, %s376
      %p382 = scmp.eq.s32.totalorder %s65, 0
      %p383 = por %p381, %p382
      %p384 = scmp.ne.s32.totalorder %s373, %s376
      %p385 = scmp.eq.s32.totalorder %s70, 3
      %p386 = por %p384, %p385
      %p387 = scmp.ne.s32.totalorder %s376, %s377
      %p388 = scmp.eq.s32.totalorder %s70, 0
      %p389 = por %p387, %p388
      %p390 = scmp.ne.s32.totalorder %s376, %s377
      %p391 = scmp.eq.s32.totalorder %s71, 3
      %p392 = por %p390, %p391
      %p394 = scmp.ne.s32.totalorder %s377, %s393
      %p395 = scmp.eq.s32.totalorder %s71, 0
      %p396 = por %p394, %p395
      %s397 = ssub.s32 %s73, %s80
      %p398 = scmp.eq.s32.totalorder %s397, 0
      %s400 = sadd.s32 %s399, 1
      %s401 = scalar_select %p398, %s399, %s400
      %p404 = pneg %p398
      %p405 = scmp.eq.s32.totalorder %s65, 3
      %p406 = por %p404, %p405
      %p407 = scmp.ne.s32.totalorder %s399, %s402
      %p408 = scmp.eq.s32.totalorder %s65, 0
      %p409 = por %p407, %p408
      %p410 = scmp.ne.s32.totalorder %s399, %s402
      %p411 = scmp.eq.s32.totalorder %s70, 3
      %p412 = por %p410, %p411
      %p413 = scmp.ne.s32.totalorder %s402, %s403
      %p414 = scmp.eq.s32.totalorder %s70, 0
      %p415 = por %p413, %p414
      %p416 = scmp.ne.s32.totalorder %s402, %s403
      %p417 = scmp.eq.s32.totalorder %s71, 3
      %p418 = por %p416, %p417
      %p420 = scmp.ne.s32.totalorder %s403, %s419
      %p421 = scmp.eq.s32.totalorder %s71, 0
      %p422 = por %p420, %p421
      %s423 = ssub.s32 %s73, %s80
      %p424 = scmp.eq.s32.totalorder %s423, 0
      %s426 = sadd.s32 %s425, 1
      %s427 = scalar_select %p424, %s425, %s426
      %p430 = pneg %p424
      %p431 = scmp.eq.s32.totalorder %s65, 3
      %p432 = por %p430, %p431
      %p433 = scmp.ne.s32.totalorder %s425, %s428
      %p434 = scmp.eq.s32.totalorder %s65, 0
      %p435 = por %p433, %p434
      %p436 = scmp.ne.s32.totalorder %s425, %s428
      %p437 = scmp.eq.s32.totalorder %s70, 3
      %p438 = por %p436, %p437
      %p439 = scmp.ne.s32.totalorder %s428, %s429
      %p440 = scmp.eq.s32.totalorder %s70, 0
      %p441 = por %p439, %p440
      %p442 = scmp.ne.s32.totalorder %s428, %s429
      %p443 = scmp.eq.s32.totalorder %s71, 3
      %p444 = por %p442, %p443
      %p446 = scmp.ne.s32.totalorder %s429, %s445
      %p447 = scmp.eq.s32.totalorder %s71, 0
      %p448 = por %p446, %p447
      %s449 = ssub.s32 %s73, %s80
      %p450 = scmp.eq.s32.totalorder %s449, 0
      %s452 = sadd.s32 %s451, 1
      %s453 = scalar_select %p450, %s451, %s452
      %p456 = pneg %p450
      %p457 = scmp.eq.s32.totalorder %s65, 3
      %p458 = por %p456, %p457
      %p459 = scmp.ne.s32.totalorder %s451, %s454
      %p460 = scmp.eq.s32.totalorder %s65, 0
      %p461 = por %p459, %p460
      %p462 = scmp.ne.s32.totalorder %s451, %s454
      %p463 = scmp.eq.s32.totalorder %s70, 3
      %p464 = por %p462, %p463
      %p465 = scmp.ne.s32.totalorder %s454, %s455
      %p466 = scmp.eq.s32.totalorder %s70, 0
      %p467 = por %p465, %p466
      %p468 = scmp.ne.s32.totalorder %s454, %s455
      %p469 = scmp.eq.s32.totalorder %s71, 3
      %p470 = por %p468, %p469
      %p472 = scmp.ne.s32.totalorder %s455, %s471
      %p473 = scmp.eq.s32.totalorder %s71, 0
      %p474 = por %p472, %p473
      %s475 = ssub.s32 %s73, %s80
      %p476 = scmp.eq.s32.totalorder %s475, 0
      %s478 = sadd.s32 %s477, 1
      %s479 = scalar_select %p476, %s477, %s478
      %p482 = pneg %p476
      %p483 = scmp.eq.s32.totalorder %s65, 3
      %p484 = por %p482, %p483
      %p485 = scmp.ne.s32.totalorder %s477, %s480
      %p486 = scmp.eq.s32.totalorder %s65, 0
      %p487 = por %p485, %p486
      %p488 = scmp.ne.s32.totalorder %s477, %s480
      %p489 = scmp.eq.s32.totalorder %s70, 3
      %p490 = por %p488, %p489
      %p491 = scmp.ne.s32.totalorder %s480, %s481
      %p492 = scmp.eq.s32.totalorder %s70, 0
      %p493 = por %p491, %p492
      %p494 = scmp.ne.s32.totalorder %s480, %s481
      %p495 = scmp.eq.s32.totalorder %s71, 3
      %p496 = por %p494, %p495
      %p498 = scmp.ne.s32.totalorder %s481, %s497
      %p499 = scmp.eq.s32.totalorder %s71, 0
      %p500 = por %p498, %p499
      %s501 = ssub.s32 %s73, %s80
      %p502 = scmp.eq.s32.totalorder %s501, 0
      %s504 = sadd.s32 %s503, 1
      %s505 = scalar_select %p502, %s503, %s504
      %p508 = pneg %p502
      %p509 = scmp.eq.s32.totalorder %s65, 3
      %p510 = por %p508, %p509
      %p511 = scmp.ne.s32.totalorder %s503, %s506
      %p512 = scmp.eq.s32.totalorder %s65, 0
      %p513 = por %p511, %p512
      %p514 = scmp.ne.s32.totalorder %s503, %s506
      %p515 = scmp.eq.s32.totalorder %s70, 3
      %p516 = por %p514, %p515
      %p517 = scmp.ne.s32.totalorder %s506, %s507
      %p518 = scmp.eq.s32.totalorder %s70, 0
      %p519 = por %p517, %p518
      %p520 = scmp.ne.s32.totalorder %s506, %s507
      %p521 = scmp.eq.s32.totalorder %s71, 3
      %p522 = por %p520, %p521
      %p524 = scmp.ne.s32.totalorder %s507, %s523
      %p525 = scmp.eq.s32.totalorder %s71, 0
      %p526 = por %p524, %p525
      %s527 = ssub.s32 %s73, %s80
      %p528 = scmp.eq.s32.totalorder %s527, 0
      %s530 = sadd.s32 %s529, 1
      %s531 = scalar_select %p528, %s529, %s530
      %p534 = pneg %p528
      %p535 = scmp.eq.s32.totalorder %s65, 3
      %p536 = por %p534, %p535
      %p537 = scmp.ne.s32.totalorder %s529, %s532
      %p538 = scmp.eq.s32.totalorder %s65, 0
      %p539 = por %p537, %p538
      %p540 = scmp.ne.s32.totalorder %s529, %s532
      %p541 = scmp.eq.s32.totalorder %s70, 3
      %p542 = por %p540, %p541
      %p543 = scmp.ne.s32.totalorder %s532, %s533
      %p544 = scmp.eq.s32.totalorder %s70, 0
      %p545 = por %p543, %p544
      %p546 = scmp.ne.s32.totalorder %s532, %s533
      %p547 = scmp.eq.s32.totalorder %s71, 3
      %p548 = por %p546, %p547
      %p550 = scmp.ne.s32.totalorder %s533, %s549
      %p551 = scmp.eq.s32.totalorder %s71, 0
      %p552 = por %p550, %p551
      %s553 = ssub.s32 %s73, %s80
      %p554 = scmp.eq.s32.totalorder %s553, 0
      %s556 = sadd.s32 %s555, 1
      %s557 = scalar_select %p554, %s555, %s556
      %p560 = pneg %p554
      %p561 = scmp.eq.s32.totalorder %s65, 3
      %p562 = por %p560, %p561
      %p563 = scmp.ne.s32.totalorder %s555, %s558
      %p564 = scmp.eq.s32.totalorder %s65, 0
      %p565 = por %p563, %p564
      %p566 = scmp.ne.s32.totalorder %s555, %s558
      %p567 = scmp.eq.s32.totalorder %s70, 3
      %p568 = por %p566, %p567
      %p569 = scmp.ne.s32.totalorder %s558, %s559
      %p570 = scmp.eq.s32.totalorder %s70, 0
      %p571 = por %p569, %p570
      %p572 = scmp.ne.s32.totalorder %s558, %s559
      %p573 = scmp.eq.s32.totalorder %s71, 3
      %p574 = por %p572, %p573
      %p576 = scmp.ne.s32.totalorder %s559, %s575
      %p577 = scmp.eq.s32.totalorder %s71, 0
      %p578 = por %p576, %p577
      %s579 = ssub.s32 %s73, %s80
      %p580 = scmp.eq.s32.totalorder %s579, 0
      %s582 = sadd.s32 %s581, 1
      %s583 = scalar_select %p580, %s581, %s582
      %p586 = pneg %p580
      %p587 = scmp.eq.s32.totalorder %s65, 3
      %p588 = por %p586, %p587
      %p589 = scmp.ne.s32.totalorder %s581, %s584
      %p590 = scmp.eq.s32.totalorder %s65, 0
      %p591 = por %p589, %p590
      %p592 = scmp.ne.s32.totalorder %s581, %s584
      %p593 = scmp.eq.s32.totalorder %s70, 3
      %p594 = por %p592, %p593
      %p595 = scmp.ne.s32.totalorder %s584, %s585
      %p596 = scmp.eq.s32.totalorder %s70, 0
      %p597 = por %p595, %p596
      %p598 = scmp.ne.s32.totalorder %s584, %s585
      %p599 = scmp.eq.s32.totalorder %s71, 3
      %p600 = por %p598, %p599
      %p602 = scmp.ne.s32.totalorder %s585, %s601
      %p603 = scmp.eq.s32.totalorder %s71, 0
      %p604 = por %p602, %p603
      %s605 = ssub.s32 %s73, %s80
      %p606 = scmp.eq.s32.totalorder %s605, 0
      %s608 = sadd.s32 %s607, 1
      %s609 = scalar_select %p606, %s607, %s608
      %p612 = pneg %p606
      %p613 = scmp.eq.s32.totalorder %s65, 3
      %p614 = por %p612, %p613
      %p615 = scmp.ne.s32.totalorder %s607, %s610
      %p616 = scmp.eq.s32.totalorder %s65, 0
      %p617 = por %p615, %p616
      %p618 = scmp.ne.s32.totalorder %s607, %s610
      %p619 = scmp.eq.s32.totalorder %s70, 3
      %p620 = por %p618, %p619
      %p621 = scmp.ne.s32.totalorder %s610, %s611
      %p622 = scmp.eq.s32.totalorder %s70, 0
      %p623 = por %p621, %p622
      %p624 = scmp.ne.s32.totalorder %s610, %s611
      %p625 = scmp.eq.s32.totalorder %s71, 3
      %p626 = por %p624, %p625
      %p628 = scmp.ne.s32.totalorder %s611, %s627
      %p629 = scmp.eq.s32.totalorder %s71, 0
      %p630 = por %p628, %p629
      %s631 = ssub.s32 %s73, %s80
      %p632 = scmp.eq.s32.totalorder %s631, 0
      %s634 = sadd.s32 %s633, 1
      %s635 = scalar_select %p632, %s633, %s634
      %p638 = pneg %p632
      %p639 = scmp.eq.s32.totalorder %s65, 3
      %p640 = por %p638, %p639
      %p641 = scmp.ne.s32.totalorder %s633, %s636
      %p642 = scmp.eq.s32.totalorder %s65, 0
      %p643 = por %p641, %p642
      %p644 = scmp.ne.s32.totalorder %s633, %s636
      %p645 = scmp.eq.s32.totalorder %s70, 3
      %p646 = por %p644, %p645
      %p647 = scmp.ne.s32.totalorder %s636, %s637
      %p648 = scmp.eq.s32.totalorder %s70, 0
      %p649 = por %p647, %p648
      %p650 = scmp.ne.s32.totalorder %s636, %s637
      %p651 = scmp.eq.s32.totalorder %s71, 3
      %p652 = por %p650, %p651
      %p654 = scmp.ne.s32.totalorder %s637, %s653
      %p655 = scmp.eq.s32.totalorder %s71, 0
      %p656 = por %p654, %p655
      %s657 = ssub.s32 %s73, %s80
      %p658 = scmp.eq.s32.totalorder %s657, 0
      %s660 = sadd.s32 %s659, 1
      %s661 = scalar_select %p658, %s659, %s660
      %p664 = pneg %p658
      %p665 = scmp.eq.s32.totalorder %s65, 3
      %p666 = por %p664, %p665
      %p667 = scmp.ne.s32.totalorder %s659, %s662
      %p668 = scmp.eq.s32.totalorder %s65, 0
      %p669 = por %p667, %p668
      %p670 = scmp.ne.s32.totalorder %s659, %s662
      %p671 = scmp.eq.s32.totalorder %s70, 3
      %p672 = por %p670, %p671
      %p673 = scmp.ne.s32.totalorder %s662, %s663
      %p674 = scmp.eq.s32.totalorder %s70, 0
      %p675 = por %p673, %p674
      %p676 = scmp.ne.s32.totalorder %s662, %s663
      %p677 = scmp.eq.s32.totalorder %s71, 3
      %p678 = por %p676, %p677
      %p680 = scmp.ne.s32.totalorder %s663, %s679
      %p681 = scmp.eq.s32.totalorder %s71, 0
      %p682 = por %p680, %p681
      %s683 = ssub.s32 %s73, %s80
      %p684 = scmp.eq.s32.totalorder %s683, 0
      %s686 = sadd.s32 %s685, 1
      %s687 = scalar_select %p684, %s685, %s686
      %p690 = pneg %p684
      %p691 = scmp.eq.s32.totalorder %s65, 3
      %p692 = por %p690, %p691
      %p693 = scmp.ne.s32.totalorder %s685, %s688
      %p694 = scmp.eq.s32.totalorder %s65, 0
      %p695 = por %p693, %p694
      %p696 = scmp.ne.s32.totalorder %s685, %s688
      %p697 = scmp.eq.s32.totalorder %s70, 3
      %p698 = por %p696, %p697
      %p699 = scmp.ne.s32.totalorder %s688, %s689
      %p700 = scmp.eq.s32.totalorder %s70, 0
      %p701 = por %p699, %p700
      %p702 = scmp.ne.s32.totalorder %s688, %s689
      %p703 = scmp.eq.s32.totalorder %s71, 3
      %p704 = por %p702, %p703
      %p706 = scmp.ne.s32.totalorder %s689, %s705
      %p707 = scmp.eq.s32.totalorder %s71, 0
      %p708 = por %p706, %p707
      %s710 = sadd.s32 %s709, 1
      %p713 = scmp.eq.s32.totalorder %s65, 3
      %p714 = scmp.ne.s32.totalorder %s709, %s711
      %p715 = scmp.eq.s32.totalorder %s65, 0
      %p716 = por %p714, %p715
      %p717 = scmp.ne.s32.totalorder %s709, %s711
      %p718 = scmp.eq.s32.totalorder %s70, 3
      %p719 = por %p717, %p718
      %p720 = scmp.ne.s32.totalorder %s711, %s712
      %p721 = scmp.eq.s32.totalorder %s70, 0
      %p722 = por %p720, %p721
      %p723 = scmp.ne.s32.totalorder %s711, %s712
      %p724 = scmp.eq.s32.totalorder %s71, 3
      %p725 = por %p723, %p724
      %p727 = scmp.ne.s32.totalorder %s712, %s726
      %p728 = scmp.eq.s32.totalorder %s71, 0
      %p729 = por %p727, %p728
      %s731 = sadd.s32 %s730, 1
      %p734 = scmp.eq.s32.totalorder %s65, 3
      %p735 = scmp.ne.s32.totalorder %s730, %s732
      %p736 = scmp.eq.s32.totalorder %s65, 0
      %p737 = por %p735, %p736
      %p738 = scmp.ne.s32.totalorder %s730, %s732
      %p739 = scmp.eq.s32.totalorder %s70, 3
      %p740 = por %p738, %p739
      %p741 = scmp.ne.s32.totalorder %s732, %s733
      %p742 = scmp.eq.s32.totalorder %s70, 0
      %p743 = por %p741, %p742
      %p744 = scmp.ne.s32.totalorder %s732, %s733
      %p745 = scmp.eq.s32.totalorder %s71, 3
      %p746 = por %p744, %p745
      %p748 = scmp.ne.s32.totalorder %s733, %s747
      %p749 = scmp.eq.s32.totalorder %s71, 0
      %p750 = por %p748, %p749
      %s751 = ssub.s32 %s72, %s84
      %p752 = scmp.eq.s32.totalorder %s751, 0
      %s754 = sadd.s32 %s753, 1
      %s755 = scalar_select %p752, %s753, %s754
      %p758 = pneg %p752
      %p759 = scmp.eq.s32.totalorder %s65, 3
      %p760 = por %p758, %p759
      %p761 = scmp.ne.s32.totalorder %s753, %s756
      %p762 = scmp.eq.s32.totalorder %s65, 0
      %p763 = por %p761, %p762
      %p764 = scmp.ne.s32.totalorder %s753, %s756
      %p765 = scmp.eq.s32.totalorder %s70, 3
      %p766 = por %p764, %p765
      %p767 = scmp.ne.s32.totalorder %s756, %s757
      %p768 = scmp.eq.s32.totalorder %s70, 0
      %p769 = por %p767, %p768
      %p770 = scmp.ne.s32.totalorder %s756, %s757
      %p771 = scmp.eq.s32.totalorder %s71, 3
      %p772 = por %p770, %p771
      %p774 = scmp.ne.s32.totalorder %s757, %s773
      %p775 = scmp.eq.s32.totalorder %s71, 0
      %p776 = por %p774, %p775
      %p777 = scmp.le.s32.totalorder 1, %s65
      %p778 = scmp.lt.s32.totalorder %s65, 5
      %p779 = pnand %p777, %p778
      %p780 = pneg %p779
      // Predicated region
      $region9: #{decoder_forward.1} parent=5 // pred_check
        _
      $region10: #{decoder_forward.1} parent=5 // pred_check_branch
        %782 = sbr.rel (%p779) target = $region12
      $region11: #{decoder_forward.1} parent=5 // pred_region
        %s783 = ssub.s32 %s65, 1
        // Predicated region
        $region13: #{decoder_forward.1} parent=11 // pred_check
          %p784 = pneg %p722
        $region14: #{decoder_forward.1} parent=11 // pred_check_branch
          %786 = sbr.rel (%p784) target = $region16
        $region15: #{decoder_forward.1} parent=11 // pred_region
          _
        $region16: #{decoder_forward.1} parent=11 // pred_fallthru
          _
        // Predicated region
        $region17: #{decoder_forward.1} parent=11 // pred_check
          %p787 = pneg %p743
        $region18: #{decoder_forward.1} parent=11 // pred_check_branch
          %789 = sbr.rel (%p787) target = $region20
        $region19: #{decoder_forward.1} parent=11 // pred_region
          %s791 = ssub.s32 16, 16
          %792 = vsyncadd [#allocation31], %s791
          %s794 = sshll.u32 [#allocation32], 4
          %s795 = int_to_ptr.vmem [resolvable:$true] %s794
          %797 = dma.hbm_to_vmem [thread:$0]  %s25, 16, %s795, [#allocation31]
        $region20: #{decoder_forward.1} parent=11 // pred_fallthru
          _
      $region12: #{decoder_forward.1} parent=5 // pred_fallthru
        _
      %p798 = scmp.lt.s32.totalorder %s65, 4
      // Predicated region
      $region21: #{decoder_forward.1} parent=5 // pred_check
        %p799 = pneg %p798
      $region22: #{decoder_forward.1} parent=5 // pred_check_branch
        %801 = sbr.rel (%p799) target = $region24
      $region23: #{decoder_forward.1} parent=5 // pred_region
        // Predicated region
        $region25: #{decoder_forward.1} parent=23 // pred_check
          %p802 = pneg %p97
        $region26: #{decoder_forward.1} parent=23 // pred_check_branch
          %804 = sbr.rel (%p802) target = $region28
        $region27: #{decoder_forward.1} parent=23 // pred_region
          %p805 = scmp.lt.s32.totalorder %s72, 1
          %s806 = scalar_select %p805, %s72, 1
          %s807 = smul.addr %s806, 2
          %s808 = smul.addr %s807, 8
          %s809 = scalar_lea.vmem %s0, %s808
        $region28: #{decoder_forward.1} parent=23 // pred_fallthru
          _
        // Predicated region
        $region29: #{decoder_forward.1} parent=23 // pred_check
          %p810 = pneg %p123
        $region30: #{decoder_forward.1} parent=23 // pred_check_branch
          %812 = sbr.rel (%p810) target = $region32
        $region31: #{decoder_forward.1} parent=23 // pred_region
          %s813 = sand.u32 %s113, 1
          %s814 = scalar_lea.sflag [#allocation4], %s813
          %s815 = sand.u32 %s113, 1
          %s816 = smul.addr %s815, 16
          %s817 = scalar_lea.vmem [#allocation3], %s816
          %s819 = ssub.s32 256, 256
          %820 = vsyncadd %s814, %s819
          %s821 = smul.addr %s72, 2
          %s822 = smul.addr %s821, 128
          %s823 = scalar_lea.hbm %s1, %s822
          %s824 = sshll.u32 %s817, 4
          %s825 = int_to_ptr.vmem [resolvable:$true] %s824
          %830 = dma.hbm_to_vmem [thread:$0]  %s823, 256, %s825, %s814, 128, 128, 8
        $region32: #{decoder_forward.1} parent=23 // pred_fallthru
          _
        // Predicated region
        $region33: #{decoder_forward.1} parent=23 // pred_check
          %p831 = pneg %p149
        $region34: #{decoder_forward.1} parent=23 // pred_check_branch
          %833 = sbr.rel (%p831) target = $region36
        $region35: #{decoder_forward.1} parent=23 // pred_region
          %p834 = scmp.lt.s32.totalorder %s72, 1
          %s835 = scalar_select %p834, %s72, 1
          %s836 = smul.addr %s835, 2
          %s837 = smul.addr %s836, 8
          %s838 = scalar_lea.vmem %s2, %s837
        $region36: #{decoder_forward.1} parent=23 // pred_fallthru
          _
        // Predicated region
        $region37: #{decoder_forward.1} parent=23 // pred_check
          %p839 = pneg %p175
        $region38: #{decoder_forward.1} parent=23 // pred_check_branch
          %841 = sbr.rel (%p839) target = $region40
        $region39: #{decoder_forward.1} parent=23 // pred_region
          %p842 = scmp.lt.s32.totalorder %s72, 1
          %s843 = scalar_select %p842, %s72, 1
          %s844 = smul.addr %s843, 2
          %s845 = smul.addr %s844, 8
          %s846 = scalar_lea.vmem %s3, %s845
        $region40: #{decoder_forward.1} parent=23 // pred_fallthru
          _
        // Predicated region
        $region41: #{decoder_forward.1} parent=23 // pred_check
          %p847 = pneg %p201
        $region42: #{decoder_forward.1} parent=23 // pred_check_branch
          %849 = sbr.rel (%p847) target = $region44
        $region43: #{decoder_forward.1} parent=23 // pred_region
          %s850 = sand.u32 %s65, 1
          %s851 = scalar_lea.sflag [#allocation7], %s850
          %s852 = sand.u32 %s191, 1
          %s853 = scalar_lea.vmem [#allocation6], %s852
          %s855 = ssub.s32 16, 16
          %856 = vsyncadd %s851, %s855
          %s857 = smul.addr %s73, 16
          %s858 = scalar_lea.hbm %s4, %s857
          %s860 = sshll.u32 %s853, 4
          %s861 = int_to_ptr.vmem [resolvable:$true] %s860
          %863 = dma.hbm_to_vmem [thread:$0]  %s858, 16, %s861, %s851
        $region44: #{decoder_forward.1} parent=23 // pred_fallthru
          _
        // Predicated region
        $region45: #{decoder_forward.1} parent=23 // pred_check
          %p864 = pneg %p227
        $region46: #{decoder_forward.1} parent=23 // pred_check_branch
          %866 = sbr.rel (%p864) target = $region48
        $region47: #{decoder_forward.1} parent=23 // pred_region
          %s867 = sand.u32 %s65, 1
          %s868 = scalar_lea.sflag [#allocation7], %s867
          %s869 = sand.u32 %s217, 1
          %s870 = scalar_lea.vmem [#allocation8], %s869
          %s872 = ssub.s32 16, 16
          %873 = vsyncadd %s868, %s872
          %s874 = smul.addr %s73, 16
          %s875 = scalar_lea.hbm %s5, %s874
          %s877 = sshll.u32 %s870, 4
          %s878 = int_to_ptr.vmem [resolvable:$true] %s877
          %880 = dma.hbm_to_vmem [thread:$0]  %s875, 16, %s878, %s868
        $region48: #{decoder_forward.1} parent=23 // pred_fallthru
          _
        // Predicated region
        $region49: #{decoder_forward.1} parent=23 // pred_check
          %p881 = pneg %p253
        $region50: #{decoder_forward.1} parent=23 // pred_check_branch
          %883 = sbr.rel (%p881) target = $region52
        $region51: #{decoder_forward.1} parent=23 // pred_region
          %s884 = sand.u32 %s65, 1
          %s885 = scalar_lea.sflag [#allocation10], %s884
          %s886 = sand.u32 %s243, 1
          %s887 = smul.addr %s886, 192
          %s888 = scalar_lea.vmem [#allocation9], %s887
          %s890 = ssub.s32 3072, 3072
          %891 = vsyncadd %s885, %s890
          %s892 = smul.addr %s73, 48
          %s893 = smul.addr %s892, 64
          %s894 = scalar_lea.hbm %s6, %s893
          %s895 = sshll.u32 %s888, 4
          %s896 = int_to_ptr.vmem [resolvable:$true] %s895
          %901 = dma.hbm_to_vmem [thread:$0]  %s894, 3072, %s896, %s885, 192, 192, 12
        $region52: #{decoder_forward.1} parent=23 // pred_fallthru
          _
        // Predicated region
        $region53: #{decoder_forward.1} parent=23 // pred_check
          %p902 = pneg %p279
        $region54: #{decoder_forward.1} parent=23 // pred_check_branch
          %904 = sbr.rel (%p902) target = $region56
        $region55: #{decoder_forward.1} parent=23 // pred_region
          %p905 = scmp.lt.s32.totalorder %s73, 1
          %s906 = scalar_select %p905, %s73, 1
          %s907 = smul.addr %s906, 3
          %s908 = scalar_lea.vmem %s7, %s907
        $region56: #{decoder_forward.1} parent=23 // pred_fallthru
          _
        // Predicated region
        $region57: #{decoder_forward.1} parent=23 // pred_check
          %p909 = pneg %p305
        $region58: #{decoder_forward.1} parent=23 // pred_check_branch
          %911 = sbr.rel (%p909) target = $region60
        $region59: #{decoder_forward.1} parent=23 // pred_region
          %p912 = scmp.lt.s32.totalorder %s73, 1
          %s913 = scalar_select %p912, %s73, 1
          %s914 = smul.addr %s913, 16
          %s915 = smul.addr %s914, 4
          %s916 = scalar_lea.vmem %s8, %s915
        $region60: #{decoder_forward.1} parent=23 // pred_fallthru
          _
        // Predicated region
        $region61: #{decoder_forward.1} parent=23 // pred_check
          %p917 = pneg %p331
        $region62: #{decoder_forward.1} parent=23 // pred_check_branch
          %919 = sbr.rel (%p917) target = $region64
        $region63: #{decoder_forward.1} parent=23 // pred_region
          %s920 = sand.u32 %s65, 1
          %s921 = scalar_lea.sflag [#allocation10], %s920
          %s922 = sand.u32 %s321, 1
          %s923 = scalar_lea.vmem [#allocation11], %s922
          %s925 = ssub.s32 16, 16
          %926 = vsyncadd %s921, %s925
          %s927 = smul.addr %s73, 16
          %s928 = scalar_lea.hbm %s9, %s927
          %s930 = sshll.u32 %s923, 4
          %s931 = int_to_ptr.vmem [resolvable:$true] %s930
          %933 = dma.hbm_to_vmem [thread:$0]  %s928, 16, %s931, %s921
        $region64: #{decoder_forward.1} parent=23 // pred_fallthru
          _
        // Predicated region
        $region65: #{decoder_forward.1} parent=23 // pred_check
          %p934 = pneg %p357
        $region66: #{decoder_forward.1} parent=23 // pred_check_branch
          %936 = sbr.rel (%p934) target = $region68
        $region67: #{decoder_forward.1} parent=23 // pred_region
          %s937 = sand.u32 %s65, 1
          %s938 = scalar_lea.sflag [#allocation13], %s937
          %s939 = sand.u32 %s347, 1
          %s940 = scalar_lea.vmem [#allocation12], %s939
          %s942 = ssub.s32 16, 16
          %943 = vsyncadd %s938, %s942
          %s944 = smul.addr %s73, 16
          %s945 = scalar_lea.hbm %s10, %s944
          %s947 = sshll.u32 %s940, 4
          %s948 = int_to_ptr.vmem [resolvable:$true] %s947
          %950 = dma.hbm_to_vmem [thread:$0]  %s945, 16, %s948, %s938
        $region68: #{decoder_forward.1} parent=23 // pred_fallthru
          _
        // Predicated region
        $region69: #{decoder_forward.1} parent=23 // pred_check
          %p951 = pneg %p383
        $region70: #{decoder_forward.1} parent=23 // pred_check_branch
          %953 = sbr.rel (%p951) target = $region72
        $region71: #{decoder_forward.1} parent=23 // pred_region
          %s954 = sand.u32 %s65, 1
          %s955 = scalar_lea.sflag [#allocation13], %s954
          %s956 = sand.u32 %s373, 1
          %s957 = scalar_lea.vmem [#allocation14], %s956
          %s959 = ssub.s32 16, 16
          %960 = vsyncadd %s955, %s959
          %s961 = smul.addr %s73, 16
          %s962 = scalar_lea.hbm %s11, %s961
          %s964 = sshll.u32 %s957, 4
          %s965 = int_to_ptr.vmem [resolvable:$true] %s964
          %967 = dma.hbm_to_vmem [thread:$0]  %s962, 16, %s965, %s955
        $region72: #{decoder_forward.1} parent=23 // pred_fallthru
          _
        // Predicated region
        $region73: #{decoder_forward.1} parent=23 // pred_check
          %p968 = pneg %p409
        $region74: #{decoder_forward.1} parent=23 // pred_check_branch
          %970 = sbr.rel (%p968) target = $region76
        $region75: #{decoder_forward.1} parent=23 // pred_region
          %s971 = sand.u32 %s65, 1
          %s972 = scalar_lea.sflag [#allocation16], %s971
          %s973 = sand.u32 %s399, 1
          %s974 = smul.addr %s973, 64
          %s975 = scalar_lea.vmem [#allocation15], %s974
          %s977 = ssub.s32 1024, 1024
          %978 = vsyncadd %s972, %s977
          %s979 = smul.addr %s73, 16
          %s980 = smul.addr %s979, 64
          %s981 = scalar_lea.hbm %s12, %s980
          %s982 = sshll.u32 %s975, 4
          %s983 = int_to_ptr.vmem [resolvable:$true] %s982
          %988 = dma.hbm_to_vmem [thread:$0]  %s981, 1024, %s983, %s972, 64, 64, 4
        $region76: #{decoder_forward.1} parent=23 // pred_fallthru
          _
        // Predicated region
        $region77: #{decoder_forward.1} parent=23 // pred_check
          %p989 = pneg %p435
        $region78: #{decoder_forward.1} parent=23 // pred_check_branch
          %991 = sbr.rel (%p989) target = $region80
        $region79: #{decoder_forward.1} parent=23 // pred_region
          %s992 = sand.u32 %s65, 1
          %s993 = scalar_lea.sflag [#allocation16], %s992
          %s994 = sand.u32 %s425, 1
          %s995 = scalar_lea.vmem [#allocation17], %s994
          %s997 = ssub.s32 16, 16
          %998 = vsyncadd %s993, %s997
          %s999 = smul.addr %s73, 16
          %s1000 = scalar_lea.hbm %s13, %s999
          %s1002 = sshll.u32 %s995, 4
          %s1003 = int_to_ptr.vmem [resolvable:$true] %s1002
          %1005 = dma.hbm_to_vmem [thread:$0]  %s1000, 16, %s1003, %s993
        $region80: #{decoder_forward.1} parent=23 // pred_fallthru
          _
        // Predicated region
        $region81: #{decoder_forward.1} parent=23 // pred_check
          %p1006 = pneg %p461
        $region82: #{decoder_forward.1} parent=23 // pred_check_branch
          %1008 = sbr.rel (%p1006) target = $region84
        $region83: #{decoder_forward.1} parent=23 // pred_region
          %s1009 = sand.u32 %s65, 1
          %s1010 = scalar_lea.sflag [#allocation19], %s1009
          %s1011 = sand.u32 %s451, 1
          %s1012 = smul.addr %s1011, 128
          %s1013 = scalar_lea.vmem [#allocation18], %s1012
          %s1015 = ssub.s32 2048, 2048
          %1016 = vsyncadd %s1010, %s1015
          %s1017 = smul.addr %s73, 32
          %s1018 = smul.addr %s1017, 64
          %s1019 = scalar_lea.hbm %s14, %s1018
          %s1020 = sshll.u32 %s1013, 4
          %s1021 = int_to_ptr.vmem [resolvable:$true] %s1020
          %1026 = dma.hbm_to_vmem [thread:$0]  %s1019, 2048, %s1021, %s1010, 128, 128, 8
        $region84: #{decoder_forward.1} parent=23 // pred_fallthru
          _
        // Predicated region
        $region85: #{decoder_forward.1} parent=23 // pred_check
          %p1027 = pneg %p487
        $region86: #{decoder_forward.1} parent=23 // pred_check_branch
          %1029 = sbr.rel (%p1027) target = $region88
        $region87: #{decoder_forward.1} parent=23 // pred_region
          %p1030 = scmp.lt.s32.totalorder %s73, 1
          %s1031 = scalar_select %p1030, %s73, 1
          %s1032 = smul.addr %s1031, 2
          %s1033 = scalar_lea.vmem %s15, %s1032
        $region88: #{decoder_forward.1} parent=23 // pred_fallthru
          _
        // Predicated region
        $region89: #{decoder_forward.1} parent=23 // pred_check
          %p1034 = pneg %p513
        $region90: #{decoder_forward.1} parent=23 // pred_check_branch
          %1036 = sbr.rel (%p1034) target = $region92
        $region91: #{decoder_forward.1} parent=23 // pred_region
          %s1037 = sand.u32 %s65, 1
          %s1038 = scalar_lea.sflag [#allocation19], %s1037
          %s1039 = sand.u32 %s503, 1
          %s1040 = smul.addr %s1039, 64
          %s1041 = scalar_lea.vmem [#allocation20], %s1040
          %s1043 = ssub.s32 1024, 1024
          %1044 = vsyncadd %s1038, %s1043
          %s1045 = smul.addr %s73, 16
          %s1046 = smul.addr %s1045, 64
          %s1047 = scalar_lea.hbm %s16, %s1046
          %s1048 = sshll.u32 %s1041, 4
          %s1049 = int_to_ptr.vmem [resolvable:$true] %s1048
          %1054 = dma.hbm_to_vmem [thread:$0]  %s1047, 1024, %s1049, %s1038, 64, 64, 4
        $region92: #{decoder_forward.1} parent=23 // pred_fallthru
          _
        // Predicated region
        $region93: #{decoder_forward.1} parent=23 // pred_check
          %p1055 = pneg %p539
        $region94: #{decoder_forward.1} parent=23 // pred_check_branch
          %1057 = sbr.rel (%p1055) target = $region96
        $region95: #{decoder_forward.1} parent=23 // pred_region
          %s1058 = sand.u32 %s65, 1
          %s1059 = scalar_lea.sflag [#allocation22], %s1058
          %s1060 = sand.u32 %s529, 1
          %s1061 = scalar_lea.vmem [#allocation21], %s1060
          %s1063 = ssub.s32 16, 16
          %1064 = vsyncadd %s1059, %s1063
          %s1065 = smul.addr %s73, 16
          %s1066 = scalar_lea.hbm %s17, %s1065
          %s1068 = sshll.u32 %s1061, 4
          %s1069 = int_to_ptr.vmem [resolvable:$true] %s1068
          %1071 = dma.hbm_to_vmem [thread:$0]  %s1066, 16, %s1069, %s1059
        $region96: #{decoder_forward.1} parent=23 // pred_fallthru
          _
        // Predicated region
        $region97: #{decoder_forward.1} parent=23 // pred_check
          %p1072 = pneg %p565
        $region98: #{decoder_forward.1} parent=23 // pred_check_branch
          %1074 = sbr.rel (%p1072) target = $region100
        $region99: #{decoder_forward.1} parent=23 // pred_region
          %s1075 = sand.u32 %s65, 1
          %s1076 = scalar_lea.sflag [#allocation22], %s1075
          %s1077 = sand.u32 %s555, 1
          %s1078 = scalar_lea.vmem [#allocation23], %s1077
          %s1080 = ssub.s32 16, 16
          %1081 = vsyncadd %s1076, %s1080
          %s1082 = smul.addr %s73, 16
          %s1083 = scalar_lea.hbm %s18, %s1082
          %s1085 = sshll.u32 %s1078, 4
          %s1086 = int_to_ptr.vmem [resolvable:$true] %s1085
          %1088 = dma.hbm_to_vmem [thread:$0]  %s1083, 16, %s1086, %s1076
        $region100: #{decoder_forward.1} parent=23 // pred_fallthru
          _
        // Predicated region
        $region101: #{decoder_forward.1} parent=23 // pred_check
          %p1089 = pneg %p591
        $region102: #{decoder_forward.1} parent=23 // pred_check_branch
          %1091 = sbr.rel (%p1089) target = $region104
        $region103: #{decoder_forward.1} parent=23 // pred_region
          %s1092 = sand.u32 %s65, 1
          %s1093 = scalar_lea.sflag [#allocation25], %s1092
          %s1094 = sand.u32 %s581, 1
          %s1095 = scalar_lea.vmem [#allocation24], %s1094
          %s1097 = ssub.s32 16, 16
          %1098 = vsyncadd %s1093, %s1097
          %s1099 = smul.addr %s73, 16
          %s1100 = scalar_lea.hbm %s19, %s1099
          %s1102 = sshll.u32 %s1095, 4
          %s1103 = int_to_ptr.vmem [resolvable:$true] %s1102
          %1105 = dma.hbm_to_vmem [thread:$0]  %s1100, 16, %s1103, %s1093
        $region104: #{decoder_forward.1} parent=23 // pred_fallthru
          _
        // Predicated region
        $region105: #{decoder_forward.1} parent=23 // pred_check
          %p1106 = pneg %p617
        $region106: #{decoder_forward.1} parent=23 // pred_check_branch
          %1108 = sbr.rel (%p1106) target = $region108
        $region107: #{decoder_forward.1} parent=23 // pred_region
          %s1109 = sand.u32 %s65, 1
          %s1110 = scalar_lea.sflag [#allocation25], %s1109
          %s1111 = sand.u32 %s607, 1
          %s1112 = smul.addr %s1111, 128
          %s1113 = scalar_lea.vmem [#allocation26], %s1112
          %s1115 = ssub.s32 2048, 2048
          %1116 = vsyncadd %s1110, %s1115
          %s1117 = smul.addr %s73, 32
          %s1118 = smul.addr %s1117, 64
          %s1119 = scalar_lea.hbm %s20, %s1118
          %s1120 = sshll.u32 %s1113, 4
          %s1121 = int_to_ptr.vmem [resolvable:$true] %s1120
          %1126 = dma.hbm_to_vmem [thread:$0]  %s1119, 2048, %s1121, %s1110, 128, 128, 8
        $region108: #{decoder_forward.1} parent=23 // pred_fallthru
          _
        // Predicated region
        $region109: #{decoder_forward.1} parent=23 // pred_check
          %p1127 = pneg %p643
        $region110: #{decoder_forward.1} parent=23 // pred_check_branch
          %1129 = sbr.rel (%p1127) target = $region112
        $region111: #{decoder_forward.1} parent=23 // pred_region
          %s1130 = sand.u32 %s65, 1
          %s1131 = scalar_lea.sflag [#allocation28], %s1130
          %s1132 = sand.u32 %s633, 1
          %s1133 = smul.addr %s1132, 2
          %s1134 = scalar_lea.vmem [#allocation27], %s1133
          %s1136 = ssub.s32 32, 32
          %1137 = vsyncadd %s1131, %s1136
          %s1138 = smul.addr %s73, 2
          %s1139 = smul.addr %s1138, 16
          %s1140 = scalar_lea.hbm %s21, %s1139
          %s1142 = sshll.u32 %s1134, 4
          %s1143 = int_to_ptr.vmem [resolvable:$true] %s1142
          %1145 = dma.hbm_to_vmem [thread:$0]  %s1140, 32, %s1143, %s1131
        $region112: #{decoder_forward.1} parent=23 // pred_fallthru
          _
        // Predicated region
        $region113: #{decoder_forward.1} parent=23 // pred_check
          %p1146 = pneg %p669
        $region114: #{decoder_forward.1} parent=23 // pred_check_branch
          %1148 = sbr.rel (%p1146) target = $region116
        $region115: #{decoder_forward.1} parent=23 // pred_region
          %s1149 = sand.u32 %s65, 1
          %s1150 = scalar_lea.sflag [#allocation28], %s1149
          %s1151 = sand.u32 %s659, 1
          %s1152 = smul.addr %s1151, 128
          %s1153 = scalar_lea.vmem [#allocation29], %s1152
          %s1155 = ssub.s32 2048, 2048
          %1156 = vsyncadd %s1150, %s1155
          %s1157 = smul.addr %s73, 32
          %s1158 = smul.addr %s1157, 64
          %s1159 = scalar_lea.hbm %s22, %s1158
          %s1160 = sshll.u32 %s1153, 4
          %s1161 = int_to_ptr.vmem [resolvable:$true] %s1160
          %1166 = dma.hbm_to_vmem [thread:$0]  %s1159, 2048, %s1161, %s1150, 64, 64, 4
        $region116: #{decoder_forward.1} parent=23 // pred_fallthru
          _
        // Predicated region
        $region117: #{decoder_forward.1} parent=23 // pred_check
          %p1167 = pneg %p695
        $region118: #{decoder_forward.1} parent=23 // pred_check_branch
          %1169 = sbr.rel (%p1167) target = $region120
        $region119: #{decoder_forward.1} parent=23 // pred_region
          %s1170 = sand.u32 %s65, 1
          %s1171 = scalar_lea.sflag [#allocation31], %s1170
          %s1172 = sand.u32 %s685, 1
          %s1173 = scalar_lea.vmem [#allocation30], %s1172
          %s1175 = ssub.s32 16, 16
          %1176 = vsyncadd %s1171, %s1175
          %s1177 = smul.addr %s73, 16
          %s1178 = scalar_lea.hbm %s23, %s1177
          %s1180 = sshll.u32 %s1173, 4
          %s1181 = int_to_ptr.vmem [resolvable:$true] %s1180
          %1183 = dma.hbm_to_vmem [thread:$0]  %s1178, 16, %s1181, %s1171
        $region120: #{decoder_forward.1} parent=23 // pred_fallthru
          _
      $region24: #{decoder_forward.1} parent=5 // pred_fallthru
        _
      %p1184 = scmp.le.s32.totalorder 1, %s65
      %p1185 = scmp.lt.s32.totalorder %s65, 5
      %p1186 = pnand %p1184, %p1185
      %p1187 = pneg %p1186
      // Predicated region
      $region121: #{decoder_forward.1} parent=5 // pred_check
        _
      $region122: #{decoder_forward.1} parent=5 // pred_check_branch
        %1189 = sbr.rel (%p1186) target = $region124
      $region123: #{decoder_forward.1} parent=5 // pred_region
        %s1190 = ssub.s32 %s65, 1
        %s1191 = sand.u32 %s116, 1
        %s1192 = scalar_lea.sflag [#allocation4], %s1191
        %s1193 = sand.u32 %s116, 1
        %s1194 = smul.addr %s1193, 16
        %s1195 = scalar_lea.vmem [#allocation3], %s1194
        // Predicated region
        $region125: #{decoder_forward.1} parent=123 // pred_check
          %p1196 = pneg %p129
        $region126: #{decoder_forward.1} parent=123 // pred_check_branch
          %1198 = sbr.rel (%p1196) target = $region128
        $region127: #{decoder_forward.1} parent=123 // pred_region
          %1199 = dma.done %s1192, 256
        $region128: #{decoder_forward.1} parent=123 // pred_fallthru
          _
        %s1200 = sand.u32 %s70, 1
        %s1201 = scalar_lea.sflag [#allocation7], %s1200
        %s1202 = sand.u32 %s194, 1
        %s1203 = scalar_lea.vmem [#allocation6], %s1202
        // Predicated region
        $region129: #{decoder_forward.1} parent=123 // pred_check
          %p1204 = pneg %p207
        $region130: #{decoder_forward.1} parent=123 // pred_check_branch
          %1206 = sbr.rel (%p1204) target = $region132
        $region131: #{decoder_forward.1} parent=123 // pred_region
          %1207 = dma.done %s1201, 16
        $region132: #{decoder_forward.1} parent=123 // pred_fallthru
          _
        %s1208 = sand.u32 %s70, 1
        %s1209 = scalar_lea.sflag [#allocation7], %s1208
        %s1210 = sand.u32 %s220, 1
        %s1211 = scalar_lea.vmem [#allocation8], %s1210
        // Predicated region
        $region133: #{decoder_forward.1} parent=123 // pred_check
          %p1212 = pneg %p233
        $region134: #{decoder_forward.1} parent=123 // pred_check_branch
          %1214 = sbr.rel (%p1212) target = $region136
        $region135: #{decoder_forward.1} parent=123 // pred_region
          %1215 = dma.done %s1209, 16
        $region136: #{decoder_forward.1} parent=123 // pred_fallthru
          _
        %s1216 = sand.u32 %s70, 1
        %s1217 = scalar_lea.sflag [#allocation10], %s1216
        %s1218 = sand.u32 %s246, 1
        %s1219 = smul.addr %s1218, 192
        %s1220 = scalar_lea.vmem [#allocation9], %s1219
        // Predicated region
        $region137: #{decoder_forward.1} parent=123 // pred_check
          %p1221 = pneg %p259
        $region138: #{decoder_forward.1} parent=123 // pred_check_branch
          %1223 = sbr.rel (%p1221) target = $region140
        $region139: #{decoder_forward.1} parent=123 // pred_region
          %1224 = dma.done %s1217, 3072
        $region140: #{decoder_forward.1} parent=123 // pred_fallthru
          _
        %s1225 = sand.u32 %s70, 1
        %s1226 = scalar_lea.sflag [#allocation10], %s1225
        %s1227 = sand.u32 %s324, 1
        %s1228 = scalar_lea.vmem [#allocation11], %s1227
        // Predicated region
        $region141: #{decoder_forward.1} parent=123 // pred_check
          %p1229 = pneg %p337
        $region142: #{decoder_forward.1} parent=123 // pred_check_branch
          %1231 = sbr.rel (%p1229) target = $region144
        $region143: #{decoder_forward.1} parent=123 // pred_region
          %1232 = dma.done %s1226, 16
        $region144: #{decoder_forward.1} parent=123 // pred_fallthru
          _
        %s1233 = sand.u32 %s70, 1
        %s1234 = scalar_lea.sflag [#allocation13], %s1233
        %s1235 = sand.u32 %s350, 1
        %s1236 = scalar_lea.vmem [#allocation12], %s1235
        // Predicated region
        $region145: #{decoder_forward.1} parent=123 // pred_check
          %p1237 = pneg %p363
        $region146: #{decoder_forward.1} parent=123 // pred_check_branch
          %1239 = sbr.rel (%p1237) target = $region148
        $region147: #{decoder_forward.1} parent=123 // pred_region
          %1240 = dma.done %s1234, 16
        $region148: #{decoder_forward.1} parent=123 // pred_fallthru
          _
        %s1241 = sand.u32 %s70, 1
        %s1242 = scalar_lea.sflag [#allocation13], %s1241
        %s1243 = sand.u32 %s376, 1
        %s1244 = scalar_lea.vmem [#allocation14], %s1243
        // Predicated region
        $region149: #{decoder_forward.1} parent=123 // pred_check
          %p1245 = pneg %p389
        $region150: #{decoder_forward.1} parent=123 // pred_check_branch
          %1247 = sbr.rel (%p1245) target = $region152
        $region151: #{decoder_forward.1} parent=123 // pred_region
          %1248 = dma.done %s1242, 16
        $region152: #{decoder_forward.1} parent=123 // pred_fallthru
          _
        %s1249 = sand.u32 %s70, 1
        %s1250 = scalar_lea.sflag [#allocation16], %s1249
        %s1251 = sand.u32 %s402, 1
        %s1252 = smul.addr %s1251, 64
        %s1253 = scalar_lea.vmem [#allocation15], %s1252
        // Predicated region
        $region153: #{decoder_forward.1} parent=123 // pred_check
          %p1254 = pneg %p415
        $region154: #{decoder_forward.1} parent=123 // pred_check_branch
          %1256 = sbr.rel (%p1254) target = $region156
        $region155: #{decoder_forward.1} parent=123 // pred_region
          %1257 = dma.done %s1250, 1024
        $region156: #{decoder_forward.1} parent=123 // pred_fallthru
          _
        %s1258 = sand.u32 %s70, 1
        %s1259 = scalar_lea.sflag [#allocation16], %s1258
        %s1260 = sand.u32 %s428, 1
        %s1261 = scalar_lea.vmem [#allocation17], %s1260
        // Predicated region
        $region157: #{decoder_forward.1} parent=123 // pred_check
          %p1262 = pneg %p441
        $region158: #{decoder_forward.1} parent=123 // pred_check_branch
          %1264 = sbr.rel (%p1262) target = $region160
        $region159: #{decoder_forward.1} parent=123 // pred_region
          %1265 = dma.done %s1259, 16
        $region160: #{decoder_forward.1} parent=123 // pred_fallthru
          _
        %s1266 = sand.u32 %s70, 1
        %s1267 = scalar_lea.sflag [#allocation19], %s1266
        %s1268 = sand.u32 %s454, 1
        %s1269 = smul.addr %s1268, 128
        %s1270 = scalar_lea.vmem [#allocation18], %s1269
        // Predicated region
        $region161: #{decoder_forward.1} parent=123 // pred_check
          %p1271 = pneg %p467
        $region162: #{decoder_forward.1} parent=123 // pred_check_branch
          %1273 = sbr.rel (%p1271) target = $region164
        $region163: #{decoder_forward.1} parent=123 // pred_region
          %1274 = dma.done %s1267, 2048
        $region164: #{decoder_forward.1} parent=123 // pred_fallthru
          _
        %s1275 = sand.u32 %s70, 1
        %s1276 = scalar_lea.sflag [#allocation19], %s1275
        %s1277 = sand.u32 %s506, 1
        %s1278 = smul.addr %s1277, 64
        %s1279 = scalar_lea.vmem [#allocation20], %s1278
        // Predicated region
        $region165: #{decoder_forward.1} parent=123 // pred_check
          %p1280 = pneg %p519
        $region166: #{decoder_forward.1} parent=123 // pred_check_branch
          %1282 = sbr.rel (%p1280) target = $region168
        $region167: #{decoder_forward.1} parent=123 // pred_region
          %1283 = dma.done %s1276, 1024
        $region168: #{decoder_forward.1} parent=123 // pred_fallthru
          _
        %s1284 = sand.u32 %s70, 1
        %s1285 = scalar_lea.sflag [#allocation22], %s1284
        %s1286 = sand.u32 %s532, 1
        %s1287 = scalar_lea.vmem [#allocation21], %s1286
        // Predicated region
        $region169: #{decoder_forward.1} parent=123 // pred_check
          %p1288 = pneg %p545
        $region170: #{decoder_forward.1} parent=123 // pred_check_branch
          %1290 = sbr.rel (%p1288) target = $region172
        $region171: #{decoder_forward.1} parent=123 // pred_region
          %1291 = dma.done %s1285, 16
        $region172: #{decoder_forward.1} parent=123 // pred_fallthru
          _
        %s1292 = sand.u32 %s70, 1
        %s1293 = scalar_lea.sflag [#allocation22], %s1292
        %s1294 = sand.u32 %s558, 1
        %s1295 = scalar_lea.vmem [#allocation23], %s1294
        // Predicated region
        $region173: #{decoder_forward.1} parent=123 // pred_check
          %p1296 = pneg %p571
        $region174: #{decoder_forward.1} parent=123 // pred_check_branch
          %1298 = sbr.rel (%p1296) target = $region176
        $region175: #{decoder_forward.1} parent=123 // pred_region
          %1299 = dma.done %s1293, 16
        $region176: #{decoder_forward.1} parent=123 // pred_fallthru
          _
        %s1300 = sand.u32 %s70, 1
        %s1301 = scalar_lea.sflag [#allocation25], %s1300
        %s1302 = sand.u32 %s584, 1
        %s1303 = scalar_lea.vmem [#allocation24], %s1302
        // Predicated region
        $region177: #{decoder_forward.1} parent=123 // pred_check
          %p1304 = pneg %p597
        $region178: #{decoder_forward.1} parent=123 // pred_check_branch
          %1306 = sbr.rel (%p1304) target = $region180
        $region179: #{decoder_forward.1} parent=123 // pred_region
          %1307 = dma.done %s1301, 16
        $region180: #{decoder_forward.1} parent=123 // pred_fallthru
          _
        %s1308 = sand.u32 %s70, 1
        %s1309 = scalar_lea.sflag [#allocation25], %s1308
        %s1310 = sand.u32 %s610, 1
        %s1311 = smul.addr %s1310, 128
        %s1312 = scalar_lea.vmem [#allocation26], %s1311
        // Predicated region
        $region181: #{decoder_forward.1} parent=123 // pred_check
          %p1313 = pneg %p623
        $region182: #{decoder_forward.1} parent=123 // pred_check_branch
          %1315 = sbr.rel (%p1313) target = $region184
        $region183: #{decoder_forward.1} parent=123 // pred_region
          %1316 = dma.done %s1309, 2048
        $region184: #{decoder_forward.1} parent=123 // pred_fallthru
          _
        %s1317 = sand.u32 %s70, 1
        %s1318 = scalar_lea.sflag [#allocation28], %s1317
        %s1319 = sand.u32 %s636, 1
        %s1320 = smul.addr %s1319, 2
        %s1321 = scalar_lea.vmem [#allocation27], %s1320
        // Predicated region
        $region185: #{decoder_forward.1} parent=123 // pred_check
          %p1322 = pneg %p649
        $region186: #{decoder_forward.1} parent=123 // pred_check_branch
          %1324 = sbr.rel (%p1322) target = $region188
        $region187: #{decoder_forward.1} parent=123 // pred_region
          %1325 = dma.done %s1318, 32
        $region188: #{decoder_forward.1} parent=123 // pred_fallthru
          _
        %s1326 = sand.u32 %s70, 1
        %s1327 = scalar_lea.sflag [#allocation28], %s1326
        %s1328 = sand.u32 %s662, 1
        %s1329 = smul.addr %s1328, 128
        %s1330 = scalar_lea.vmem [#allocation29], %s1329
        // Predicated region
        $region189: #{decoder_forward.1} parent=123 // pred_check
          %p1331 = pneg %p675
        $region190: #{decoder_forward.1} parent=123 // pred_check_branch
          %1333 = sbr.rel (%p1331) target = $region192
        $region191: #{decoder_forward.1} parent=123 // pred_region
          %1334 = dma.done %s1327, 2048
        $region192: #{decoder_forward.1} parent=123 // pred_fallthru
          _
        %s1335 = sand.u32 %s70, 1
        %s1336 = scalar_lea.sflag [#allocation31], %s1335
        %s1337 = sand.u32 %s688, 1
        %s1338 = scalar_lea.vmem [#allocation30], %s1337
        // Predicated region
        $region193: #{decoder_forward.1} parent=123 // pred_check
          %p1339 = pneg %p701
        $region194: #{decoder_forward.1} parent=123 // pred_check_branch
          %1341 = sbr.rel (%p1339) target = $region196
        $region195: #{decoder_forward.1} parent=123 // pred_region
          %1342 = dma.done %s1336, 16
        $region196: #{decoder_forward.1} parent=123 // pred_fallthru
          _
        // Predicated region
        $region197: #{decoder_forward.1} parent=123 // pred_check
          %p1343 = pneg %p743
        $region198: #{decoder_forward.1} parent=123 // pred_check_branch
          %1345 = sbr.rel (%p1343) target = $region200
        $region199: #{decoder_forward.1} parent=123 // pred_region
          %1346 = dma.done [#allocation31], 16
        $region200: #{decoder_forward.1} parent=123 // pred_fallthru
          _
        %p1347 = scmp.lt.s32.totalorder %s74, 1
        %s1348 = scalar_select %p1347, %s74, 1
        %s1349 = smul.addr %s1348, 2
        %s1350 = smul.addr %s1349, 8
        %s1351 = scalar_lea.vmem %s0, %s1350
        %p1352 = pneg %p103
        %p1353 = pneg %p100
        %s1354 = sand.u32 %s116, 1
        %s1355 = scalar_lea.sflag [#allocation4], %s1354
        %s1356 = sand.u32 %s116, 1
        %s1357 = smul.addr %s1356, 16
        %s1358 = scalar_lea.vmem [#allocation3], %s1357
        %p1359 = pneg %p129
        %p1360 = pneg %p126
        %p1361 = scmp.lt.s32.totalorder %s74, 1
        %s1362 = scalar_select %p1361, %s74, 1
        %s1363 = smul.addr %s1362, 2
        %s1364 = smul.addr %s1363, 8
        %s1365 = scalar_lea.vmem %s2, %s1364
        %p1366 = pneg %p155
        %p1367 = pneg %p152
        %p1368 = scmp.lt.s32.totalorder %s74, 1
        %s1369 = scalar_select %p1368, %s74, 1
        %s1370 = smul.addr %s1369, 2
        %s1371 = smul.addr %s1370, 8
        %s1372 = scalar_lea.vmem %s3, %s1371
        %p1373 = pneg %p181
        %p1374 = pneg %p178
        %s1375 = sand.u32 %s70, 1
        %s1376 = scalar_lea.sflag [#allocation7], %s1375
        %s1377 = sand.u32 %s194, 1
        %s1378 = scalar_lea.vmem [#allocation6], %s1377
        %p1379 = pneg %p207
        %p1380 = pneg %p204
        %s1381 = sand.u32 %s70, 1
        %s1382 = scalar_lea.sflag [#allocation7], %s1381
        %s1383 = sand.u32 %s220, 1
        %s1384 = scalar_lea.vmem [#allocation8], %s1383
        %p1385 = pneg %p233
        %p1386 = pneg %p230
        %s1387 = sand.u32 %s70, 1
        %s1388 = scalar_lea.sflag [#allocation10], %s1387
        %s1389 = sand.u32 %s246, 1
        %s1390 = smul.addr %s1389, 192
        %s1391 = scalar_lea.vmem [#allocation9], %s1390
        %p1392 = pneg %p259
        %p1393 = pneg %p256
        %p1394 = scmp.lt.s32.totalorder %s75, 1
        %s1395 = scalar_select %p1394, %s75, 1
        %s1396 = smul.addr %s1395, 3
        %s1397 = scalar_lea.vmem %s7, %s1396
        %p1398 = pneg %p285
        %p1399 = pneg %p282
        %p1400 = scmp.lt.s32.totalorder %s75, 1
        %s1401 = scalar_select %p1400, %s75, 1
        %s1402 = smul.addr %s1401, 16
        %s1403 = smul.addr %s1402, 4
        %s1404 = scalar_lea.vmem %s8, %s1403
        %p1405 = pneg %p311
        %p1406 = pneg %p308
        %s1407 = sand.u32 %s70, 1
        %s1408 = scalar_lea.sflag [#allocation10], %s1407
        %s1409 = sand.u32 %s324, 1
        %s1410 = scalar_lea.vmem [#allocation11], %s1409
        %p1411 = pneg %p337
        %p1412 = pneg %p334
        %s1413 = sand.u32 %s70, 1
        %s1414 = scalar_lea.sflag [#allocation13], %s1413
        %s1415 = sand.u32 %s350, 1
        %s1416 = scalar_lea.vmem [#allocation12], %s1415
        %p1417 = pneg %p363
        %p1418 = pneg %p360
        %s1419 = sand.u32 %s70, 1
        %s1420 = scalar_lea.sflag [#allocation13], %s1419
        %s1421 = sand.u32 %s376, 1
        %s1422 = scalar_lea.vmem [#allocation14], %s1421
        %p1423 = pneg %p389
        %p1424 = pneg %p386
        %s1425 = sand.u32 %s70, 1
        %s1426 = scalar_lea.sflag [#allocation16], %s1425
        %s1427 = sand.u32 %s402, 1
        %s1428 = smul.addr %s1427, 64
        %s1429 = scalar_lea.vmem [#allocation15], %s1428
        %p1430 = pneg %p415
        %p1431 = pneg %p412
        %s1432 = sand.u32 %s70, 1
        %s1433 = scalar_lea.sflag [#allocation16], %s1432
        %s1434 = sand.u32 %s428, 1
        %s1435 = scalar_lea.vmem [#allocation17], %s1434
        %p1436 = pneg %p441
        %p1437 = pneg %p438
        %s1438 = sand.u32 %s70, 1
        %s1439 = scalar_lea.sflag [#allocation19], %s1438
        %s1440 = sand.u32 %s454, 1
        %s1441 = smul.addr %s1440, 128
        %s1442 = scalar_lea.vmem [#allocation18], %s1441
        %p1443 = pneg %p467
        %p1444 = pneg %p464
        %p1445 = scmp.lt.s32.totalorder %s75, 1
        %s1446 = scalar_select %p1445, %s75, 1
        %s1447 = smul.addr %s1446, 2
        %s1448 = scalar_lea.vmem %s15, %s1447
        %p1449 = pneg %p493
        %p1450 = pneg %p490
        %s1451 = sand.u32 %s70, 1
        %s1452 = scalar_lea.sflag [#allocation19], %s1451
        %s1453 = sand.u32 %s506, 1
        %s1454 = smul.addr %s1453, 64
        %s1455 = scalar_lea.vmem [#allocation20], %s1454
        %p1456 = pneg %p519
        %p1457 = pneg %p516
        %s1458 = sand.u32 %s70, 1
        %s1459 = scalar_lea.sflag [#allocation22], %s1458
        %s1460 = sand.u32 %s532, 1
        %s1461 = scalar_lea.vmem [#allocation21], %s1460
        %p1462 = pneg %p545
        %p1463 = pneg %p542
        %s1464 = sand.u32 %s70, 1
        %s1465 = scalar_lea.sflag [#allocation22], %s1464
        %s1466 = sand.u32 %s558, 1
        %s1467 = scalar_lea.vmem [#allocation23], %s1466
        %p1468 = pneg %p571
        %p1469 = pneg %p568
        %s1470 = sand.u32 %s70, 1
        %s1471 = scalar_lea.sflag [#allocation25], %s1470
        %s1472 = sand.u32 %s584, 1
        %s1473 = scalar_lea.vmem [#allocation24], %s1472
        %p1474 = pneg %p597
        %p1475 = pneg %p594
        %s1476 = sand.u32 %s70, 1
        %s1477 = scalar_lea.sflag [#allocation25], %s1476
        %s1478 = sand.u32 %s610, 1
        %s1479 = smul.addr %s1478, 128
        %s1480 = scalar_lea.vmem [#allocation26], %s1479
        %p1481 = pneg %p623
        %p1482 = pneg %p620
        %s1483 = sand.u32 %s70, 1
        %s1484 = scalar_lea.sflag [#allocation28], %s1483
        %s1485 = sand.u32 %s636, 1
        %s1486 = smul.addr %s1485, 2
        %s1487 = scalar_lea.vmem [#allocation27], %s1486
        %p1488 = pneg %p649
        %p1489 = pneg %p646
        %s1490 = sand.u32 %s70, 1
        %s1491 = scalar_lea.sflag [#allocation28], %s1490
        %s1492 = sand.u32 %s662, 1
        %s1493 = smul.addr %s1492, 128
        %s1494 = scalar_lea.vmem [#allocation29], %s1493
        %p1495 = pneg %p675
        %p1496 = pneg %p672
        %s1497 = sand.u32 %s70, 1
        %s1498 = scalar_lea.sflag [#allocation31], %s1497
        %s1499 = sand.u32 %s688, 1
        %s1500 = scalar_lea.vmem [#allocation30], %s1499
        %p1501 = pneg %p701
        %p1502 = pneg %p698
        %p1503 = pneg %p722
        %p1504 = pneg %p719
        %p1505 = pneg %p743
        %p1506 = pneg %p740
        %p1507 = pneg %p769
        %p1508 = pneg %p766
        %s1509 = sand.u32 %s756, 1
        %s1510 = scalar_lea.sflag [#allocation5], %s1509
        %s1511 = sand.u32 %s756, 1
        %s1512 = smul.addr %s1511, 16
        %s1513 = scalar_lea.vmem [#allocation33], %s1512
        %p1514 = scmp.lt.s32.totalorder %s74, 1
        %s1515 = scalar_select %p1514, %s74, 1
        %s1516 = smul.addr %s1515, 2
        %s1517 = smul.addr %s1516, 8
        %s1518 = scalar_lea.vmem %s0, %s1517
        %p1519 = scmp.lt.s32.totalorder %s74, 1
        %s1520 = scalar_select %p1519, %s74, 1
        %s1521 = smul.addr %s1520, 2
        %s1522 = smul.addr %s1521, 8
        %s1523 = scalar_lea.vmem %s2, %s1522
        %p1524 = scmp.lt.s32.totalorder %s74, 1
        %s1525 = scalar_select %p1524, %s74, 1
        %s1526 = smul.addr %s1525, 2
        %s1527 = smul.addr %s1526, 8
        %s1528 = scalar_lea.vmem %s3, %s1527
        %p1529 = scmp.lt.s32.totalorder %s75, 1
        %s1530 = scalar_select %p1529, %s75, 1
        %s1531 = smul.addr %s1530, 3
        %s1532 = scalar_lea.vmem %s7, %s1531
        %p1533 = scmp.lt.s32.totalorder %s75, 1
        %s1534 = scalar_select %p1533, %s75, 1
        %s1535 = smul.addr %s1534, 16
        %s1536 = smul.addr %s1535, 4
        %s1537 = scalar_lea.vmem %s8, %s1536
        %p1538 = scmp.lt.s32.totalorder %s75, 1
        %s1539 = scalar_select %p1538, %s75, 1
        %s1540 = smul.addr %s1539, 2
        %s1541 = scalar_lea.vmem %s15, %s1540
        %p1543 = scmp.eq.s32.totalorder %s75, 0
        // Predicated region
        $region201: #{decoder_forward.1} parent=123 // pred_check
          %p1544 = pneg %p1543
        $region202: #{decoder_forward.1} parent=123 // pred_check_branch
          %1546 = sbr.rel (%p1544) target = $region204
        $region203: #{decoder_forward.1} parent=123 // pred_region
          %v1547 = vld [vmem:[%s1518] sm:$0xff]
          %v1548 = vld [vmem:[%s1518 + $0x8] sm:$0xff]
          %1549 = vst [vmem:[#allocation2] sm:$0xff] %v1547
          %1550 = vst [vmem:[#allocation2 + $0x8] sm:$0xff] %v1548
        $region204: #{decoder_forward.1} parent=123 // pred_fallthru
          _
        %v1551 = vld [vmem:[#allocation2] sm:$0xff]
        %v1552 = vld [vmem:[#allocation2 + $0x8] sm:$0xff]
        %v1553 = vld [vmem:[%s1195] sm:$0xff]
        %v1554 = vld [vmem:[%s1195 + $0x8] sm:$0xff]
        %v1555 = vld [vmem:[%s1523] sm:$0xff]
        %v1556 = vld [vmem:[%s1523 + $0x8] sm:$0xff]
        %v1557 = vld [vmem:[%s1528] sm:$0xff]
        %v1558 = vld [vmem:[%s1528 + $0x8] sm:$0xff]
        %v1559 = vld [vmem:[%s1203] sm:$0x1]
        %v1560 = vld [vmem:[%s1211] sm:$0x1]
        %1561 = vadd.xlane.f32.xlu0 %v1551
        %v1562 = vpop.xlane.xlu0 %1561
        %1563 = vadd.xlane.f32.xlu0 %v1552
        %v1564 = vpop.xlane.xlu0 %1563
        %v1565 = vrcp.pop 128.0
        %v1566 = vmul.f32 %v1562, %v1565
        %v1567 = vmul.f32 %v1564, %v1565
        %v1568 = vsub.f32 %v1551, %v1566
        %v1569 = vsub.f32 %v1552, %v1567
        %v1570 = vmul.f32 %v1568, %v1568
        %v1571 = vmul.f32 %v1569, %v1569
        %1572 = vadd.xlane.f32.xlu0 %v1570
        %v1573 = vpop.xlane.xlu0 %1572
        %1574 = vadd.xlane.f32.xlu0 %v1571
        %v1575 = vpop.xlane.xlu0 %1574
        %v1576 = vmul.f32 %v1573, %v1565
        %v1577 = vmul.f32 %v1575, %v1565
        %v1578 = vadd.f32 %v1576, 1e-06
        %v1579 = vadd.f32 %v1577, 1e-06
        %v1580 = vrsqrt.pop %v1578
        %v1581 = vrsqrt.pop %v1579
        %v1582 = vmul.f32 %v1568, %v1580
        %v1583 = vmul.f32 %v1569, %v1581
        %v1585 = vlaneseq
        %v1586 = vshrl.u32 %v1585, 7
        %v1587 = vsub.s32 0, %v1586
        %v1588 = vrot.slane %v1559, %v1587
        %v1590 = vmul.f32 %v1582, %v1588
        %v1591 = vmul.f32 %v1583, %v1588
        %v1593 = vlaneseq
        %v1594 = vshrl.u32 %v1593, 7
        %v1595 = vsub.s32 0, %v1594
        %v1596 = vrot.slane %v1560, %v1595
        %v1598 = vadd.f32 %v1590, %v1596
        %v1599 = vadd.f32 %v1591, %v1596
        %v1600 = vld [vmem:[%s1220] sm:$0xff]
        %v1601 = vld [vmem:[%s1220 + $0x8] sm:$0xf]
        %v1602 = vld [vmem:[%s1220 + $0xc] sm:$0xff]
        %v1603 = vld [vmem:[%s1220 + $0x14] sm:$0xf]
        %v1604 = vld [vmem:[%s1220 + $0x18] sm:$0xff]
        %v1605 = vld [vmem:[%s1220 + $0x20] sm:$0xf]
        %v1606 = vld [vmem:[%s1220 + $0x24] sm:$0xff]
        %v1607 = vld [vmem:[%s1220 + $0x2c] sm:$0xf]
        %v1608 = vld [vmem:[%s1220 + $0x30] sm:$0xff]
        %v1609 = vld [vmem:[%s1220 + $0x38] sm:$0xf]
        %v1610 = vld [vmem:[%s1220 + $0x3c] sm:$0xff]
        %v1611 = vld [vmem:[%s1220 + $0x44] sm:$0xf]
        %v1612 = vld [vmem:[%s1220 + $0x48] sm:$0xff]
        %v1613 = vld [vmem:[%s1220 + $0x50] sm:$0xf]
        %v1614 = vld [vmem:[%s1220 + $0x54] sm:$0xff]
        %v1615 = vld [vmem:[%s1220 + $0x5c] sm:$0xf]
        %v1616 = vld [vmem:[%s1220 + $0x60] sm:$0xff]
        %v1617 = vld [vmem:[%s1220 + $0x68] sm:$0xf]
        %v1618 = vld [vmem:[%s1220 + $0x6c] sm:$0xff]
        %v1619 = vld [vmem:[%s1220 + $0x74] sm:$0xf]
        %v1620 = vld [vmem:[%s1220 + $0x78] sm:$0xff]
        %v1621 = vld [vmem:[%s1220 + $0x80] sm:$0xf]
        %v1622 = vld [vmem:[%s1220 + $0x84] sm:$0xff]
        %v1623 = vld [vmem:[%s1220 + $0x8c] sm:$0xf]
        %v1624 = vld [vmem:[%s1220 + $0x90] sm:$0xff]
        %v1625 = vld [vmem:[%s1220 + $0x98] sm:$0xf]
        %v1626 = vld [vmem:[%s1220 + $0x9c] sm:$0xff]
        %v1627 = vld [vmem:[%s1220 + $0xa4] sm:$0xf]
        %v1628 = vld [vmem:[%s1220 + $0xa8] sm:$0xff]
        %v1629 = vld [vmem:[%s1220 + $0xb0] sm:$0xf]
        %v1630 = vld [vmem:[%s1220 + $0xb4] sm:$0xff]
        %v1631 = vld [vmem:[%s1220 + $0xbc] sm:$0xf]
        %v1632 = vpack.c.bf16 %v1599, %v1598
        %v1633 = vld [vmem:[%s1532] sm:$0x7]
        %v1635 = vlaneseq
        %v1636 = vshrl.u32 %v1635, 7
        %v1637 = vsub.s32 0, %v1636
        %v1638 = vrot.slane %v1633, %v1637
        %v1639 = vlaneseq
        %v1640 = vshrl.u32 %v1639, 7
        %v1641 = vsub.s32 1, %v1640
        %v1642 = vrot.slane %v1633, %v1641
        %v1643 = vlaneseq
        %v1644 = vshrl.u32 %v1643, 7
        %v1645 = vsub.s32 2, %v1644
        %v1646 = vrot.slane %v1633, %v1645
        %v1682 = vunpack.c.l.b16 %v1600
        %v1683 = vunpack.c.h.b16 %v1600
        %v1684 = vunpack.c.l.b16 %v1601
        %v1685 = vunpack.c.l.b16 %v1602
        %v1686 = vunpack.c.h.b16 %v1602
        %v1687 = vunpack.c.l.b16 %v1603
        %v1688 = vunpack.c.l.b16 %v1604
        %v1689 = vunpack.c.h.b16 %v1604
        %v1690 = vunpack.c.l.b16 %v1605
        %v1691 = vunpack.c.l.b16 %v1606
        %v1692 = vunpack.c.h.b16 %v1606
        %v1693 = vunpack.c.l.b16 %v1607
        %v1694 = vunpack.c.l.b16 %v1608
        %v1695 = vunpack.c.h.b16 %v1608
        %v1696 = vunpack.c.l.b16 %v1609
        %v1697 = vunpack.c.l.b16 %v1610
        %v1698 = vunpack.c.h.b16 %v1610
        %v1699 = vunpack.c.l.b16 %v1611
        %v1700 = vunpack.c.l.b16 %v1612
        %v1701 = vunpack.c.h.b16 %v1612
        %v1702 = vunpack.c.l.b16 %v1613
        %v1703 = vunpack.c.l.b16 %v1614
        %v1704 = vunpack.c.h.b16 %v1614
        %v1705 = vunpack.c.l.b16 %v1615
        %v1706 = vunpack.c.l.b16 %v1616
        %v1707 = vunpack.c.h.b16 %v1616
        %v1708 = vunpack.c.l.b16 %v1617
        %v1709 = vunpack.c.l.b16 %v1618
        %v1710 = vunpack.c.h.b16 %v1618
        %v1711 = vunpack.c.l.b16 %v1619
        %v1712 = vunpack.c.l.b16 %v1620
        %v1713 = vunpack.c.h.b16 %v1620
        %v1714 = vunpack.c.l.b16 %v1621
        %v1715 = vunpack.c.l.b16 %v1622
        %v1716 = vunpack.c.h.b16 %v1622
        %v1717 = vunpack.c.l.b16 %v1623
        %v1718 = vunpack.c.l.b16 %v1624
        %v1719 = vunpack.c.h.b16 %v1624
        %v1720 = vunpack.c.l.b16 %v1625
        %v1721 = vunpack.c.l.b16 %v1626
        %v1722 = vunpack.c.h.b16 %v1626
        %v1723 = vunpack.c.l.b16 %v1627
        %v1724 = vunpack.c.l.b16 %v1628
        %v1725 = vunpack.c.h.b16 %v1628
        %v1726 = vunpack.c.l.b16 %v1629
        %v1727 = vunpack.c.l.b16 %v1630
        %v1728 = vunpack.c.h.b16 %v1630
        %v1729 = vunpack.c.l.b16 %v1631
        %v1730 = vpack.c.b16 %v1685, %v1682
        %v1731 = vpack.c.b16 %v1686, %v1683
        %v1732 = vpack.c.b16 %v1687, %v1684
        %v1733 = vpack.c.b16 %v1691, %v1688
        %v1734 = vpack.c.b16 %v1692, %v1689
        %v1735 = vpack.c.b16 %v1693, %v1690
        %v1736 = vpack.c.b16 %v1697, %v1694
        %v1737 = vpack.c.b16 %v1698, %v1695
        %v1738 = vpack.c.b16 %v1699, %v1696
        %v1739 = vpack.c.b16 %v1703, %v1700
        %v1740 = vpack.c.b16 %v1704, %v1701
        %v1741 = vpack.c.b16 %v1705, %v1702
        %v1742 = vpack.c.b16 %v1709, %v1706
        %v1743 = vpack.c.b16 %v1710, %v1707
        %v1744 = vpack.c.b16 %v1711, %v1708
        %v1745 = vpack.c.b16 %v1715, %v1712
        %v1746 = vpack.c.b16 %v1716, %v1713
        %v1747 = vpack.c.b16 %v1717, %v1714
        %v1748 = vpack.c.b16 %v1721, %v1718
        %v1749 = vpack.c.b16 %v1722, %v1719
        %v1750 = vpack.c.b16 %v1723, %v1720
        %v1751 = vpack.c.b16 %v1727, %v1724
        %v1752 = vpack.c.b16 %v1728, %v1725
        %v1753 = vpack.c.b16 %v1729, %v1726
        %1778 = vmatprep.subr.bf16.mxu0 %v1752
        %1779 = vmatpush1.bf16.msra.mxu0 %v1751
        %1780 = vmatprep.subr.bf16.mxu0 %v1749
        %1781 = vmatpush1.bf16.msra.mxu0 %v1748
        %1782 = vmatprep.subr.bf16.mxu0 %v1746
        %1783 = vmatpush1.bf16.msra.mxu0 %v1745
        %1784 = vmatprep.subr.bf16.mxu0 %v1743
        %1785 = vmatpush1.bf16.msra.mxu0 %v1742
        %1786 = vmatprep.subr.bf16.mxu0 %v1740
        %1787 = vmatpush1.bf16.msra.mxu0 %v1739
        %1788 = vmatprep.subr.bf16.mxu0 %v1737
        %1789 = vmatpush1.bf16.msra.mxu0 %v1736
        %1790 = vmatprep.subr.bf16.mxu0 %v1734
        %1791 = vmatpush1.bf16.msra.mxu0 %v1733
        %1792 = vmatprep.subr.bf16.mxu0 %v1731
        %1793 = vmatpush1.bf16.msra.mxu0 %v1730
        %1794 = vmatprep.subr.bf16.mxu0 0
        %1795 = vmatpush2.bf16.msra.mxu0 0
        %1796 = vmatprep.subr.bf16.mxu0 0
        %1797 = vmatpush2.bf16.msra.mxu0 0
        %1798 = vmatprep.subr.bf16.mxu0 0
        %1799 = vmatpush2.bf16.msra.mxu0 0
        %1800 = vmatprep.subr.bf16.mxu0 0
        %1801 = vmatpush2.bf16.msra.mxu0 0
        %1802 = vmatprep.subr.bf16.mxu0 0
        %1803 = vmatpush2.bf16.msra.mxu0 0
        %1804 = vmatprep.subr.bf16.mxu0 0
        %1805 = vmatpush2.bf16.msra.mxu0 0
        %1806 = vmatprep.subr.bf16.mxu0 0
        %1807 = vmatpush2.bf16.msra.mxu0 0
        %1808 = vmatprep.subr.bf16.mxu0 0
        %1809 = vmatpush2.bf16.msra.mxu0 0
        %1810 = vmatprep.mubr.bf16.mxu0 0
        %1811 = vmatmul.mubr.bf16.gmra.mxu0 %v1632
        %v1812 = vpop.f32.mrf.mxu0
        %v1813 = vadd.f32 %v1638, %v1812
        %v1814 = vpop.f32.mrf.mxu0
        %v1815 = vadd.f32 %v1642, %v1814
        %v1816 = vpop.f32.mrf.mxu0
        %v1817 = vadd.f32 %v1638, %v1816
        %v1818 = vpop.f32.mrf.mxu0
        %v1819 = vadd.f32 %v1642, %v1818
        %1820 = vdwg.mxu0
        %1821 = vmatprep.subr.bf16.mxu0 0
        %1822 = vmatpush1.bf16.msra.mxu0 %v1753
        %1823 = vmatprep.subr.bf16.mxu0 0
        %1824 = vmatpush1.bf16.msra.mxu0 %v1750
        %1825 = vmatprep.subr.bf16.mxu0 0
        %1826 = vmatpush1.bf16.msra.mxu0 %v1747
        %1827 = vmatprep.subr.bf16.mxu0 0
        %1828 = vmatpush1.bf16.msra.mxu0 %v1744
        %1829 = vmatprep.subr.bf16.mxu0 0
        %1830 = vmatpush1.bf16.msra.mxu0 %v1741
        %1831 = vmatprep.subr.bf16.mxu0 0
        %1832 = vmatpush1.bf16.msra.mxu0 %v1738
        %1833 = vmatprep.subr.bf16.mxu0 0
        %1834 = vmatpush1.bf16.msra.mxu0 %v1735
        %1835 = vmatprep.subr.bf16.mxu0 0
        %1836 = vmatpush1.bf16.msra.mxu0 %v1732
        %1837 = vmatprep.subr.bf16.mxu0 0
        %1838 = vmatpush2.bf16.msra.mxu0 0
        %1839 = vmatprep.subr.bf16.mxu0 0
        %1840 = vmatpush2.bf16.msra.mxu0 0
        %1841 = vmatprep.subr.bf16.mxu0 0
        %1842 = vmatpush2.bf16.msra.mxu0 0
        %1843 = vmatprep.subr.bf16.mxu0 0
        %1844 = vmatpush2.bf16.msra.mxu0 0
        %1845 = vmatprep.subr.bf16.mxu0 0
        %1846 = vmatpush2.bf16.msra.mxu0 0
        %1847 = vmatprep.subr.bf16.mxu0 0
        %1848 = vmatpush2.bf16.msra.mxu0 0
        %1849 = vmatprep.subr.bf16.mxu0 0
        %1850 = vmatpush2.bf16.msra.mxu0 0
        %1851 = vmatprep.subr.bf16.mxu0 0
        %1852 = vmatpush2.bf16.msra.mxu0 0
        %1853 = vmatprep.mubr.bf16.mxu0 0
        %1854 = vmatmul.mubr.bf16.gmra.mxu0 %v1632
        %v1855 = vpop.f32.mrf.mxu0
        %v1856 = vadd.f32 %v1646, %v1855
        %v1857 = vpop.f32.mrf.mxu0
        %v1858 = vpop.f32.mrf.mxu0
        %v1859 = vadd.f32 %v1646, %v1858
        %v1860 = vpop.f32.mrf.mxu0
        %1861 = vdwg.mxu0
        %v1862 = vmul.f32 %v1813, 0.17677669
        %v1863 = vmul.f32 %v1817, 0.17677669
        %1866 = vrot.lane.b32.xlu0 %v1862, 96
        %v1867 = vpop.permute.xlu0 %1866
        %1868 = vrot.lane.b32.xlu0 %v1863, 96
        %v1869 = vpop.permute.xlu0 %1868
        %1872 = vrot.lane.b32.xlu0 %v1862, 64
        %v1873 = vpop.permute.xlu0 %1872
        %1874 = vrot.lane.b32.xlu0 %v1863, 64
        %v1875 = vpop.permute.xlu0 %1874
        %1878 = vrot.lane.b32.xlu0 %v1862, 32
        %v1879 = vpop.permute.xlu0 %1878
        %1880 = vrot.lane.b32.xlu0 %v1863, 32
        %v1881 = vpop.permute.xlu0 %1880
        %v1884 = vcombine.low %v1862, %v1873
        %v1885 = vcombine.high %v1862, %v1873
        %v1887 = vunpack.c.l.s4 1983009808
        %v1888 = vunpack.c.0.s8 %v1887
        %v1889 = vlaneseq
        %v1890 = vshrl.u32 %v1889, 7
        %v1891 = vsub.s32 %v1888, %v1890
        %v1892 = vrot.slane %v1884, %v1891
        %v1894 = vunpack.c.l.s4 1983009808
        %v1895 = vunpack.c.0.s8 %v1894
        %v1896 = vlaneseq
        %v1897 = vshrl.u32 %v1896, 7
        %v1898 = vsub.s32 %v1895, %v1897
        %v1899 = vrot.slane %v1885, %v1898
        %v1900 = vcombine.low %v1867, %v1879
        %v1901 = vcombine.high %v1867, %v1879
        %v1903 = vunpack.c.l.s4 1983009808
        %v1904 = vunpack.c.0.s8 %v1903
        %v1905 = vlaneseq
        %v1906 = vshrl.u32 %v1905, 7
        %v1907 = vsub.s32 %v1904, %v1906
        %v1908 = vrot.slane %v1900, %v1907
        %v1910 = vunpack.c.l.s4 1983009808
        %v1911 = vunpack.c.0.s8 %v1910
        %v1912 = vlaneseq
        %v1913 = vshrl.u32 %v1912, 7
        %v1914 = vsub.s32 %v1911, %v1913
        %v1915 = vrot.slane %v1901, %v1914
        %v1916 = vcombine.low %v1892, %v1908
        %v1917 = vcombine.high %v1892, %v1908
        %v1919 = vunpack.c.l.s4 1934713408
        %v1920 = vunpack.c.0.s8 %v1919
        %v1921 = vlaneseq
        %v1922 = vshrl.u32 %v1921, 7
        %v1923 = vsub.s32 %v1920, %v1922
        %v1924 = vrot.slane %v1916, %v1923
        %v1926 = vunpack.c.l.s4 1934713408
        %v1927 = vunpack.c.0.s8 %v1926
        %v1928 = vlaneseq
        %v1929 = vshrl.u32 %v1928, 7
        %v1930 = vsub.s32 %v1927, %v1929
        %v1931 = vrot.slane %v1917, %v1930
        %v1932 = vcombine.low %v1899, %v1915
        %v1933 = vcombine.high %v1899, %v1915
        %v1935 = vunpack.c.l.s4 1934713408
        %v1936 = vunpack.c.0.s8 %v1935
        %v1937 = vlaneseq
        %v1938 = vshrl.u32 %v1937, 7
        %v1939 = vsub.s32 %v1936, %v1938
        %v1940 = vrot.slane %v1932, %v1939
        %v1942 = vunpack.c.l.s4 1934713408
        %v1943 = vunpack.c.0.s8 %v1942
        %v1944 = vlaneseq
        %v1945 = vshrl.u32 %v1944, 7
        %v1946 = vsub.s32 %v1943, %v1945
        %v1947 = vrot.slane %v1933, %v1946
        %v1948 = vcombine.high %v1924, 0.0
        %v1949 = vcombine.high %v1931, 0.0
        %v1950 = vcombine.high %v1940, 0.0
        %v1951 = vcombine.high %v1947, 0.0
        %v1952 = vcombine.low %v1863, %v1875
        %v1953 = vcombine.high %v1863, %v1875
        %v1955 = vunpack.c.l.s4 1983009808
        %v1956 = vunpack.c.0.s8 %v1955
        %v1957 = vlaneseq
        %v1958 = vshrl.u32 %v1957, 7
        %v1959 = vsub.s32 %v1956, %v1958
        %v1960 = vrot.slane %v1952, %v1959
        %v1962 = vunpack.c.l.s4 1983009808
        %v1963 = vunpack.c.0.s8 %v1962
        %v1964 = vlaneseq
        %v1965 = vshrl.u32 %v1964, 7
        %v1966 = vsub.s32 %v1963, %v1965
        %v1967 = vrot.slane %v1953, %v1966
        %v1968 = vcombine.low %v1869, %v1881
        %v1969 = vcombine.high %v1869, %v1881
        %v1971 = vunpack.c.l.s4 1983009808
        %v1972 = vunpack.c.0.s8 %v1971
        %v1973 = vlaneseq
        %v1974 = vshrl.u32 %v1973, 7
        %v1975 = vsub.s32 %v1972, %v1974
        %v1976 = vrot.slane %v1968, %v1975
        %v1978 = vunpack.c.l.s4 1983009808
        %v1979 = vunpack.c.0.s8 %v1978
        %v1980 = vlaneseq
        %v1981 = vshrl.u32 %v1980, 7
        %v1982 = vsub.s32 %v1979, %v1981
        %v1983 = vrot.slane %v1969, %v1982
        %v1984 = vcombine.low %v1960, %v1976
        %v1985 = vcombine.high %v1960, %v1976
        %v1987 = vunpack.c.l.s4 1934713408
        %v1988 = vunpack.c.0.s8 %v1987
        %v1989 = vlaneseq
        %v1990 = vshrl.u32 %v1989, 7
        %v1991 = vsub.s32 %v1988, %v1990
        %v1992 = vrot.slane %v1984, %v1991
        %v1994 = vunpack.c.l.s4 1934713408
        %v1995 = vunpack.c.0.s8 %v1994
        %v1996 = vlaneseq
        %v1997 = vshrl.u32 %v1996, 7
        %v1998 = vsub.s32 %v1995, %v1997
        %v1999 = vrot.slane %v1985, %v1998
        %v2000 = vcombine.low %v1967, %v1983
        %v2001 = vcombine.high %v1967, %v1983
        %v2003 = vunpack.c.l.s4 1934713408
        %v2004 = vunpack.c.0.s8 %v2003
        %v2005 = vlaneseq
        %v2006 = vshrl.u32 %v2005, 7
        %v2007 = vsub.s32 %v2004, %v2006
        %v2008 = vrot.slane %v2000, %v2007
        %v2010 = vunpack.c.l.s4 1934713408
        %v2011 = vunpack.c.0.s8 %v2010
        %v2012 = vlaneseq
        %v2013 = vshrl.u32 %v2012, 7
        %v2014 = vsub.s32 %v2011, %v2013
        %v2015 = vrot.slane %v2001, %v2014
        %v2016 = vcombine.high %v1992, 0.0
        %v2017 = vcombine.high %v1999, 0.0
        %v2018 = vcombine.high %v2008, 0.0
        %v2019 = vcombine.high %v2015, 0.0
        %v2020 = vcombine.low %v1924, %v1931
        %v2022 = vunpack.c.l.s4 1983009808
        %v2023 = vunpack.c.0.s8 %v2022
        %v2024 = vlaneseq
        %v2025 = vshrl.u32 %v2024, 7
        %v2026 = vsub.s32 %v2023, %v2025
        %v2027 = vrot.slane %v2020, %v2026
        %v2028 = vcombine.low %v1948, %v1949
        %v2030 = vunpack.c.l.s4 1983009808
        %v2031 = vunpack.c.0.s8 %v2030
        %v2032 = vlaneseq
        %v2033 = vshrl.u32 %v2032, 7
        %v2034 = vsub.s32 %v2031, %v2033
        %v2035 = vrot.slane %v2028, %v2034
        %v2036 = vcombine.low %v1940, %v1947
        %v2038 = vunpack.c.l.s4 1983009808
        %v2039 = vunpack.c.0.s8 %v2038
        %v2040 = vlaneseq
        %v2041 = vshrl.u32 %v2040, 7
        %v2042 = vsub.s32 %v2039, %v2041
        %v2043 = vrot.slane %v2036, %v2042
        %v2044 = vcombine.low %v1950, %v1951
        %v2046 = vunpack.c.l.s4 1983009808
        %v2047 = vunpack.c.0.s8 %v2046
        %v2048 = vlaneseq
        %v2049 = vshrl.u32 %v2048, 7
        %v2050 = vsub.s32 %v2047, %v2049
        %v2051 = vrot.slane %v2044, %v2050
        %v2052 = vcombine.low %v2027, %v2035
        %v2053 = vcombine.high %v2027, %v2035
        %v2055 = vunpack.c.l.s4 1934713408
        %v2056 = vunpack.c.0.s8 %v2055
        %v2057 = vlaneseq
        %v2058 = vshrl.u32 %v2057, 7
        %v2059 = vsub.s32 %v2056, %v2058
        %v2060 = vrot.slane %v2052, %v2059
        %v2062 = vunpack.c.l.s4 1934713408
        %v2063 = vunpack.c.0.s8 %v2062
        %v2064 = vlaneseq
        %v2065 = vshrl.u32 %v2064, 7
        %v2066 = vsub.s32 %v2063, %v2065
        %v2067 = vrot.slane %v2053, %v2066
        %v2068 = vcombine.low %v2043, %v2051
        %v2069 = vcombine.high %v2043, %v2051
        %v2071 = vunpack.c.l.s4 1934713408
        %v2072 = vunpack.c.0.s8 %v2071
        %v2073 = vlaneseq
        %v2074 = vshrl.u32 %v2073, 7
        %v2075 = vsub.s32 %v2072, %v2074
        %v2076 = vrot.slane %v2068, %v2075
        %v2078 = vunpack.c.l.s4 1934713408
        %v2079 = vunpack.c.0.s8 %v2078
        %v2080 = vlaneseq
        %v2081 = vshrl.u32 %v2080, 7
        %v2082 = vsub.s32 %v2079, %v2081
        %v2083 = vrot.slane %v2069, %v2082
        %v2084 = vcombine.low %v2060, %v2076
        %v2085 = vcombine.high %v2060, %v2076
        %v2086 = vcombine.low %v2067, %v2083
        %v2087 = vcombine.high %v2067, %v2083
        %v2088 = vcombine.low %v1992, %v1999
        %v2090 = vunpack.c.l.s4 1983009808
        %v2091 = vunpack.c.0.s8 %v2090
        %v2092 = vlaneseq
        %v2093 = vshrl.u32 %v2092, 7
        %v2094 = vsub.s32 %v2091, %v2093
        %v2095 = vrot.slane %v2088, %v2094
        %v2096 = vcombine.low %v2016, %v2017
        %v2098 = vunpack.c.l.s4 1983009808
        %v2099 = vunpack.c.0.s8 %v2098
        %v2100 = vlaneseq
        %v2101 = vshrl.u32 %v2100, 7
        %v2102 = vsub.s32 %v2099, %v2101
        %v2103 = vrot.slane %v2096, %v2102
        %v2104 = vcombine.low %v2008, %v2015
        %v2106 = vunpack.c.l.s4 1983009808
        %v2107 = vunpack.c.0.s8 %v2106
        %v2108 = vlaneseq
        %v2109 = vshrl.u32 %v2108, 7
        %v2110 = vsub.s32 %v2107, %v2109
        %v2111 = vrot.slane %v2104, %v2110
        %v2112 = vcombine.low %v2018, %v2019
        %v2114 = vunpack.c.l.s4 1983009808
        %v2115 = vunpack.c.0.s8 %v2114
        %v2116 = vlaneseq
        %v2117 = vshrl.u32 %v2116, 7
        %v2118 = vsub.s32 %v2115, %v2117
        %v2119 = vrot.slane %v2112, %v2118
        %v2120 = vcombine.low %v2095, %v2103
        %v2121 = vcombine.high %v2095, %v2103
        %v2123 = vunpack.c.l.s4 1934713408
        %v2124 = vunpack.c.0.s8 %v2123
        %v2125 = vlaneseq
        %v2126 = vshrl.u32 %v2125, 7
        %v2127 = vsub.s32 %v2124, %v2126
        %v2128 = vrot.slane %v2120, %v2127
        %v2130 = vunpack.c.l.s4 1934713408
        %v2131 = vunpack.c.0.s8 %v2130
        %v2132 = vlaneseq
        %v2133 = vshrl.u32 %v2132, 7
        %v2134 = vsub.s32 %v2131, %v2133
        %v2135 = vrot.slane %v2121, %v2134
        %v2136 = vcombine.low %v2111, %v2119
        %v2137 = vcombine.high %v2111, %v2119
        %v2139 = vunpack.c.l.s4 1934713408
        %v2140 = vunpack.c.0.s8 %v2139
        %v2141 = vlaneseq
        %v2142 = vshrl.u32 %v2141, 7
        %v2143 = vsub.s32 %v2140, %v2142
        %v2144 = vrot.slane %v2136, %v2143
        %v2146 = vunpack.c.l.s4 1934713408
        %v2147 = vunpack.c.0.s8 %v2146
        %v2148 = vlaneseq
        %v2149 = vshrl.u32 %v2148, 7
        %v2150 = vsub.s32 %v2147, %v2149
        %v2151 = vrot.slane %v2137, %v2150
        %v2152 = vcombine.low %v2128, %v2144
        %v2153 = vcombine.high %v2128, %v2144
        %v2154 = vcombine.low %v2135, %v2151
        %v2155 = vcombine.high %v2135, %v2151
        %v2156 = vpack.c.bf16 %v2152, %v2084
        %v2157 = vpack.c.bf16 %v2153, %v2085
        %v2158 = vpack.c.bf16 %v2154, %v2086
        %v2159 = vpack.c.bf16 %v2155, %v2087
        %2162 = vrot.lane.b32.xlu0 %v1815, 96
        %v2163 = vpop.permute.xlu0 %2162
        %2164 = vrot.lane.b32.xlu0 %v1819, 96
        %v2165 = vpop.permute.xlu0 %2164
        %2168 = vrot.lane.b32.xlu0 %v1815, 64
        %v2169 = vpop.permute.xlu0 %2168
        %2170 = vrot.lane.b32.xlu0 %v1819, 64
        %v2171 = vpop.permute.xlu0 %2170
        %2174 = vrot.lane.b32.xlu0 %v1815, 32
        %v2175 = vpop.permute.xlu0 %2174
        %2176 = vrot.lane.b32.xlu0 %v1819, 32
        %v2177 = vpop.permute.xlu0 %2176
        %v2180 = vcombine.low %v1815, %v2169
        %v2181 = vcombine.high %v1815, %v2169
        %v2183 = vunpack.c.l.s4 1983009808
        %v2184 = vunpack.c.0.s8 %v2183
        %v2185 = vlaneseq
        %v2186 = vshrl.u32 %v2185, 7
        %v2187 = vsub.s32 %v2184, %v2186
        %v2188 = vrot.slane %v2180, %v2187
        %v2190 = vunpack.c.l.s4 1983009808
        %v2191 = vunpack.c.0.s8 %v2190
        %v2192 = vlaneseq
        %v2193 = vshrl.u32 %v2192, 7
        %v2194 = vsub.s32 %v2191, %v2193
        %v2195 = vrot.slane %v2181, %v2194
        %v2196 = vcombine.low %v2163, %v2175
        %v2197 = vcombine.high %v2163, %v2175
        %v2199 = vunpack.c.l.s4 1983009808
        %v2200 = vunpack.c.0.s8 %v2199
        %v2201 = vlaneseq
        %v2202 = vshrl.u32 %v2201, 7
        %v2203 = vsub.s32 %v2200, %v2202
        %v2204 = vrot.slane %v2196, %v2203
        %v2206 = vunpack.c.l.s4 1983009808
        %v2207 = vunpack.c.0.s8 %v2206
        %v2208 = vlaneseq
        %v2209 = vshrl.u32 %v2208, 7
        %v2210 = vsub.s32 %v2207, %v2209
        %v2211 = vrot.slane %v2197, %v2210
        %v2212 = vcombine.low %v2188, %v2204
        %v2213 = vcombine.high %v2188, %v2204
        %v2215 = vunpack.c.l.s4 1934713408
        %v2216 = vunpack.c.0.s8 %v2215
        %v2217 = vlaneseq
        %v2218 = vshrl.u32 %v2217, 7
        %v2219 = vsub.s32 %v2216, %v2218
        %v2220 = vrot.slane %v2212, %v2219
        %v2222 = vunpack.c.l.s4 1934713408
        %v2223 = vunpack.c.0.s8 %v2222
        %v2224 = vlaneseq
        %v2225 = vshrl.u32 %v2224, 7
        %v2226 = vsub.s32 %v2223, %v2225
        %v2227 = vrot.slane %v2213, %v2226
        %v2228 = vcombine.low %v2195, %v2211
        %v2229 = vcombine.high %v2195, %v2211
        %v2231 = vunpack.c.l.s4 1934713408
        %v2232 = vunpack.c.0.s8 %v2231
        %v2233 = vlaneseq
        %v2234 = vshrl.u32 %v2233, 7
        %v2235 = vsub.s32 %v2232, %v2234
        %v2236 = vrot.slane %v2228, %v2235
        %v2238 = vunpack.c.l.s4 1934713408
        %v2239 = vunpack.c.0.s8 %v2238
        %v2240 = vlaneseq
        %v2241 = vshrl.u32 %v2240, 7
        %v2242 = vsub.s32 %v2239, %v2241
        %v2243 = vrot.slane %v2229, %v2242
        %v2244 = vcombine.high %v2220, 0.0
        %v2245 = vcombine.high %v2227, 0.0
        %v2246 = vcombine.high %v2236, 0.0
        %v2247 = vcombine.high %v2243, 0.0
        %v2248 = vcombine.low %v1819, %v2171
        %v2249 = vcombine.high %v1819, %v2171
        %v2251 = vunpack.c.l.s4 1983009808
        %v2252 = vunpack.c.0.s8 %v2251
        %v2253 = vlaneseq
        %v2254 = vshrl.u32 %v2253, 7
        %v2255 = vsub.s32 %v2252, %v2254
        %v2256 = vrot.slane %v2248, %v2255
        %v2258 = vunpack.c.l.s4 1983009808
        %v2259 = vunpack.c.0.s8 %v2258
        %v2260 = vlaneseq
        %v2261 = vshrl.u32 %v2260, 7
        %v2262 = vsub.s32 %v2259, %v2261
        %v2263 = vrot.slane %v2249, %v2262
        %v2264 = vcombine.low %v2165, %v2177
        %v2265 = vcombine.high %v2165, %v2177
        %v2267 = vunpack.c.l.s4 1983009808
        %v2268 = vunpack.c.0.s8 %v2267
        %v2269 = vlaneseq
        %v2270 = vshrl.u32 %v2269, 7
        %v2271 = vsub.s32 %v2268, %v2270
        %v2272 = vrot.slane %v2264, %v2271
        %v2274 = vunpack.c.l.s4 1983009808
        %v2275 = vunpack.c.0.s8 %v2274
        %v2276 = vlaneseq
        %v2277 = vshrl.u32 %v2276, 7
        %v2278 = vsub.s32 %v2275, %v2277
        %v2279 = vrot.slane %v2265, %v2278
        %v2280 = vcombine.low %v2256, %v2272
        %v2281 = vcombine.high %v2256, %v2272
        %v2283 = vunpack.c.l.s4 1934713408
        %v2284 = vunpack.c.0.s8 %v2283
        %v2285 = vlaneseq
        %v2286 = vshrl.u32 %v2285, 7
        %v2287 = vsub.s32 %v2284, %v2286
        %v2288 = vrot.slane %v2280, %v2287
        %v2290 = vunpack.c.l.s4 1934713408
        %v2291 = vunpack.c.0.s8 %v2290
        %v2292 = vlaneseq
        %v2293 = vshrl.u32 %v2292, 7
        %v2294 = vsub.s32 %v2291, %v2293
        %v2295 = vrot.slane %v2281, %v2294
        %v2296 = vcombine.low %v2263, %v2279
        %v2297 = vcombine.high %v2263, %v2279
        %v2299 = vunpack.c.l.s4 1934713408
        %v2300 = vunpack.c.0.s8 %v2299
        %v2301 = vlaneseq
        %v2302 = vshrl.u32 %v2301, 7
        %v2303 = vsub.s32 %v2300, %v2302
        %v2304 = vrot.slane %v2296, %v2303
        %v2306 = vunpack.c.l.s4 1934713408
        %v2307 = vunpack.c.0.s8 %v2306
        %v2308 = vlaneseq
        %v2309 = vshrl.u32 %v2308, 7
        %v2310 = vsub.s32 %v2307, %v2309
        %v2311 = vrot.slane %v2297, %v2310
        %v2312 = vcombine.high %v2288, 0.0
        %v2313 = vcombine.high %v2295, 0.0
        %v2314 = vcombine.high %v2304, 0.0
        %v2315 = vcombine.high %v2311, 0.0
        %v2316 = vcombine.low %v2220, %v2227
        %v2318 = vunpack.c.l.s4 1983009808
        %v2319 = vunpack.c.0.s8 %v2318
        %v2320 = vlaneseq
        %v2321 = vshrl.u32 %v2320, 7
        %v2322 = vsub.s32 %v2319, %v2321
        %v2323 = vrot.slane %v2316, %v2322
        %v2324 = vcombine.low %v2244, %v2245
        %v2326 = vunpack.c.l.s4 1983009808
        %v2327 = vunpack.c.0.s8 %v2326
        %v2328 = vlaneseq
        %v2329 = vshrl.u32 %v2328, 7
        %v2330 = vsub.s32 %v2327, %v2329
        %v2331 = vrot.slane %v2324, %v2330
        %v2332 = vcombine.low %v2236, %v2243
        %v2334 = vunpack.c.l.s4 1983009808
        %v2335 = vunpack.c.0.s8 %v2334
        %v2336 = vlaneseq
        %v2337 = vshrl.u32 %v2336, 7
        %v2338 = vsub.s32 %v2335, %v2337
        %v2339 = vrot.slane %v2332, %v2338
        %v2340 = vcombine.low %v2246, %v2247
        %v2342 = vunpack.c.l.s4 1983009808
        %v2343 = vunpack.c.0.s8 %v2342
        %v2344 = vlaneseq
        %v2345 = vshrl.u32 %v2344, 7
        %v2346 = vsub.s32 %v2343, %v2345
        %v2347 = vrot.slane %v2340, %v2346
        %v2348 = vcombine.low %v2323, %v2331
        %v2349 = vcombine.high %v2323, %v2331
        %v2351 = vunpack.c.l.s4 1934713408
        %v2352 = vunpack.c.0.s8 %v2351
        %v2353 = vlaneseq
        %v2354 = vshrl.u32 %v2353, 7
        %v2355 = vsub.s32 %v2352, %v2354
        %v2356 = vrot.slane %v2348, %v2355
        %v2358 = vunpack.c.l.s4 1934713408
        %v2359 = vunpack.c.0.s8 %v2358
        %v2360 = vlaneseq
        %v2361 = vshrl.u32 %v2360, 7
        %v2362 = vsub.s32 %v2359, %v2361
        %v2363 = vrot.slane %v2349, %v2362
        %v2364 = vcombine.low %v2339, %v2347
        %v2365 = vcombine.high %v2339, %v2347
        %v2367 = vunpack.c.l.s4 1934713408
        %v2368 = vunpack.c.0.s8 %v2367
        %v2369 = vlaneseq
        %v2370 = vshrl.u32 %v2369, 7
        %v2371 = vsub.s32 %v2368, %v2370
        %v2372 = vrot.slane %v2364, %v2371
        %v2374 = vunpack.c.l.s4 1934713408
        %v2375 = vunpack.c.0.s8 %v2374
        %v2376 = vlaneseq
        %v2377 = vshrl.u32 %v2376, 7
        %v2378 = vsub.s32 %v2375, %v2377
        %v2379 = vrot.slane %v2365, %v2378
        %v2380 = vcombine.low %v2356, %v2372
        %v2381 = vcombine.high %v2356, %v2372
        %v2382 = vcombine.low %v2363, %v2379
        %v2383 = vcombine.high %v2363, %v2379
        %v2384 = vcombine.low %v2288, %v2295
        %v2386 = vunpack.c.l.s4 1983009808
        %v2387 = vunpack.c.0.s8 %v2386
        %v2388 = vlaneseq
        %v2389 = vshrl.u32 %v2388, 7
        %v2390 = vsub.s32 %v2387, %v2389
        %v2391 = vrot.slane %v2384, %v2390
        %v2392 = vcombine.low %v2312, %v2313
        %v2394 = vunpack.c.l.s4 1983009808
        %v2395 = vunpack.c.0.s8 %v2394
        %v2396 = vlaneseq
        %v2397 = vshrl.u32 %v2396, 7
        %v2398 = vsub.s32 %v2395, %v2397
        %v2399 = vrot.slane %v2392, %v2398
        %v2400 = vcombine.low %v2304, %v2311
        %v2402 = vunpack.c.l.s4 1983009808
        %v2403 = vunpack.c.0.s8 %v2402
        %v2404 = vlaneseq
        %v2405 = vshrl.u32 %v2404, 7
        %v2406 = vsub.s32 %v2403, %v2405
        %v2407 = vrot.slane %v2400, %v2406
        %v2408 = vcombine.low %v2314, %v2315
        %v2410 = vunpack.c.l.s4 1983009808
        %v2411 = vunpack.c.0.s8 %v2410
        %v2412 = vlaneseq
        %v2413 = vshrl.u32 %v2412, 7
        %v2414 = vsub.s32 %v2411, %v2413
        %v2415 = vrot.slane %v2408, %v2414
        %v2416 = vcombine.low %v2391, %v2399
        %v2417 = vcombine.high %v2391, %v2399
        %v2419 = vunpack.c.l.s4 1934713408
        %v2420 = vunpack.c.0.s8 %v2419
        %v2421 = vlaneseq
        %v2422 = vshrl.u32 %v2421, 7
        %v2423 = vsub.s32 %v2420, %v2422
        %v2424 = vrot.slane %v2416, %v2423
        %v2426 = vunpack.c.l.s4 1934713408
        %v2427 = vunpack.c.0.s8 %v2426
        %v2428 = vlaneseq
        %v2429 = vshrl.u32 %v2428, 7
        %v2430 = vsub.s32 %v2427, %v2429
        %v2431 = vrot.slane %v2417, %v2430
        %v2432 = vcombine.low %v2407, %v2415
        %v2433 = vcombine.high %v2407, %v2415
        %v2435 = vunpack.c.l.s4 1934713408
        %v2436 = vunpack.c.0.s8 %v2435
        %v2437 = vlaneseq
        %v2438 = vshrl.u32 %v2437, 7
        %v2439 = vsub.s32 %v2436, %v2438
        %v2440 = vrot.slane %v2432, %v2439
        %v2442 = vunpack.c.l.s4 1934713408
        %v2443 = vunpack.c.0.s8 %v2442
        %v2444 = vlaneseq
        %v2445 = vshrl.u32 %v2444, 7
        %v2446 = vsub.s32 %v2443, %v2445
        %v2447 = vrot.slane %v2433, %v2446
        %v2448 = vcombine.low %v2424, %v2440
        %v2449 = vcombine.high %v2424, %v2440
        %v2450 = vcombine.low %v2431, %v2447
        %v2451 = vcombine.high %v2431, %v2447
        %v2452 = vpack.c.bf16 %v2448, %v2380
        %v2453 = vpack.c.bf16 %v2449, %v2381
        %v2454 = vpack.c.bf16 %v2450, %v2382
        %v2455 = vpack.c.bf16 %v2451, %v2383
        %2458 = vrot.lane.b32.xlu0 %v1856, 96
        %v2459 = vpop.permute.xlu0 %2458
        %2460 = vrot.lane.b32.xlu0 %v1859, 96
        %v2461 = vpop.permute.xlu0 %2460
        %2464 = vrot.lane.b32.xlu0 %v1856, 64
        %v2465 = vpop.permute.xlu0 %2464
        %2466 = vrot.lane.b32.xlu0 %v1859, 64
        %v2467 = vpop.permute.xlu0 %2466
        %2470 = vrot.lane.b32.xlu0 %v1856, 32
        %v2471 = vpop.permute.xlu0 %2470
        %2472 = vrot.lane.b32.xlu0 %v1859, 32
        %v2473 = vpop.permute.xlu0 %2472
        %v2476 = vcombine.low %v1856, %v2465
        %v2477 = vcombine.high %v1856, %v2465
        %v2479 = vunpack.c.l.s4 1983009808
        %v2480 = vunpack.c.0.s8 %v2479
        %v2481 = vlaneseq
        %v2482 = vshrl.u32 %v2481, 7
        %v2483 = vsub.s32 %v2480, %v2482
        %v2484 = vrot.slane %v2476, %v2483
        %v2486 = vunpack.c.l.s4 1983009808
        %v2487 = vunpack.c.0.s8 %v2486
        %v2488 = vlaneseq
        %v2489 = vshrl.u32 %v2488, 7
        %v2490 = vsub.s32 %v2487, %v2489
        %v2491 = vrot.slane %v2477, %v2490
        %v2492 = vcombine.low %v2459, %v2471
        %v2493 = vcombine.high %v2459, %v2471
        %v2495 = vunpack.c.l.s4 1983009808
        %v2496 = vunpack.c.0.s8 %v2495
        %v2497 = vlaneseq
        %v2498 = vshrl.u32 %v2497, 7
        %v2499 = vsub.s32 %v2496, %v2498
        %v2500 = vrot.slane %v2492, %v2499
        %v2502 = vunpack.c.l.s4 1983009808
        %v2503 = vunpack.c.0.s8 %v2502
        %v2504 = vlaneseq
        %v2505 = vshrl.u32 %v2504, 7
        %v2506 = vsub.s32 %v2503, %v2505
        %v2507 = vrot.slane %v2493, %v2506
        %v2508 = vcombine.low %v2484, %v2500
        %v2509 = vcombine.high %v2484, %v2500
        %v2511 = vunpack.c.l.s4 1934713408
        %v2512 = vunpack.c.0.s8 %v2511
        %v2513 = vlaneseq
        %v2514 = vshrl.u32 %v2513, 7
        %v2515 = vsub.s32 %v2512, %v2514
        %v2516 = vrot.slane %v2508, %v2515
        %v2518 = vunpack.c.l.s4 1934713408
        %v2519 = vunpack.c.0.s8 %v2518
        %v2520 = vlaneseq
        %v2521 = vshrl.u32 %v2520, 7
        %v2522 = vsub.s32 %v2519, %v2521
        %v2523 = vrot.slane %v2509, %v2522
        %v2524 = vcombine.low %v2491, %v2507
        %v2525 = vcombine.high %v2491, %v2507
        %v2527 = vunpack.c.l.s4 1934713408
        %v2528 = vunpack.c.0.s8 %v2527
        %v2529 = vlaneseq
        %v2530 = vshrl.u32 %v2529, 7
        %v2531 = vsub.s32 %v2528, %v2530
        %v2532 = vrot.slane %v2524, %v2531
        %v2534 = vunpack.c.l.s4 1934713408
        %v2535 = vunpack.c.0.s8 %v2534
        %v2536 = vlaneseq
        %v2537 = vshrl.u32 %v2536, 7
        %v2538 = vsub.s32 %v2535, %v2537
        %v2539 = vrot.slane %v2525, %v2538
        %v2540 = vcombine.high %v2516, 0.0
        %v2541 = vcombine.high %v2523, 0.0
        %v2542 = vcombine.high %v2532, 0.0
        %v2543 = vcombine.high %v2539, 0.0
        %v2544 = vcombine.low %v1859, %v2467
        %v2545 = vcombine.high %v1859, %v2467
        %v2547 = vunpack.c.l.s4 1983009808
        %v2548 = vunpack.c.0.s8 %v2547
        %v2549 = vlaneseq
        %v2550 = vshrl.u32 %v2549, 7
        %v2551 = vsub.s32 %v2548, %v2550
        %v2552 = vrot.slane %v2544, %v2551
        %v2554 = vunpack.c.l.s4 1983009808
        %v2555 = vunpack.c.0.s8 %v2554
        %v2556 = vlaneseq
        %v2557 = vshrl.u32 %v2556, 7
        %v2558 = vsub.s32 %v2555, %v2557
        %v2559 = vrot.slane %v2545, %v2558
        %v2560 = vcombine.low %v2461, %v2473
        %v2561 = vcombine.high %v2461, %v2473
        %v2563 = vunpack.c.l.s4 1983009808
        %v2564 = vunpack.c.0.s8 %v2563
        %v2565 = vlaneseq
        %v2566 = vshrl.u32 %v2565, 7
        %v2567 = vsub.s32 %v2564, %v2566
        %v2568 = vrot.slane %v2560, %v2567
        %v2570 = vunpack.c.l.s4 1983009808
        %v2571 = vunpack.c.0.s8 %v2570
        %v2572 = vlaneseq
        %v2573 = vshrl.u32 %v2572, 7
        %v2574 = vsub.s32 %v2571, %v2573
        %v2575 = vrot.slane %v2561, %v2574
        %v2576 = vcombine.low %v2552, %v2568
        %v2577 = vcombine.high %v2552, %v2568
        %v2579 = vunpack.c.l.s4 1934713408
        %v2580 = vunpack.c.0.s8 %v2579
        %v2581 = vlaneseq
        %v2582 = vshrl.u32 %v2581, 7
        %v2583 = vsub.s32 %v2580, %v2582
        %v2584 = vrot.slane %v2576, %v2583
        %v2586 = vunpack.c.l.s4 1934713408
        %v2587 = vunpack.c.0.s8 %v2586
        %v2588 = vlaneseq
        %v2589 = vshrl.u32 %v2588, 7
        %v2590 = vsub.s32 %v2587, %v2589
        %v2591 = vrot.slane %v2577, %v2590
        %v2592 = vcombine.low %v2559, %v2575
        %v2593 = vcombine.high %v2559, %v2575
        %v2595 = vunpack.c.l.s4 1934713408
        %v2596 = vunpack.c.0.s8 %v2595
        %v2597 = vlaneseq
        %v2598 = vshrl.u32 %v2597, 7
        %v2599 = vsub.s32 %v2596, %v2598
        %v2600 = vrot.slane %v2592, %v2599
        %v2602 = vunpack.c.l.s4 1934713408
        %v2603 = vunpack.c.0.s8 %v2602
        %v2604 = vlaneseq
        %v2605 = vshrl.u32 %v2604, 7
        %v2606 = vsub.s32 %v2603, %v2605
        %v2607 = vrot.slane %v2593, %v2606
        %v2608 = vcombine.high %v2584, 0.0
        %v2609 = vcombine.high %v2591, 0.0
        %v2610 = vcombine.high %v2600, 0.0
        %v2611 = vcombine.high %v2607, 0.0
        %v2612 = vcombine.low %v2516, %v2523
        %v2614 = vunpack.c.l.s4 1983009808
        %v2615 = vunpack.c.0.s8 %v2614
        %v2616 = vlaneseq
        %v2617 = vshrl.u32 %v2616, 7
        %v2618 = vsub.s32 %v2615, %v2617
        %v2619 = vrot.slane %v2612, %v2618
        %v2620 = vcombine.low %v2540, %v2541
        %v2622 = vunpack.c.l.s4 1983009808
        %v2623 = vunpack.c.0.s8 %v2622
        %v2624 = vlaneseq
        %v2625 = vshrl.u32 %v2624, 7
        %v2626 = vsub.s32 %v2623, %v2625
        %v2627 = vrot.slane %v2620, %v2626
        %v2628 = vcombine.low %v2532, %v2539
        %v2630 = vunpack.c.l.s4 1983009808
        %v2631 = vunpack.c.0.s8 %v2630
        %v2632 = vlaneseq
        %v2633 = vshrl.u32 %v2632, 7
        %v2634 = vsub.s32 %v2631, %v2633
        %v2635 = vrot.slane %v2628, %v2634
        %v2636 = vcombine.low %v2542, %v2543
        %v2638 = vunpack.c.l.s4 1983009808
        %v2639 = vunpack.c.0.s8 %v2638
        %v2640 = vlaneseq
        %v2641 = vshrl.u32 %v2640, 7
        %v2642 = vsub.s32 %v2639, %v2641
        %v2643 = vrot.slane %v2636, %v2642
        %v2644 = vcombine.low %v2619, %v2627
        %v2645 = vcombine.high %v2619, %v2627
        %v2647 = vunpack.c.l.s4 1934713408
        %v2648 = vunpack.c.0.s8 %v2647
        %v2649 = vlaneseq
        %v2650 = vshrl.u32 %v2649, 7
        %v2651 = vsub.s32 %v2648, %v2650
        %v2652 = vrot.slane %v2644, %v2651
        %v2654 = vunpack.c.l.s4 1934713408
        %v2655 = vunpack.c.0.s8 %v2654
        %v2656 = vlaneseq
        %v2657 = vshrl.u32 %v2656, 7
        %v2658 = vsub.s32 %v2655, %v2657
        %v2659 = vrot.slane %v2645, %v2658
        %v2660 = vcombine.low %v2635, %v2643
        %v2661 = vcombine.high %v2635, %v2643
        %v2663 = vunpack.c.l.s4 1934713408
        %v2664 = vunpack.c.0.s8 %v2663
        %v2665 = vlaneseq
        %v2666 = vshrl.u32 %v2665, 7
        %v2667 = vsub.s32 %v2664, %v2666
        %v2668 = vrot.slane %v2660, %v2667
        %v2670 = vunpack.c.l.s4 1934713408
        %v2671 = vunpack.c.0.s8 %v2670
        %v2672 = vlaneseq
        %v2673 = vshrl.u32 %v2672, 7
        %v2674 = vsub.s32 %v2671, %v2673
        %v2675 = vrot.slane %v2661, %v2674
        %v2676 = vcombine.low %v2652, %v2668
        %v2677 = vcombine.high %v2652, %v2668
        %v2678 = vcombine.low %v2659, %v2675
        %v2679 = vcombine.high %v2659, %v2675
        %v2680 = vcombine.low %v2584, %v2591
        %v2682 = vunpack.c.l.s4 1983009808
        %v2683 = vunpack.c.0.s8 %v2682
        %v2684 = vlaneseq
        %v2685 = vshrl.u32 %v2684, 7
        %v2686 = vsub.s32 %v2683, %v2685
        %v2687 = vrot.slane %v2680, %v2686
        %v2688 = vcombine.low %v2608, %v2609
        %v2690 = vunpack.c.l.s4 1983009808
        %v2691 = vunpack.c.0.s8 %v2690
        %v2692 = vlaneseq
        %v2693 = vshrl.u32 %v2692, 7
        %v2694 = vsub.s32 %v2691, %v2693
        %v2695 = vrot.slane %v2688, %v2694
        %v2696 = vcombine.low %v2600, %v2607
        %v2698 = vunpack.c.l.s4 1983009808
        %v2699 = vunpack.c.0.s8 %v2698
        %v2700 = vlaneseq
        %v2701 = vshrl.u32 %v2700, 7
        %v2702 = vsub.s32 %v2699, %v2701
        %v2703 = vrot.slane %v2696, %v2702
        %v2704 = vcombine.low %v2610, %v2611
        %v2706 = vunpack.c.l.s4 1983009808
        %v2707 = vunpack.c.0.s8 %v2706
        %v2708 = vlaneseq
        %v2709 = vshrl.u32 %v2708, 7
        %v2710 = vsub.s32 %v2707, %v2709
        %v2711 = vrot.slane %v2704, %v2710
        %v2712 = vcombine.low %v2687, %v2695
        %v2713 = vcombine.high %v2687, %v2695
        %v2715 = vunpack.c.l.s4 1934713408
        %v2716 = vunpack.c.0.s8 %v2715
        %v2717 = vlaneseq
        %v2718 = vshrl.u32 %v2717, 7
        %v2719 = vsub.s32 %v2716, %v2718
        %v2720 = vrot.slane %v2712, %v2719
        %v2722 = vunpack.c.l.s4 1934713408
        %v2723 = vunpack.c.0.s8 %v2722
        %v2724 = vlaneseq
        %v2725 = vshrl.u32 %v2724, 7
        %v2726 = vsub.s32 %v2723, %v2725
        %v2727 = vrot.slane %v2713, %v2726
        %v2728 = vcombine.low %v2703, %v2711
        %v2729 = vcombine.high %v2703, %v2711
        %v2731 = vunpack.c.l.s4 1934713408
        %v2732 = vunpack.c.0.s8 %v2731
        %v2733 = vlaneseq
        %v2734 = vshrl.u32 %v2733, 7
        %v2735 = vsub.s32 %v2732, %v2734
        %v2736 = vrot.slane %v2728, %v2735
        %v2738 = vunpack.c.l.s4 1934713408
        %v2739 = vunpack.c.0.s8 %v2738
        %v2740 = vlaneseq
        %v2741 = vshrl.u32 %v2740, 7
        %v2742 = vsub.s32 %v2739, %v2741
        %v2743 = vrot.slane %v2729, %v2742
        %v2744 = vcombine.low %v2720, %v2736
        %v2745 = vcombine.high %v2720, %v2736
        %v2746 = vcombine.low %v2727, %v2743
        %v2747 = vcombine.high %v2727, %v2743
        %v2748 = vpack.c.bf16 %v2744, %v2676
        %v2749 = vpack.c.bf16 %v2745, %v2677
        %v2750 = vpack.c.bf16 %v2746, %v2678
        %v2751 = vpack.c.bf16 %v2747, %v2679
        %vm2752 = vcmask 261120
        %v2754 = vsel %vm2752, %v2156, 0
        %v2757 = vsel %vm2752, %v2452, 0
        %2759 = vmatprep.subr.bf16.mxu0 0
        %2760 = vmatpush1.bf16.xpose.msra.mxu0 0
        %2761 = vmatprep.subr.bf16.mxu0 0
        %2762 = vmatpush1.bf16.xpose.msra.mxu0 0
        %2763 = vmatprep.subr.bf16.mxu0 0
        %2764 = vmatpush1.bf16.xpose.msra.mxu0 0
        %2765 = vmatprep.subr.bf16.mxu0 0
        %2766 = vmatpush1.bf16.xpose.msra.mxu0 0
        %2767 = vmatprep.subr.bf16.mxu0 0
        %2768 = vmatpush1.bf16.xpose.msra.mxu0 0
        %2769 = vmatprep.subr.bf16.mxu0 0
        %2770 = vmatpush1.bf16.xpose.msra.mxu0 0
        %2771 = vmatprep.subr.bf16.mxu0 0
        %2772 = vmatpush1.bf16.xpose.msra.mxu0 0
        %2773 = vmatprep.subr.bf16.mxu0 0
        %2774 = vmatpush1.bf16.xpose.msra.mxu0 %v2757
        %2775 = vmatprep.subr.bf16.mxu0 0
        %2776 = vmatpush2.bf16.xpose.msra.mxu0 0
        %2777 = vmatprep.subr.bf16.mxu0 0
        %2778 = vmatpush2.bf16.xpose.msra.mxu0 0
        %2779 = vmatprep.subr.bf16.mxu0 0
        %2780 = vmatpush2.bf16.xpose.msra.mxu0 0
        %2781 = vmatprep.subr.bf16.mxu0 0
        %2782 = vmatpush2.bf16.xpose.msra.mxu0 0
        %2783 = vmatprep.subr.bf16.mxu0 0
        %2784 = vmatpush2.bf16.xpose.msra.mxu0 0
        %2785 = vmatprep.subr.bf16.mxu0 0
        %2786 = vmatpush2.bf16.xpose.msra.mxu0 0
        %2787 = vmatprep.subr.bf16.mxu0 0
        %2788 = vmatpush2.bf16.xpose.msra.mxu0 0
        %2789 = vmatprep.subr.bf16.mxu0 0
        %2790 = vmatpush2.bf16.xpose.msra.mxu0 0
        %2791 = vmatprep.mubr.bf16.mxu0 0
        %2792 = vmatmul.mubr.bf16.gmra.mxu0 %v2754
        %v2793 = vpop.f32.mrf.mxu0
        %v2794 = vadd.f32 %v1555, %v2793
        %v2795 = vpop.f32.mrf.mxu0
        %v2796 = vpop.f32.mrf.mxu0
        %v2797 = vadd.f32 %v1556, %v2796
        %v2798 = vpop.f32.mrf.mxu0
        %2799 = vdwg.mxu0
        %v2801 = vsel %vm2752, %v2157, 0
        %v2804 = vsel %vm2752, %v2453, 0
        %2806 = vmatprep.subr.bf16.mxu0 0
        %2807 = vmatpush1.bf16.xpose.msra.mxu0 0
        %2808 = vmatprep.subr.bf16.mxu0 0
        %2809 = vmatpush1.bf16.xpose.msra.mxu0 0
        %2810 = vmatprep.subr.bf16.mxu0 0
        %2811 = vmatpush1.bf16.xpose.msra.mxu0 0
        %2812 = vmatprep.subr.bf16.mxu0 0
        %2813 = vmatpush1.bf16.xpose.msra.mxu0 0
        %2814 = vmatprep.subr.bf16.mxu0 0
        %2815 = vmatpush1.bf16.xpose.msra.mxu0 0
        %2816 = vmatprep.subr.bf16.mxu0 0
        %2817 = vmatpush1.bf16.xpose.msra.mxu0 0
        %2818 = vmatprep.subr.bf16.mxu0 0
        %2819 = vmatpush1.bf16.xpose.msra.mxu0 0
        %2820 = vmatprep.subr.bf16.mxu0 0
        %2821 = vmatpush1.bf16.xpose.msra.mxu0 %v2804
        %2822 = vmatprep.subr.bf16.mxu0 0
        %2823 = vmatpush2.bf16.xpose.msra.mxu0 0
        %2824 = vmatprep.subr.bf16.mxu0 0
        %2825 = vmatpush2.bf16.xpose.msra.mxu0 0
        %2826 = vmatprep.subr.bf16.mxu0 0
        %2827 = vmatpush2.bf16.xpose.msra.mxu0 0
        %2828 = vmatprep.subr.bf16.mxu0 0
        %2829 = vmatpush2.bf16.xpose.msra.mxu0 0
        %2830 = vmatprep.subr.bf16.mxu0 0
        %2831 = vmatpush2.bf16.xpose.msra.mxu0 0
        %2832 = vmatprep.subr.bf16.mxu0 0
        %2833 = vmatpush2.bf16.xpose.msra.mxu0 0
        %2834 = vmatprep.subr.bf16.mxu0 0
        %2835 = vmatpush2.bf16.xpose.msra.mxu0 0
        %2836 = vmatprep.subr.bf16.mxu0 0
        %2837 = vmatpush2.bf16.xpose.msra.mxu0 0
        %2838 = vmatprep.mubr.bf16.mxu0 0
        %2839 = vmatmul.mubr.bf16.gmra.mxu0 %v2801
        %v2840 = vpop.f32.mrf.mxu0
        %v2841 = vadd.f32 %v1555, %v2840
        %v2842 = vpop.f32.mrf.mxu0
        %v2843 = vpop.f32.mrf.mxu0
        %v2844 = vadd.f32 %v1556, %v2843
        %v2845 = vpop.f32.mrf.mxu0
        %2846 = vdwg.mxu0
        %v2848 = vsel %vm2752, %v2158, 0
        %v2851 = vsel %vm2752, %v2454, 0
        %2853 = vmatprep.subr.bf16.mxu0 0
        %2854 = vmatpush1.bf16.xpose.msra.mxu0 0
        %2855 = vmatprep.subr.bf16.mxu0 0
        %2856 = vmatpush1.bf16.xpose.msra.mxu0 0
        %2857 = vmatprep.subr.bf16.mxu0 0
        %2858 = vmatpush1.bf16.xpose.msra.mxu0 0
        %2859 = vmatprep.subr.bf16.mxu0 0
        %2860 = vmatpush1.bf16.xpose.msra.mxu0 0
        %2861 = vmatprep.subr.bf16.mxu0 0
        %2862 = vmatpush1.bf16.xpose.msra.mxu0 0
        %2863 = vmatprep.subr.bf16.mxu0 0
        %2864 = vmatpush1.bf16.xpose.msra.mxu0 0
        %2865 = vmatprep.subr.bf16.mxu0 0
        %2866 = vmatpush1.bf16.xpose.msra.mxu0 0
        %2867 = vmatprep.subr.bf16.mxu0 0
        %2868 = vmatpush1.bf16.xpose.msra.mxu0 %v2851
        %2869 = vmatprep.subr.bf16.mxu0 0
        %2870 = vmatpush2.bf16.xpose.msra.mxu0 0
        %2871 = vmatprep.subr.bf16.mxu0 0
        %2872 = vmatpush2.bf16.xpose.msra.mxu0 0
        %2873 = vmatprep.subr.bf16.mxu0 0
        %2874 = vmatpush2.bf16.xpose.msra.mxu0 0
        %2875 = vmatprep.subr.bf16.mxu0 0
        %2876 = vmatpush2.bf16.xpose.msra.mxu0 0
        %2877 = vmatprep.subr.bf16.mxu0 0
        %2878 = vmatpush2.bf16.xpose.msra.mxu0 0
        %2879 = vmatprep.subr.bf16.mxu0 0
        %2880 = vmatpush2.bf16.xpose.msra.mxu0 0
        %2881 = vmatprep.subr.bf16.mxu0 0
        %2882 = vmatpush2.bf16.xpose.msra.mxu0 0
        %2883 = vmatprep.subr.bf16.mxu0 0
        %2884 = vmatpush2.bf16.xpose.msra.mxu0 0
        %2885 = vmatprep.mubr.bf16.mxu0 0
        %2886 = vmatmul.mubr.bf16.gmra.mxu0 %v2848
        %v2887 = vpop.f32.mrf.mxu0
        %v2888 = vadd.f32 %v1555, %v2887
        %v2889 = vpop.f32.mrf.mxu0
        %v2890 = vpop.f32.mrf.mxu0
        %v2891 = vadd.f32 %v1556, %v2890
        %v2892 = vpop.f32.mrf.mxu0
        %2893 = vdwg.mxu0
        %v2895 = vsel %vm2752, %v2159, 0
        %v2898 = vsel %vm2752, %v2455, 0
        %2900 = vmatprep.subr.bf16.mxu0 0
        %2901 = vmatpush1.bf16.xpose.msra.mxu0 0
        %2902 = vmatprep.subr.bf16.mxu0 0
        %2903 = vmatpush1.bf16.xpose.msra.mxu0 0
        %2904 = vmatprep.subr.bf16.mxu0 0
        %2905 = vmatpush1.bf16.xpose.msra.mxu0 0
        %2906 = vmatprep.subr.bf16.mxu0 0
        %2907 = vmatpush1.bf16.xpose.msra.mxu0 0
        %2908 = vmatprep.subr.bf16.mxu0 0
        %2909 = vmatpush1.bf16.xpose.msra.mxu0 0
        %2910 = vmatprep.subr.bf16.mxu0 0
        %2911 = vmatpush1.bf16.xpose.msra.mxu0 0
        %2912 = vmatprep.subr.bf16.mxu0 0
        %2913 = vmatpush1.bf16.xpose.msra.mxu0 0
        %2914 = vmatprep.subr.bf16.mxu0 0
        %2915 = vmatpush1.bf16.xpose.msra.mxu0 %v2898
        %2916 = vmatprep.subr.bf16.mxu0 0
        %2917 = vmatpush2.bf16.xpose.msra.mxu0 0
        %2918 = vmatprep.subr.bf16.mxu0 0
        %2919 = vmatpush2.bf16.xpose.msra.mxu0 0
        %2920 = vmatprep.subr.bf16.mxu0 0
        %2921 = vmatpush2.bf16.xpose.msra.mxu0 0
        %2922 = vmatprep.subr.bf16.mxu0 0
        %2923 = vmatpush2.bf16.xpose.msra.mxu0 0
        %2924 = vmatprep.subr.bf16.mxu0 0
        %2925 = vmatpush2.bf16.xpose.msra.mxu0 0
        %2926 = vmatprep.subr.bf16.mxu0 0
        %2927 = vmatpush2.bf16.xpose.msra.mxu0 0
        %2928 = vmatprep.subr.bf16.mxu0 0
        %2929 = vmatpush2.bf16.xpose.msra.mxu0 0
        %2930 = vmatprep.subr.bf16.mxu0 0
        %2931 = vmatpush2.bf16.xpose.msra.mxu0 0
        %2932 = vmatprep.mubr.bf16.mxu0 0
        %2933 = vmatmul.mubr.bf16.gmra.mxu0 %v2895
        %v2934 = vpop.f32.mrf.mxu0
        %v2935 = vadd.f32 %v1555, %v2934
        %v2936 = vpop.f32.mrf.mxu0
        %v2937 = vpop.f32.mrf.mxu0
        %v2938 = vadd.f32 %v1556, %v2937
        %v2939 = vpop.f32.mrf.mxu0
        %2940 = vdwg.mxu0
        %vm2941 = vcmask 130048
        %v2942 = vsel %vm2941, %v2794, -inf
        %2943 = vmax.xlane.f32.xlu0 %v2942
        %v2944 = vpop.xlane.xlu0 %2943
        %v2945 = vsel %vm2941, %v2797, -inf
        %2946 = vmax.xlane.f32.xlu0 %v2945
        %v2947 = vpop.xlane.xlu0 %2946
        %v2948 = vsel %vm2941, %v2841, -inf
        %2949 = vmax.xlane.f32.xlu0 %v2948
        %v2950 = vpop.xlane.xlu0 %2949
        %v2951 = vsel %vm2941, %v2844, -inf
        %2952 = vmax.xlane.f32.xlu0 %v2951
        %v2953 = vpop.xlane.xlu0 %2952
        %v2954 = vsel %vm2941, %v2888, -inf
        %2955 = vmax.xlane.f32.xlu0 %v2954
        %v2956 = vpop.xlane.xlu0 %2955
        %v2957 = vsel %vm2941, %v2891, -inf
        %2958 = vmax.xlane.f32.xlu0 %v2957
        %v2959 = vpop.xlane.xlu0 %2958
        %v2960 = vsel %vm2941, %v2935, -inf
        %2961 = vmax.xlane.f32.xlu0 %v2960
        %v2962 = vpop.xlane.xlu0 %2961
        %v2963 = vsel %vm2941, %v2938, -inf
        %2964 = vmax.xlane.f32.xlu0 %v2963
        %v2965 = vpop.xlane.xlu0 %2964
        %v2966 = vsub.f32 %v2794, %v2944
        %v2967 = vsub.f32 %v2797, %v2947
        %v2968 = vsub.f32 %v2841, %v2950
        %v2969 = vsub.f32 %v2844, %v2953
        %v2970 = vsub.f32 %v2888, %v2956
        %v2971 = vsub.f32 %v2891, %v2959
        %v2972 = vsub.f32 %v2935, %v2962
        %v2973 = vsub.f32 %v2938, %v2965
        %v2974 = vmul.f32 %v2966, 1.442695
        %v2975 = vpow.pop %v2974
        %v2976 = vmul.f32 %v2967, 1.442695
        %v2977 = vpow.pop %v2976
        %v2978 = vmul.f32 %v2968, 1.442695
        %v2979 = vpow.pop %v2978
        %v2980 = vmul.f32 %v2969, 1.442695
        %v2981 = vpow.pop %v2980
        %v2982 = vmul.f32 %v2970, 1.442695
        %v2983 = vpow.pop %v2982
        %v2984 = vmul.f32 %v2971, 1.442695
        %v2985 = vpow.pop %v2984
        %v2986 = vmul.f32 %v2972, 1.442695
        %v2987 = vpow.pop %v2986
        %v2988 = vmul.f32 %v2973, 1.442695
        %v2989 = vpow.pop %v2988
        %v2990 = vsel %vm2941, %v2975, 0.0
        %2991 = vadd.xlane.f32.xlu0 %v2990
        %v2992 = vpop.xlane.xlu0 %2991
        %v2993 = vsel %vm2941, %v2977, 0.0
        %2994 = vadd.xlane.f32.xlu0 %v2993
        %v2995 = vpop.xlane.xlu0 %2994
        %v2996 = vsel %vm2941, %v2979, 0.0
        %2997 = vadd.xlane.f32.xlu0 %v2996
        %v2998 = vpop.xlane.xlu0 %2997
        %v2999 = vsel %vm2941, %v2981, 0.0
        %3000 = vadd.xlane.f32.xlu0 %v2999
        %v3001 = vpop.xlane.xlu0 %3000
        %v3002 = vsel %vm2941, %v2983, 0.0
        %3003 = vadd.xlane.f32.xlu0 %v3002
        %v3004 = vpop.xlane.xlu0 %3003
        %v3005 = vsel %vm2941, %v2985, 0.0
        %3006 = vadd.xlane.f32.xlu0 %v3005
        %v3007 = vpop.xlane.xlu0 %3006
        %v3008 = vsel %vm2941, %v2987, 0.0
        %3009 = vadd.xlane.f32.xlu0 %v3008
        %v3010 = vpop.xlane.xlu0 %3009
        %v3011 = vsel %vm2941, %v2989, 0.0
        %3012 = vadd.xlane.f32.xlu0 %v3011
        %v3013 = vpop.xlane.xlu0 %3012
        %v3014 = vrcp.pop %v2992
        %v3015 = vrcp.pop %v2995
        %v3016 = vrcp.pop %v2998
        %v3017 = vrcp.pop %v3001
        %v3018 = vrcp.pop %v3004
        %v3019 = vrcp.pop %v3007
        %v3020 = vrcp.pop %v3010
        %v3021 = vrcp.pop %v3013
        %v3022 = vmul.f32 %v2975, %v3014
        %v3023 = vmul.f32 %v2977, %v3015
        %v3024 = vmul.f32 %v2979, %v3016
        %v3025 = vmul.f32 %v2981, %v3017
        %v3026 = vmul.f32 %v2983, %v3018
        %v3027 = vmul.f32 %v2985, %v3019
        %v3028 = vmul.f32 %v2987, %v3020
        %v3029 = vmul.f32 %v2989, %v3021
        %v3030 = vpack.c.bf16 %v3023, %v3022
        %v3031 = vpack.c.bf16 %v3025, %v3024
        %v3032 = vpack.c.bf16 %v3027, %v3026
        %v3033 = vpack.c.bf16 %v3029, %v3028
        %v3035 = vsel %vm2941, %v3030, 0
        %3037 = vmatprep.subr.bf16.mxu0 0
        %3038 = vmatpush1.bf16.msra.mxu0 0
        %3039 = vmatprep.subr.bf16.mxu0 0
        %3040 = vmatpush1.bf16.msra.mxu0 0
        %3041 = vmatprep.subr.bf16.mxu0 0
        %3042 = vmatpush1.bf16.msra.mxu0 0
        %3043 = vmatprep.subr.bf16.mxu0 0
        %3044 = vmatpush1.bf16.msra.mxu0 0
        %3045 = vmatprep.subr.bf16.mxu0 0
        %3046 = vmatpush1.bf16.msra.mxu0 0
        %3047 = vmatprep.subr.bf16.mxu0 0
        %3048 = vmatpush1.bf16.msra.mxu0 0
        %3049 = vmatprep.subr.bf16.mxu0 0
        %3050 = vmatpush1.bf16.msra.mxu0 0
        %3051 = vmatprep.subr.bf16.mxu0 0
        %3052 = vmatpush1.bf16.msra.mxu0 %v2748
        %3053 = vmatprep.subr.bf16.mxu0 0
        %3054 = vmatpush2.bf16.msra.mxu0 0
        %3055 = vmatprep.subr.bf16.mxu0 0
        %3056 = vmatpush2.bf16.msra.mxu0 0
        %3057 = vmatprep.subr.bf16.mxu0 0
        %3058 = vmatpush2.bf16.msra.mxu0 0
        %3059 = vmatprep.subr.bf16.mxu0 0
        %3060 = vmatpush2.bf16.msra.mxu0 0
        %3061 = vmatprep.subr.bf16.mxu0 0
        %3062 = vmatpush2.bf16.msra.mxu0 0
        %3063 = vmatprep.subr.bf16.mxu0 0
        %3064 = vmatpush2.bf16.msra.mxu0 0
        %3065 = vmatprep.subr.bf16.mxu0 0
        %3066 = vmatpush2.bf16.msra.mxu0 0
        %3067 = vmatprep.subr.bf16.mxu0 0
        %3068 = vmatpush2.bf16.msra.mxu0 0
        %3069 = vmatprep.mubr.bf16.mxu0 0
        %3070 = vmatmul.mubr.bf16.gmra.mxu0 %v3035
        %v3071 = vpop.f32.mrf.mxu0
        %v3072 = vadd.f32 0.0, %v3071
        %v3073 = vpop.f32.mrf.mxu0
        %v3074 = vpop.f32.mrf.mxu0
        %v3075 = vadd.f32 0.0, %v3074
        %v3076 = vpop.f32.mrf.mxu0
        %3077 = vdwg.mxu0
        %v3079 = vsel %vm2941, %v3031, 0
        %3081 = vmatprep.subr.bf16.mxu0 0
        %3082 = vmatpush1.bf16.msra.mxu0 0
        %3083 = vmatprep.subr.bf16.mxu0 0
        %3084 = vmatpush1.bf16.msra.mxu0 0
        %3085 = vmatprep.subr.bf16.mxu0 0
        %3086 = vmatpush1.bf16.msra.mxu0 0
        %3087 = vmatprep.subr.bf16.mxu0 0
        %3088 = vmatpush1.bf16.msra.mxu0 0
        %3089 = vmatprep.subr.bf16.mxu0 0
        %3090 = vmatpush1.bf16.msra.mxu0 0
        %3091 = vmatprep.subr.bf16.mxu0 0
        %3092 = vmatpush1.bf16.msra.mxu0 0
        %3093 = vmatprep.subr.bf16.mxu0 0
        %3094 = vmatpush1.bf16.msra.mxu0 0
        %3095 = vmatprep.subr.bf16.mxu0 0
        %3096 = vmatpush1.bf16.msra.mxu0 %v2749
        %3097 = vmatprep.subr.bf16.mxu0 0
        %3098 = vmatpush2.bf16.msra.mxu0 0
        %3099 = vmatprep.subr.bf16.mxu0 0
        %3100 = vmatpush2.bf16.msra.mxu0 0
        %3101 = vmatprep.subr.bf16.mxu0 0
        %3102 = vmatpush2.bf16.msra.mxu0 0
        %3103 = vmatprep.subr.bf16.mxu0 0
        %3104 = vmatpush2.bf16.msra.mxu0 0
        %3105 = vmatprep.subr.bf16.mxu0 0
        %3106 = vmatpush2.bf16.msra.mxu0 0
        %3107 = vmatprep.subr.bf16.mxu0 0
        %3108 = vmatpush2.bf16.msra.mxu0 0
        %3109 = vmatprep.subr.bf16.mxu0 0
        %3110 = vmatpush2.bf16.msra.mxu0 0
        %3111 = vmatprep.subr.bf16.mxu0 0
        %3112 = vmatpush2.bf16.msra.mxu0 0
        %3113 = vmatprep.mubr.bf16.mxu0 0
        %3114 = vmatmul.mubr.bf16.gmra.mxu0 %v3079
        %v3115 = vpop.f32.mrf.mxu0
        %v3116 = vadd.f32 0.0, %v3115
        %v3117 = vpop.f32.mrf.mxu0
        %v3118 = vpop.f32.mrf.mxu0
        %v3119 = vadd.f32 0.0, %v3118
        %v3120 = vpop.f32.mrf.mxu0
        %3121 = vdwg.mxu0
        %v3123 = vsel %vm2941, %v3032, 0
        %3125 = vmatprep.subr.bf16.mxu0 0
        %3126 = vmatpush1.bf16.msra.mxu0 0
        %3127 = vmatprep.subr.bf16.mxu0 0
        %3128 = vmatpush1.bf16.msra.mxu0 0
        %3129 = vmatprep.subr.bf16.mxu0 0
        %3130 = vmatpush1.bf16.msra.mxu0 0
        %3131 = vmatprep.subr.bf16.mxu0 0
        %3132 = vmatpush1.bf16.msra.mxu0 0
        %3133 = vmatprep.subr.bf16.mxu0 0
        %3134 = vmatpush1.bf16.msra.mxu0 0
        %3135 = vmatprep.subr.bf16.mxu0 0
        %3136 = vmatpush1.bf16.msra.mxu0 0
        %3137 = vmatprep.subr.bf16.mxu0 0
        %3138 = vmatpush1.bf16.msra.mxu0 0
        %3139 = vmatprep.subr.bf16.mxu0 0
        %3140 = vmatpush1.bf16.msra.mxu0 %v2750
        %3141 = vmatprep.subr.bf16.mxu0 0
        %3142 = vmatpush2.bf16.msra.mxu0 0
        %3143 = vmatprep.subr.bf16.mxu0 0
        %3144 = vmatpush2.bf16.msra.mxu0 0
        %3145 = vmatprep.subr.bf16.mxu0 0
        %3146 = vmatpush2.bf16.msra.mxu0 0
        %3147 = vmatprep.subr.bf16.mxu0 0
        %3148 = vmatpush2.bf16.msra.mxu0 0
        %3149 = vmatprep.subr.bf16.mxu0 0
        %3150 = vmatpush2.bf16.msra.mxu0 0
        %3151 = vmatprep.subr.bf16.mxu0 0
        %3152 = vmatpush2.bf16.msra.mxu0 0
        %3153 = vmatprep.subr.bf16.mxu0 0
        %3154 = vmatpush2.bf16.msra.mxu0 0
        %3155 = vmatprep.subr.bf16.mxu0 0
        %3156 = vmatpush2.bf16.msra.mxu0 0
        %3157 = vmatprep.mubr.bf16.mxu0 0
        %3158 = vmatmul.mubr.bf16.gmra.mxu0 %v3123
        %v3159 = vpop.f32.mrf.mxu0
        %v3160 = vadd.f32 0.0, %v3159
        %v3161 = vpop.f32.mrf.mxu0
        %v3162 = vpop.f32.mrf.mxu0
        %v3163 = vadd.f32 0.0, %v3162
        %v3164 = vpop.f32.mrf.mxu0
        %3165 = vdwg.mxu0
        %v3167 = vsel %vm2941, %v3033, 0
        %3169 = vmatprep.subr.bf16.mxu0 0
        %3170 = vmatpush1.bf16.msra.mxu0 0
        %3171 = vmatprep.subr.bf16.mxu0 0
        %3172 = vmatpush1.bf16.msra.mxu0 0
        %3173 = vmatprep.subr.bf16.mxu0 0
        %3174 = vmatpush1.bf16.msra.mxu0 0
        %3175 = vmatprep.subr.bf16.mxu0 0
        %3176 = vmatpush1.bf16.msra.mxu0 0
        %3177 = vmatprep.subr.bf16.mxu0 0
        %3178 = vmatpush1.bf16.msra.mxu0 0
        %3179 = vmatprep.subr.bf16.mxu0 0
        %3180 = vmatpush1.bf16.msra.mxu0 0
        %3181 = vmatprep.subr.bf16.mxu0 0
        %3182 = vmatpush1.bf16.msra.mxu0 0
        %3183 = vmatprep.subr.bf16.mxu0 0
        %3184 = vmatpush1.bf16.msra.mxu0 %v2751
        %3185 = vmatprep.subr.bf16.mxu0 0
        %3186 = vmatpush2.bf16.msra.mxu0 0
        %3187 = vmatprep.subr.bf16.mxu0 0
        %3188 = vmatpush2.bf16.msra.mxu0 0
        %3189 = vmatprep.subr.bf16.mxu0 0
        %3190 = vmatpush2.bf16.msra.mxu0 0
        %3191 = vmatprep.subr.bf16.mxu0 0
        %3192 = vmatpush2.bf16.msra.mxu0 0
        %3193 = vmatprep.subr.bf16.mxu0 0
        %3194 = vmatpush2.bf16.msra.mxu0 0
        %3195 = vmatprep.subr.bf16.mxu0 0
        %3196 = vmatpush2.bf16.msra.mxu0 0
        %3197 = vmatprep.subr.bf16.mxu0 0
        %3198 = vmatpush2.bf16.msra.mxu0 0
        %3199 = vmatprep.subr.bf16.mxu0 0
        %3200 = vmatpush2.bf16.msra.mxu0 0
        %3201 = vmatprep.mubr.bf16.mxu0 0
        %3202 = vmatmul.mubr.bf16.gmra.mxu0 %v3167
        %v3203 = vpop.f32.mrf.mxu0
        %v3204 = vadd.f32 0.0, %v3203
        %v3205 = vpop.f32.mrf.mxu0
        %v3206 = vpop.f32.mrf.mxu0
        %v3207 = vadd.f32 0.0, %v3206
        %v3208 = vpop.f32.mrf.mxu0
        %3209 = vdwg.mxu0
        %v3210 = vcombine.low %v3072, %v3160
        %v3211 = vcombine.high %v3072, %v3160
        %v3213 = vunpack.c.l.s4 1983009808
        %v3214 = vunpack.c.0.s8 %v3213
        %v3215 = vlaneseq
        %v3216 = vshrl.u32 %v3215, 7
        %v3217 = vsub.s32 %v3214, %v3216
        %v3218 = vrot.slane %v3210, %v3217
        %v3220 = vunpack.c.l.s4 1983009808
        %v3221 = vunpack.c.0.s8 %v3220
        %v3222 = vlaneseq
        %v3223 = vshrl.u32 %v3222, 7
        %v3224 = vsub.s32 %v3221, %v3223
        %v3225 = vrot.slane %v3211, %v3224
        %v3226 = vcombine.low %v3116, %v3204
        %v3227 = vcombine.high %v3116, %v3204
        %v3229 = vunpack.c.l.s4 1983009808
        %v3230 = vunpack.c.0.s8 %v3229
        %v3231 = vlaneseq
        %v3232 = vshrl.u32 %v3231, 7
        %v3233 = vsub.s32 %v3230, %v3232
        %v3234 = vrot.slane %v3226, %v3233
        %v3236 = vunpack.c.l.s4 1983009808
        %v3237 = vunpack.c.0.s8 %v3236
        %v3238 = vlaneseq
        %v3239 = vshrl.u32 %v3238, 7
        %v3240 = vsub.s32 %v3237, %v3239
        %v3241 = vrot.slane %v3227, %v3240
        %v3242 = vcombine.low %v3218, %v3234
        %v3243 = vcombine.high %v3218, %v3234
        %v3245 = vunpack.c.l.s4 1934713408
        %v3246 = vunpack.c.0.s8 %v3245
        %v3247 = vlaneseq
        %v3248 = vshrl.u32 %v3247, 7
        %v3249 = vsub.s32 %v3246, %v3248
        %v3250 = vrot.slane %v3242, %v3249
        %v3252 = vunpack.c.l.s4 1934713408
        %v3253 = vunpack.c.0.s8 %v3252
        %v3254 = vlaneseq
        %v3255 = vshrl.u32 %v3254, 7
        %v3256 = vsub.s32 %v3253, %v3255
        %v3257 = vrot.slane %v3243, %v3256
        %v3258 = vcombine.low %v3225, %v3241
        %v3259 = vcombine.high %v3225, %v3241
        %v3261 = vunpack.c.l.s4 1934713408
        %v3262 = vunpack.c.0.s8 %v3261
        %v3263 = vlaneseq
        %v3264 = vshrl.u32 %v3263, 7
        %v3265 = vsub.s32 %v3262, %v3264
        %v3266 = vrot.slane %v3258, %v3265
        %v3268 = vunpack.c.l.s4 1934713408
        %v3269 = vunpack.c.0.s8 %v3268
        %v3270 = vlaneseq
        %v3271 = vshrl.u32 %v3270, 7
        %v3272 = vsub.s32 %v3269, %v3271
        %v3273 = vrot.slane %v3259, %v3272
        %v3274 = vcombine.high %v3250, 0.0
        %v3275 = vcombine.high %v3257, 0.0
        %v3276 = vcombine.high %v3266, 0.0
        %v3277 = vcombine.high %v3273, 0.0
        %v3278 = vcombine.low %v3075, %v3163
        %v3279 = vcombine.high %v3075, %v3163
        %v3281 = vunpack.c.l.s4 1983009808
        %v3282 = vunpack.c.0.s8 %v3281
        %v3283 = vlaneseq
        %v3284 = vshrl.u32 %v3283, 7
        %v3285 = vsub.s32 %v3282, %v3284
        %v3286 = vrot.slane %v3278, %v3285
        %v3288 = vunpack.c.l.s4 1983009808
        %v3289 = vunpack.c.0.s8 %v3288
        %v3290 = vlaneseq
        %v3291 = vshrl.u32 %v3290, 7
        %v3292 = vsub.s32 %v3289, %v3291
        %v3293 = vrot.slane %v3279, %v3292
        %v3294 = vcombine.low %v3119, %v3207
        %v3295 = vcombine.high %v3119, %v3207
        %v3297 = vunpack.c.l.s4 1983009808
        %v3298 = vunpack.c.0.s8 %v3297
        %v3299 = vlaneseq
        %v3300 = vshrl.u32 %v3299, 7
        %v3301 = vsub.s32 %v3298, %v3300
        %v3302 = vrot.slane %v3294, %v3301
        %v3304 = vunpack.c.l.s4 1983009808
        %v3305 = vunpack.c.0.s8 %v3304
        %v3306 = vlaneseq
        %v3307 = vshrl.u32 %v3306, 7
        %v3308 = vsub.s32 %v3305, %v3307
        %v3309 = vrot.slane %v3295, %v3308
        %v3310 = vcombine.low %v3286, %v3302
        %v3311 = vcombine.high %v3286, %v3302
        %v3313 = vunpack.c.l.s4 1934713408
        %v3314 = vunpack.c.0.s8 %v3313
        %v3315 = vlaneseq
        %v3316 = vshrl.u32 %v3315, 7
        %v3317 = vsub.s32 %v3314, %v3316
        %v3318 = vrot.slane %v3310, %v3317
        %v3320 = vunpack.c.l.s4 1934713408
        %v3321 = vunpack.c.0.s8 %v3320
        %v3322 = vlaneseq
        %v3323 = vshrl.u32 %v3322, 7
        %v3324 = vsub.s32 %v3321, %v3323
        %v3325 = vrot.slane %v3311, %v3324
        %v3326 = vcombine.low %v3293, %v3309
        %v3327 = vcombine.high %v3293, %v3309
        %v3329 = vunpack.c.l.s4 1934713408
        %v3330 = vunpack.c.0.s8 %v3329
        %v3331 = vlaneseq
        %v3332 = vshrl.u32 %v3331, 7
        %v3333 = vsub.s32 %v3330, %v3332
        %v3334 = vrot.slane %v3326, %v3333
        %v3336 = vunpack.c.l.s4 1934713408
        %v3337 = vunpack.c.0.s8 %v3336
        %v3338 = vlaneseq
        %v3339 = vshrl.u32 %v3338, 7
        %v3340 = vsub.s32 %v3337, %v3339
        %v3341 = vrot.slane %v3327, %v3340
        %v3342 = vcombine.high %v3318, 0.0
        %v3343 = vcombine.high %v3325, 0.0
        %v3344 = vcombine.high %v3334, 0.0
        %v3345 = vcombine.high %v3341, 0.0
        %v3346 = vcombine.low %v3250, %v3257
        %v3348 = vunpack.c.l.s4 1983009808
        %v3349 = vunpack.c.0.s8 %v3348
        %v3350 = vlaneseq
        %v3351 = vshrl.u32 %v3350, 7
        %v3352 = vsub.s32 %v3349, %v3351
        %v3353 = vrot.slane %v3346, %v3352
        %v3354 = vcombine.low %v3274, %v3275
        %v3356 = vunpack.c.l.s4 1983009808
        %v3357 = vunpack.c.0.s8 %v3356
        %v3358 = vlaneseq
        %v3359 = vshrl.u32 %v3358, 7
        %v3360 = vsub.s32 %v3357, %v3359
        %v3361 = vrot.slane %v3354, %v3360
        %v3362 = vcombine.low %v3266, %v3273
        %v3364 = vunpack.c.l.s4 1983009808
        %v3365 = vunpack.c.0.s8 %v3364
        %v3366 = vlaneseq
        %v3367 = vshrl.u32 %v3366, 7
        %v3368 = vsub.s32 %v3365, %v3367
        %v3369 = vrot.slane %v3362, %v3368
        %v3370 = vcombine.low %v3276, %v3277
        %v3372 = vunpack.c.l.s4 1983009808
        %v3373 = vunpack.c.0.s8 %v3372
        %v3374 = vlaneseq
        %v3375 = vshrl.u32 %v3374, 7
        %v3376 = vsub.s32 %v3373, %v3375
        %v3377 = vrot.slane %v3370, %v3376
        %v3378 = vcombine.low %v3353, %v3361
        %v3379 = vcombine.high %v3353, %v3361
        %v3381 = vunpack.c.l.s4 1934713408
        %v3382 = vunpack.c.0.s8 %v3381
        %v3383 = vlaneseq
        %v3384 = vshrl.u32 %v3383, 7
        %v3385 = vsub.s32 %v3382, %v3384
        %v3386 = vrot.slane %v3378, %v3385
        %v3388 = vunpack.c.l.s4 1934713408
        %v3389 = vunpack.c.0.s8 %v3388
        %v3390 = vlaneseq
        %v3391 = vshrl.u32 %v3390, 7
        %v3392 = vsub.s32 %v3389, %v3391
        %v3393 = vrot.slane %v3379, %v3392
        %v3394 = vcombine.low %v3369, %v3377
        %v3395 = vcombine.high %v3369, %v3377
        %v3397 = vunpack.c.l.s4 1934713408
        %v3398 = vunpack.c.0.s8 %v3397
        %v3399 = vlaneseq
        %v3400 = vshrl.u32 %v3399, 7
        %v3401 = vsub.s32 %v3398, %v3400
        %v3402 = vrot.slane %v3394, %v3401
        %v3404 = vunpack.c.l.s4 1934713408
        %v3405 = vunpack.c.0.s8 %v3404
        %v3406 = vlaneseq
        %v3407 = vshrl.u32 %v3406, 7
        %v3408 = vsub.s32 %v3405, %v3407
        %v3409 = vrot.slane %v3395, %v3408
        %v3410 = vcombine.low %v3386, %v3402
        %v3411 = vcombine.high %v3386, %v3402
        %v3412 = vcombine.low %v3393, %v3409
        %v3413 = vcombine.high %v3393, %v3409
        %v3414 = vcombine.low %v3318, %v3325
        %v3416 = vunpack.c.l.s4 1983009808
        %v3417 = vunpack.c.0.s8 %v3416
        %v3418 = vlaneseq
        %v3419 = vshrl.u32 %v3418, 7
        %v3420 = vsub.s32 %v3417, %v3419
        %v3421 = vrot.slane %v3414, %v3420
        %v3422 = vcombine.low %v3342, %v3343
        %v3424 = vunpack.c.l.s4 1983009808
        %v3425 = vunpack.c.0.s8 %v3424
        %v3426 = vlaneseq
        %v3427 = vshrl.u32 %v3426, 7
        %v3428 = vsub.s32 %v3425, %v3427
        %v3429 = vrot.slane %v3422, %v3428
        %v3430 = vcombine.low %v3334, %v3341
        %v3432 = vunpack.c.l.s4 1983009808
        %v3433 = vunpack.c.0.s8 %v3432
        %v3434 = vlaneseq
        %v3435 = vshrl.u32 %v3434, 7
        %v3436 = vsub.s32 %v3433, %v3435
        %v3437 = vrot.slane %v3430, %v3436
        %v3438 = vcombine.low %v3344, %v3345
        %v3440 = vunpack.c.l.s4 1983009808
        %v3441 = vunpack.c.0.s8 %v3440
        %v3442 = vlaneseq
        %v3443 = vshrl.u32 %v3442, 7
        %v3444 = vsub.s32 %v3441, %v3443
        %v3445 = vrot.slane %v3438, %v3444
        %v3446 = vcombine.low %v3421, %v3429
        %v3447 = vcombine.high %v3421, %v3429
        %v3449 = vunpack.c.l.s4 1934713408
        %v3450 = vunpack.c.0.s8 %v3449
        %v3451 = vlaneseq
        %v3452 = vshrl.u32 %v3451, 7
        %v3453 = vsub.s32 %v3450, %v3452
        %v3454 = vrot.slane %v3446, %v3453
        %v3456 = vunpack.c.l.s4 1934713408
        %v3457 = vunpack.c.0.s8 %v3456
        %v3458 = vlaneseq
        %v3459 = vshrl.u32 %v3458, 7
        %v3460 = vsub.s32 %v3457, %v3459
        %v3461 = vrot.slane %v3447, %v3460
        %v3462 = vcombine.low %v3437, %v3445
        %v3463 = vcombine.high %v3437, %v3445
        %v3465 = vunpack.c.l.s4 1934713408
        %v3466 = vunpack.c.0.s8 %v3465
        %v3467 = vlaneseq
        %v3468 = vshrl.u32 %v3467, 7
        %v3469 = vsub.s32 %v3466, %v3468
        %v3470 = vrot.slane %v3462, %v3469
        %v3472 = vunpack.c.l.s4 1934713408
        %v3473 = vunpack.c.0.s8 %v3472
        %v3474 = vlaneseq
        %v3475 = vshrl.u32 %v3474, 7
        %v3476 = vsub.s32 %v3473, %v3475
        %v3477 = vrot.slane %v3463, %v3476
        %v3478 = vcombine.low %v3454, %v3470
        %v3479 = vcombine.high %v3454, %v3470
        %v3480 = vcombine.low %v3461, %v3477
        %v3481 = vcombine.high %v3461, %v3477
        %3484 = vrot.lane.b32.xlu0 %v3411, 32
        %v3485 = vpop.permute.xlu0 %3484
        %3486 = vrot.lane.b32.xlu0 %v3479, 32
        %v3487 = vpop.permute.xlu0 %3486
        %3492 = vrot.lane.b32.xlu0 %v3412, 64
        %v3493 = vpop.permute.xlu0 %3492
        %3494 = vrot.lane.b32.xlu0 %v3480, 64
        %v3495 = vpop.permute.xlu0 %3494
        %3500 = vrot.lane.b32.xlu0 %v3413, 96
        %v3501 = vpop.permute.xlu0 %3500
        %3502 = vrot.lane.b32.xlu0 %v3481, 96
        %v3503 = vpop.permute.xlu0 %3502
        %v3506 = vsel %vm2752, %v3410, %v3485
        %v3507 = vsel %vm2752, %v3478, %v3487
        %vm3508 = vcmask 523264
        %v3509 = vsel %vm3508, %v3506, %v3493
        %v3510 = vsel %vm3508, %v3507, %v3495
        %vm3511 = vcmask 785408
        %v3512 = vsel %vm3511, %v3509, %v3501
        %v3513 = vsel %vm3511, %v3510, %v3503
        %v3514 = vld [vmem:[%s1537] sm:$0xf]
        %v3515 = vld [vmem:[%s1537 + $0x4] sm:$0xf]
        %v3516 = vld [vmem:[%s1537 + $0x8] sm:$0xf]
        %v3517 = vld [vmem:[%s1537 + $0xc] sm:$0xf]
        %v3518 = vld [vmem:[%s1537 + $0x10] sm:$0xf]
        %v3519 = vld [vmem:[%s1537 + $0x14] sm:$0xf]
        %v3520 = vld [vmem:[%s1537 + $0x18] sm:$0xf]
        %v3521 = vld [vmem:[%s1537 + $0x1c] sm:$0xf]
        %v3522 = vld [vmem:[%s1537 + $0x20] sm:$0xf]
        %v3523 = vld [vmem:[%s1537 + $0x24] sm:$0xf]
        %v3524 = vld [vmem:[%s1537 + $0x28] sm:$0xf]
        %v3525 = vld [vmem:[%s1537 + $0x2c] sm:$0xf]
        %v3526 = vld [vmem:[%s1537 + $0x30] sm:$0xf]
        %v3527 = vld [vmem:[%s1537 + $0x34] sm:$0xf]
        %v3528 = vld [vmem:[%s1537 + $0x38] sm:$0xf]
        %v3529 = vld [vmem:[%s1537 + $0x3c] sm:$0xf]
        %v3530 = vpack.c.bf16 %v3513, %v3512
        %v3531 = vld [vmem:[%s1228] sm:$0x1]
        %v3533 = vlaneseq
        %v3534 = vshrl.u32 %v3533, 7
        %v3535 = vsub.s32 0, %v3534
        %v3536 = vrot.slane %v3531, %v3535
        %v3554 = vunpack.c.l.b16 %v3514
        %v3555 = vunpack.c.l.b16 %v3515
        %v3556 = vunpack.c.l.b16 %v3516
        %v3557 = vunpack.c.l.b16 %v3517
        %v3558 = vunpack.c.l.b16 %v3518
        %v3559 = vunpack.c.l.b16 %v3519
        %v3560 = vunpack.c.l.b16 %v3520
        %v3561 = vunpack.c.l.b16 %v3521
        %v3562 = vunpack.c.l.b16 %v3522
        %v3563 = vunpack.c.l.b16 %v3523
        %v3564 = vunpack.c.l.b16 %v3524
        %v3565 = vunpack.c.l.b16 %v3525
        %v3566 = vunpack.c.l.b16 %v3526
        %v3567 = vunpack.c.l.b16 %v3527
        %v3568 = vunpack.c.l.b16 %v3528
        %v3569 = vunpack.c.l.b16 %v3529
        %v3570 = vpack.c.b16 %v3555, %v3554
        %v3571 = vpack.c.b16 %v3557, %v3556
        %v3572 = vpack.c.b16 %v3559, %v3558
        %v3573 = vpack.c.b16 %v3561, %v3560
        %v3574 = vpack.c.b16 %v3563, %v3562
        %v3575 = vpack.c.b16 %v3565, %v3564
        %v3576 = vpack.c.b16 %v3567, %v3566
        %v3577 = vpack.c.b16 %v3569, %v3568
        %3586 = vmatprep.subr.bf16.mxu0 0
        %3587 = vmatpush1.bf16.msra.mxu0 %v3577
        %3588 = vmatprep.subr.bf16.mxu0 0
        %3589 = vmatpush1.bf16.msra.mxu0 %v3576
        %3590 = vmatprep.subr.bf16.mxu0 0
        %3591 = vmatpush1.bf16.msra.mxu0 %v3575
        %3592 = vmatprep.subr.bf16.mxu0 0
        %3593 = vmatpush1.bf16.msra.mxu0 %v3574
        %3594 = vmatprep.subr.bf16.mxu0 0
        %3595 = vmatpush1.bf16.msra.mxu0 %v3573
        %3596 = vmatprep.subr.bf16.mxu0 0
        %3597 = vmatpush1.bf16.msra.mxu0 %v3572
        %3598 = vmatprep.subr.bf16.mxu0 0
        %3599 = vmatpush1.bf16.msra.mxu0 %v3571
        %3600 = vmatprep.subr.bf16.mxu0 0
        %3601 = vmatpush1.bf16.msra.mxu0 %v3570
        %3602 = vmatprep.subr.bf16.mxu0 0
        %3603 = vmatpush2.bf16.msra.mxu0 0
        %3604 = vmatprep.subr.bf16.mxu0 0
        %3605 = vmatpush2.bf16.msra.mxu0 0
        %3606 = vmatprep.subr.bf16.mxu0 0
        %3607 = vmatpush2.bf16.msra.mxu0 0
        %3608 = vmatprep.subr.bf16.mxu0 0
        %3609 = vmatpush2.bf16.msra.mxu0 0
        %3610 = vmatprep.subr.bf16.mxu0 0
        %3611 = vmatpush2.bf16.msra.mxu0 0
        %3612 = vmatprep.subr.bf16.mxu0 0
        %3613 = vmatpush2.bf16.msra.mxu0 0
        %3614 = vmatprep.subr.bf16.mxu0 0
        %3615 = vmatpush2.bf16.msra.mxu0 0
        %3616 = vmatprep.subr.bf16.mxu0 0
        %3617 = vmatpush2.bf16.msra.mxu0 0
        %3618 = vmatprep.mubr.bf16.mxu0 0
        %3619 = vmatmul.mubr.bf16.gmra.mxu0 %v3530
        %v3620 = vpop.f32.mrf.mxu0
        %v3621 = vadd.f32 %v3536, %v3620
        %v3622 = vpop.f32.mrf.mxu0
        %v3623 = vpop.f32.mrf.mxu0
        %v3624 = vadd.f32 %v3536, %v3623
        %v3625 = vpop.f32.mrf.mxu0
        %3626 = vdwg.mxu0
        %v3627 = vadd.f32 %v1551, %v3621
        %v3628 = vadd.f32 %v1552, %v3624
        %v3629 = vld [vmem:[%s1236] sm:$0x1]
        %v3630 = vld [vmem:[%s1244] sm:$0x1]
        %3631 = vadd.xlane.f32.xlu0 %v3627
        %v3632 = vpop.xlane.xlu0 %3631
        %3633 = vadd.xlane.f32.xlu0 %v3628
        %v3634 = vpop.xlane.xlu0 %3633
        %v3635 = vmul.f32 %v3632, %v1565
        %v3636 = vmul.f32 %v3634, %v1565
        %v3637 = vsub.f32 %v3627, %v3635
        %v3638 = vsub.f32 %v3628, %v3636
        %v3639 = vmul.f32 %v3637, %v3637
        %v3640 = vmul.f32 %v3638, %v3638
        %3641 = vadd.xlane.f32.xlu0 %v3639
        %v3642 = vpop.xlane.xlu0 %3641
        %3643 = vadd.xlane.f32.xlu0 %v3640
        %v3644 = vpop.xlane.xlu0 %3643
        %v3645 = vmul.f32 %v3642, %v1565
        %v3646 = vmul.f32 %v3644, %v1565
        %v3647 = vadd.f32 %v3645, 1e-06
        %v3648 = vadd.f32 %v3646, 1e-06
        %v3649 = vrsqrt.pop %v3647
        %v3650 = vrsqrt.pop %v3648
        %v3651 = vmul.f32 %v3637, %v3649
        %v3652 = vmul.f32 %v3638, %v3650
        %v3654 = vlaneseq
        %v3655 = vshrl.u32 %v3654, 7
        %v3656 = vsub.s32 0, %v3655
        %v3657 = vrot.slane %v3629, %v3656
        %v3659 = vmul.f32 %v3651, %v3657
        %v3660 = vmul.f32 %v3652, %v3657
        %v3662 = vlaneseq
        %v3663 = vshrl.u32 %v3662, 7
        %v3664 = vsub.s32 0, %v3663
        %v3665 = vrot.slane %v3630, %v3664
        %v3667 = vadd.f32 %v3659, %v3665
        %v3668 = vadd.f32 %v3660, %v3665
        %v3669 = vld [vmem:[%s1253] sm:$0xf]
        %v3670 = vld [vmem:[%s1253 + $0x4] sm:$0xf]
        %v3671 = vld [vmem:[%s1253 + $0x8] sm:$0xf]
        %v3672 = vld [vmem:[%s1253 + $0xc] sm:$0xf]
        %v3673 = vld [vmem:[%s1253 + $0x10] sm:$0xf]
        %v3674 = vld [vmem:[%s1253 + $0x14] sm:$0xf]
        %v3675 = vld [vmem:[%s1253 + $0x18] sm:$0xf]
        %v3676 = vld [vmem:[%s1253 + $0x1c] sm:$0xf]
        %v3677 = vld [vmem:[%s1253 + $0x20] sm:$0xf]
        %v3678 = vld [vmem:[%s1253 + $0x24] sm:$0xf]
        %v3679 = vld [vmem:[%s1253 + $0x28] sm:$0xf]
        %v3680 = vld [vmem:[%s1253 + $0x2c] sm:$0xf]
        %v3681 = vld [vmem:[%s1253 + $0x30] sm:$0xf]
        %v3682 = vld [vmem:[%s1253 + $0x34] sm:$0xf]
        %v3683 = vld [vmem:[%s1253 + $0x38] sm:$0xf]
        %v3684 = vld [vmem:[%s1253 + $0x3c] sm:$0xf]
        %v3685 = vpack.c.bf16 %v3668, %v3667
        %v3686 = vld [vmem:[%s1261] sm:$0x1]
        %v3688 = vlaneseq
        %v3689 = vshrl.u32 %v3688, 7
        %v3690 = vsub.s32 0, %v3689
        %v3691 = vrot.slane %v3686, %v3690
        %v3709 = vunpack.c.l.b16 %v3669
        %v3710 = vunpack.c.l.b16 %v3670
        %v3711 = vunpack.c.l.b16 %v3671
        %v3712 = vunpack.c.l.b16 %v3672
        %v3713 = vunpack.c.l.b16 %v3673
        %v3714 = vunpack.c.l.b16 %v3674
        %v3715 = vunpack.c.l.b16 %v3675
        %v3716 = vunpack.c.l.b16 %v3676
        %v3717 = vunpack.c.l.b16 %v3677
        %v3718 = vunpack.c.l.b16 %v3678
        %v3719 = vunpack.c.l.b16 %v3679
        %v3720 = vunpack.c.l.b16 %v3680
        %v3721 = vunpack.c.l.b16 %v3681
        %v3722 = vunpack.c.l.b16 %v3682
        %v3723 = vunpack.c.l.b16 %v3683
        %v3724 = vunpack.c.l.b16 %v3684
        %v3725 = vpack.c.b16 %v3710, %v3709
        %v3726 = vpack.c.b16 %v3712, %v3711
        %v3727 = vpack.c.b16 %v3714, %v3713
        %v3728 = vpack.c.b16 %v3716, %v3715
        %v3729 = vpack.c.b16 %v3718, %v3717
        %v3730 = vpack.c.b16 %v3720, %v3719
        %v3731 = vpack.c.b16 %v3722, %v3721
        %v3732 = vpack.c.b16 %v3724, %v3723
        %3741 = vmatprep.subr.bf16.mxu0 0
        %3742 = vmatpush1.bf16.msra.mxu0 %v3732
        %3743 = vmatprep.subr.bf16.mxu0 0
        %3744 = vmatpush1.bf16.msra.mxu0 %v3731
        %3745 = vmatprep.subr.bf16.mxu0 0
        %3746 = vmatpush1.bf16.msra.mxu0 %v3730
        %3747 = vmatprep.subr.bf16.mxu0 0
        %3748 = vmatpush1.bf16.msra.mxu0 %v3729
        %3749 = vmatprep.subr.bf16.mxu0 0
        %3750 = vmatpush1.bf16.msra.mxu0 %v3728
        %3751 = vmatprep.subr.bf16.mxu0 0
        %3752 = vmatpush1.bf16.msra.mxu0 %v3727
        %3753 = vmatprep.subr.bf16.mxu0 0
        %3754 = vmatpush1.bf16.msra.mxu0 %v3726
        %3755 = vmatprep.subr.bf16.mxu0 0
        %3756 = vmatpush1.bf16.msra.mxu0 %v3725
        %3757 = vmatprep.subr.bf16.mxu0 0
        %3758 = vmatpush2.bf16.msra.mxu0 0
        %3759 = vmatprep.subr.bf16.mxu0 0
        %3760 = vmatpush2.bf16.msra.mxu0 0
        %3761 = vmatprep.subr.bf16.mxu0 0
        %3762 = vmatpush2.bf16.msra.mxu0 0
        %3763 = vmatprep.subr.bf16.mxu0 0
        %3764 = vmatpush2.bf16.msra.mxu0 0
        %3765 = vmatprep.subr.bf16.mxu0 0
        %3766 = vmatpush2.bf16.msra.mxu0 0
        %3767 = vmatprep.subr.bf16.mxu0 0
        %3768 = vmatpush2.bf16.msra.mxu0 0
        %3769 = vmatprep.subr.bf16.mxu0 0
        %3770 = vmatpush2.bf16.msra.mxu0 0
        %3771 = vmatprep.subr.bf16.mxu0 0
        %3772 = vmatpush2.bf16.msra.mxu0 0
        %3773 = vmatprep.mubr.bf16.mxu0 0
        %3774 = vmatmul.mubr.bf16.gmra.mxu0 %v3685
        %v3775 = vpop.f32.mrf.mxu0
        %v3776 = vadd.f32 %v3691, %v3775
        %v3777 = vpop.f32.mrf.mxu0
        %v3778 = vpop.f32.mrf.mxu0
        %v3779 = vadd.f32 %v3691, %v3778
        %v3780 = vpop.f32.mrf.mxu0
        %3781 = vdwg.mxu0
        %v3782 = vmul.f32 %v3776, 0.17677669
        %v3783 = vmul.f32 %v3779, 0.17677669
        %v3784 = vld [vmem:[%s1270] sm:$0xff]
        %v3785 = vld [vmem:[%s1270 + $0x8] sm:$0xff]
        %v3786 = vld [vmem:[%s1270 + $0x10] sm:$0xff]
        %v3787 = vld [vmem:[%s1270 + $0x18] sm:$0xff]
        %v3788 = vld [vmem:[%s1270 + $0x20] sm:$0xff]
        %v3789 = vld [vmem:[%s1270 + $0x28] sm:$0xff]
        %v3790 = vld [vmem:[%s1270 + $0x30] sm:$0xff]
        %v3791 = vld [vmem:[%s1270 + $0x38] sm:$0xff]
        %v3792 = vld [vmem:[%s1270 + $0x40] sm:$0xff]
        %v3793 = vld [vmem:[%s1270 + $0x48] sm:$0xff]
        %v3794 = vld [vmem:[%s1270 + $0x50] sm:$0xff]
        %v3795 = vld [vmem:[%s1270 + $0x58] sm:$0xff]
        %v3796 = vld [vmem:[%s1270 + $0x60] sm:$0xff]
        %v3797 = vld [vmem:[%s1270 + $0x68] sm:$0xff]
        %v3798 = vld [vmem:[%s1270 + $0x70] sm:$0xff]
        %v3799 = vld [vmem:[%s1270 + $0x78] sm:$0xff]
        %v3800 = vpack.c.bf16 %v1554, %v1553
        %v3801 = vld [vmem:[%s1541] sm:$0x3]
        %v3803 = vlaneseq
        %v3804 = vshrl.u32 %v3803, 7
        %v3805 = vsub.s32 0, %v3804
        %v3806 = vrot.slane %v3801, %v3805
        %v3807 = vlaneseq
        %v3808 = vshrl.u32 %v3807, 7
        %v3809 = vsub.s32 1, %v3808
        %v3810 = vrot.slane %v3801, %v3809
        %v3829 = vunpack.c.l.b16 %v3784
        %v3830 = vunpack.c.h.b16 %v3784
        %v3831 = vunpack.c.l.b16 %v3785
        %v3832 = vunpack.c.h.b16 %v3785
        %v3833 = vunpack.c.l.b16 %v3786
        %v3834 = vunpack.c.h.b16 %v3786
        %v3835 = vunpack.c.l.b16 %v3787
        %v3836 = vunpack.c.h.b16 %v3787
        %v3837 = vunpack.c.l.b16 %v3788
        %v3838 = vunpack.c.h.b16 %v3788
        %v3839 = vunpack.c.l.b16 %v3789
        %v3840 = vunpack.c.h.b16 %v3789
        %v3841 = vunpack.c.l.b16 %v3790
        %v3842 = vunpack.c.h.b16 %v3790
        %v3843 = vunpack.c.l.b16 %v3791
        %v3844 = vunpack.c.h.b16 %v3791
        %v3845 = vunpack.c.l.b16 %v3792
        %v3846 = vunpack.c.h.b16 %v3792
        %v3847 = vunpack.c.l.b16 %v3793
        %v3848 = vunpack.c.h.b16 %v3793
        %v3849 = vunpack.c.l.b16 %v3794
        %v3850 = vunpack.c.h.b16 %v3794
        %v3851 = vunpack.c.l.b16 %v3795
        %v3852 = vunpack.c.h.b16 %v3795
        %v3853 = vunpack.c.l.b16 %v3796
        %v3854 = vunpack.c.h.b16 %v3796
        %v3855 = vunpack.c.l.b16 %v3797
        %v3856 = vunpack.c.h.b16 %v3797
        %v3857 = vunpack.c.l.b16 %v3798
        %v3858 = vunpack.c.h.b16 %v3798
        %v3859 = vunpack.c.l.b16 %v3799
        %v3860 = vunpack.c.h.b16 %v3799
        %v3861 = vpack.c.b16 %v3831, %v3829
        %v3862 = vpack.c.b16 %v3832, %v3830
        %v3863 = vpack.c.b16 %v3835, %v3833
        %v3864 = vpack.c.b16 %v3836, %v3834
        %v3865 = vpack.c.b16 %v3839, %v3837
        %v3866 = vpack.c.b16 %v3840, %v3838
        %v3867 = vpack.c.b16 %v3843, %v3841
        %v3868 = vpack.c.b16 %v3844, %v3842
        %v3869 = vpack.c.b16 %v3847, %v3845
        %v3870 = vpack.c.b16 %v3848, %v3846
        %v3871 = vpack.c.b16 %v3851, %v3849
        %v3872 = vpack.c.b16 %v3852, %v3850
        %v3873 = vpack.c.b16 %v3855, %v3853
        %v3874 = vpack.c.b16 %v3856, %v3854
        %v3875 = vpack.c.b16 %v3859, %v3857
        %v3876 = vpack.c.b16 %v3860, %v3858
        %3893 = vmatprep.subr.bf16.mxu0 %v3876
        %3894 = vmatpush1.bf16.msra.mxu0 %v3875
        %3895 = vmatprep.subr.bf16.mxu0 %v3874
        %3896 = vmatpush1.bf16.msra.mxu0 %v3873
        %3897 = vmatprep.subr.bf16.mxu0 %v3872
        %3898 = vmatpush1.bf16.msra.mxu0 %v3871
        %3899 = vmatprep.subr.bf16.mxu0 %v3870
        %3900 = vmatpush1.bf16.msra.mxu0 %v3869
        %3901 = vmatprep.subr.bf16.mxu0 %v3868
        %3902 = vmatpush1.bf16.msra.mxu0 %v3867
        %3903 = vmatprep.subr.bf16.mxu0 %v3866
        %3904 = vmatpush1.bf16.msra.mxu0 %v3865
        %3905 = vmatprep.subr.bf16.mxu0 %v3864
        %3906 = vmatpush1.bf16.msra.mxu0 %v3863
        %3907 = vmatprep.subr.bf16.mxu0 %v3862
        %3908 = vmatpush1.bf16.msra.mxu0 %v3861
        %3909 = vmatprep.subr.bf16.mxu0 0
        %3910 = vmatpush2.bf16.msra.mxu0 0
        %3911 = vmatprep.subr.bf16.mxu0 0
        %3912 = vmatpush2.bf16.msra.mxu0 0
        %3913 = vmatprep.subr.bf16.mxu0 0
        %3914 = vmatpush2.bf16.msra.mxu0 0
        %3915 = vmatprep.subr.bf16.mxu0 0
        %3916 = vmatpush2.bf16.msra.mxu0 0
        %3917 = vmatprep.subr.bf16.mxu0 0
        %3918 = vmatpush2.bf16.msra.mxu0 0
        %3919 = vmatprep.subr.bf16.mxu0 0
        %3920 = vmatpush2.bf16.msra.mxu0 0
        %3921 = vmatprep.subr.bf16.mxu0 0
        %3922 = vmatpush2.bf16.msra.mxu0 0
        %3923 = vmatprep.subr.bf16.mxu0 0
        %3924 = vmatpush2.bf16.msra.mxu0 0
        %3925 = vmatprep.mubr.bf16.mxu0 0
        %3926 = vmatmul.mubr.bf16.gmra.mxu0 %v3800
        %v3927 = vpop.f32.mrf.mxu0
        %v3928 = vadd.f32 %v3806, %v3927
        %v3929 = vpop.f32.mrf.mxu0
        %v3930 = vadd.f32 %v3810, %v3929
        %v3931 = vpop.f32.mrf.mxu0
        %v3932 = vadd.f32 %v3806, %v3931
        %v3933 = vpop.f32.mrf.mxu0
        %v3934 = vadd.f32 %v3810, %v3933
        %3935 = vdwg.mxu0
        %3938 = vrot.lane.b32.xlu0 %v3782, 96
        %v3939 = vpop.permute.xlu0 %3938
        %3940 = vrot.lane.b32.xlu0 %v3783, 96
        %v3941 = vpop.permute.xlu0 %3940
        %3944 = vrot.lane.b32.xlu0 %v3782, 64
        %v3945 = vpop.permute.xlu0 %3944
        %3946 = vrot.lane.b32.xlu0 %v3783, 64
        %v3947 = vpop.permute.xlu0 %3946
        %3950 = vrot.lane.b32.xlu0 %v3782, 32
        %v3951 = vpop.permute.xlu0 %3950
        %3952 = vrot.lane.b32.xlu0 %v3783, 32
        %v3953 = vpop.permute.xlu0 %3952
        %v3956 = vcombine.low %v3782, %v3945
        %v3957 = vcombine.high %v3782, %v3945
        %v3959 = vunpack.c.l.s4 1983009808
        %v3960 = vunpack.c.0.s8 %v3959
        %v3961 = vlaneseq
        %v3962 = vshrl.u32 %v3961, 7
        %v3963 = vsub.s32 %v3960, %v3962
        %v3964 = vrot.slane %v3956, %v3963
        %v3966 = vunpack.c.l.s4 1983009808
        %v3967 = vunpack.c.0.s8 %v3966
        %v3968 = vlaneseq
        %v3969 = vshrl.u32 %v3968, 7
        %v3970 = vsub.s32 %v3967, %v3969
        %v3971 = vrot.slane %v3957, %v3970
        %v3972 = vcombine.low %v3939, %v3951
        %v3973 = vcombine.high %v3939, %v3951
        %v3975 = vunpack.c.l.s4 1983009808
        %v3976 = vunpack.c.0.s8 %v3975
        %v3977 = vlaneseq
        %v3978 = vshrl.u32 %v3977, 7
        %v3979 = vsub.s32 %v3976, %v3978
        %v3980 = vrot.slane %v3972, %v3979
        %v3982 = vunpack.c.l.s4 1983009808
        %v3983 = vunpack.c.0.s8 %v3982
        %v3984 = vlaneseq
        %v3985 = vshrl.u32 %v3984, 7
        %v3986 = vsub.s32 %v3983, %v3985
        %v3987 = vrot.slane %v3973, %v3986
        %v3988 = vcombine.low %v3964, %v3980
        %v3989 = vcombine.high %v3964, %v3980
        %v3991 = vunpack.c.l.s4 1934713408
        %v3992 = vunpack.c.0.s8 %v3991
        %v3993 = vlaneseq
        %v3994 = vshrl.u32 %v3993, 7
        %v3995 = vsub.s32 %v3992, %v3994
        %v3996 = vrot.slane %v3988, %v3995
        %v3998 = vunpack.c.l.s4 1934713408
        %v3999 = vunpack.c.0.s8 %v3998
        %v4000 = vlaneseq
        %v4001 = vshrl.u32 %v4000, 7
        %v4002 = vsub.s32 %v3999, %v4001
        %v4003 = vrot.slane %v3989, %v4002
        %v4004 = vcombine.low %v3971, %v3987
        %v4005 = vcombine.high %v3971, %v3987
        %v4007 = vunpack.c.l.s4 1934713408
        %v4008 = vunpack.c.0.s8 %v4007
        %v4009 = vlaneseq
        %v4010 = vshrl.u32 %v4009, 7
        %v4011 = vsub.s32 %v4008, %v4010
        %v4012 = vrot.slane %v4004, %v4011
        %v4014 = vunpack.c.l.s4 1934713408
        %v4015 = vunpack.c.0.s8 %v4014
        %v4016 = vlaneseq
        %v4017 = vshrl.u32 %v4016, 7
        %v4018 = vsub.s32 %v4015, %v4017
        %v4019 = vrot.slane %v4005, %v4018
        %v4020 = vcombine.high %v3996, 0.0
        %v4021 = vcombine.high %v4003, 0.0
        %v4022 = vcombine.high %v4012, 0.0
        %v4023 = vcombine.high %v4019, 0.0
        %v4024 = vcombine.low %v3783, %v3947
        %v4025 = vcombine.high %v3783, %v3947
        %v4027 = vunpack.c.l.s4 1983009808
        %v4028 = vunpack.c.0.s8 %v4027
        %v4029 = vlaneseq
        %v4030 = vshrl.u32 %v4029, 7
        %v4031 = vsub.s32 %v4028, %v4030
        %v4032 = vrot.slane %v4024, %v4031
        %v4034 = vunpack.c.l.s4 1983009808
        %v4035 = vunpack.c.0.s8 %v4034
        %v4036 = vlaneseq
        %v4037 = vshrl.u32 %v4036, 7
        %v4038 = vsub.s32 %v4035, %v4037
        %v4039 = vrot.slane %v4025, %v4038
        %v4040 = vcombine.low %v3941, %v3953
        %v4041 = vcombine.high %v3941, %v3953
        %v4043 = vunpack.c.l.s4 1983009808
        %v4044 = vunpack.c.0.s8 %v4043
        %v4045 = vlaneseq
        %v4046 = vshrl.u32 %v4045, 7
        %v4047 = vsub.s32 %v4044, %v4046
        %v4048 = vrot.slane %v4040, %v4047
        %v4050 = vunpack.c.l.s4 1983009808
        %v4051 = vunpack.c.0.s8 %v4050
        %v4052 = vlaneseq
        %v4053 = vshrl.u32 %v4052, 7
        %v4054 = vsub.s32 %v4051, %v4053
        %v4055 = vrot.slane %v4041, %v4054
        %v4056 = vcombine.low %v4032, %v4048
        %v4057 = vcombine.high %v4032, %v4048
        %v4059 = vunpack.c.l.s4 1934713408
        %v4060 = vunpack.c.0.s8 %v4059
        %v4061 = vlaneseq
        %v4062 = vshrl.u32 %v4061, 7
        %v4063 = vsub.s32 %v4060, %v4062
        %v4064 = vrot.slane %v4056, %v4063
        %v4066 = vunpack.c.l.s4 1934713408
        %v4067 = vunpack.c.0.s8 %v4066
        %v4068 = vlaneseq
        %v4069 = vshrl.u32 %v4068, 7
        %v4070 = vsub.s32 %v4067, %v4069
        %v4071 = vrot.slane %v4057, %v4070
        %v4072 = vcombine.low %v4039, %v4055
        %v4073 = vcombine.high %v4039, %v4055
        %v4075 = vunpack.c.l.s4 1934713408
        %v4076 = vunpack.c.0.s8 %v4075
        %v4077 = vlaneseq
        %v4078 = vshrl.u32 %v4077, 7
        %v4079 = vsub.s32 %v4076, %v4078
        %v4080 = vrot.slane %v4072, %v4079
        %v4082 = vunpack.c.l.s4 1934713408
        %v4083 = vunpack.c.0.s8 %v4082
        %v4084 = vlaneseq
        %v4085 = vshrl.u32 %v4084, 7
        %v4086 = vsub.s32 %v4083, %v4085
        %v4087 = vrot.slane %v4073, %v4086
        %v4088 = vcombine.high %v4064, 0.0
        %v4089 = vcombine.high %v4071, 0.0
        %v4090 = vcombine.high %v4080, 0.0
        %v4091 = vcombine.high %v4087, 0.0
        %v4092 = vcombine.low %v3996, %v4003
        %v4094 = vunpack.c.l.s4 1983009808
        %v4095 = vunpack.c.0.s8 %v4094
        %v4096 = vlaneseq
        %v4097 = vshrl.u32 %v4096, 7
        %v4098 = vsub.s32 %v4095, %v4097
        %v4099 = vrot.slane %v4092, %v4098
        %v4100 = vcombine.low %v4020, %v4021
        %v4102 = vunpack.c.l.s4 1983009808
        %v4103 = vunpack.c.0.s8 %v4102
        %v4104 = vlaneseq
        %v4105 = vshrl.u32 %v4104, 7
        %v4106 = vsub.s32 %v4103, %v4105
        %v4107 = vrot.slane %v4100, %v4106
        %v4108 = vcombine.low %v4012, %v4019
        %v4110 = vunpack.c.l.s4 1983009808
        %v4111 = vunpack.c.0.s8 %v4110
        %v4112 = vlaneseq
        %v4113 = vshrl.u32 %v4112, 7
        %v4114 = vsub.s32 %v4111, %v4113
        %v4115 = vrot.slane %v4108, %v4114
        %v4116 = vcombine.low %v4022, %v4023
        %v4118 = vunpack.c.l.s4 1983009808
        %v4119 = vunpack.c.0.s8 %v4118
        %v4120 = vlaneseq
        %v4121 = vshrl.u32 %v4120, 7
        %v4122 = vsub.s32 %v4119, %v4121
        %v4123 = vrot.slane %v4116, %v4122
        %v4124 = vcombine.low %v4099, %v4107
        %v4125 = vcombine.high %v4099, %v4107
        %v4127 = vunpack.c.l.s4 1934713408
        %v4128 = vunpack.c.0.s8 %v4127
        %v4129 = vlaneseq
        %v4130 = vshrl.u32 %v4129, 7
        %v4131 = vsub.s32 %v4128, %v4130
        %v4132 = vrot.slane %v4124, %v4131
        %v4134 = vunpack.c.l.s4 1934713408
        %v4135 = vunpack.c.0.s8 %v4134
        %v4136 = vlaneseq
        %v4137 = vshrl.u32 %v4136, 7
        %v4138 = vsub.s32 %v4135, %v4137
        %v4139 = vrot.slane %v4125, %v4138
        %v4140 = vcombine.low %v4115, %v4123
        %v4141 = vcombine.high %v4115, %v4123
        %v4143 = vunpack.c.l.s4 1934713408
        %v4144 = vunpack.c.0.s8 %v4143
        %v4145 = vlaneseq
        %v4146 = vshrl.u32 %v4145, 7
        %v4147 = vsub.s32 %v4144, %v4146
        %v4148 = vrot.slane %v4140, %v4147
        %v4150 = vunpack.c.l.s4 1934713408
        %v4151 = vunpack.c.0.s8 %v4150
        %v4152 = vlaneseq
        %v4153 = vshrl.u32 %v4152, 7
        %v4154 = vsub.s32 %v4151, %v4153
        %v4155 = vrot.slane %v4141, %v4154
        %v4156 = vcombine.low %v4132, %v4148
        %v4157 = vcombine.high %v4132, %v4148
        %v4158 = vcombine.low %v4139, %v4155
        %v4159 = vcombine.high %v4139, %v4155
        %v4160 = vcombine.low %v4064, %v4071
        %v4162 = vunpack.c.l.s4 1983009808
        %v4163 = vunpack.c.0.s8 %v4162
        %v4164 = vlaneseq
        %v4165 = vshrl.u32 %v4164, 7
        %v4166 = vsub.s32 %v4163, %v4165
        %v4167 = vrot.slane %v4160, %v4166
        %v4168 = vcombine.low %v4088, %v4089
        %v4170 = vunpack.c.l.s4 1983009808
        %v4171 = vunpack.c.0.s8 %v4170
        %v4172 = vlaneseq
        %v4173 = vshrl.u32 %v4172, 7
        %v4174 = vsub.s32 %v4171, %v4173
        %v4175 = vrot.slane %v4168, %v4174
        %v4176 = vcombine.low %v4080, %v4087
        %v4178 = vunpack.c.l.s4 1983009808
        %v4179 = vunpack.c.0.s8 %v4178
        %v4180 = vlaneseq
        %v4181 = vshrl.u32 %v4180, 7
        %v4182 = vsub.s32 %v4179, %v4181
        %v4183 = vrot.slane %v4176, %v4182
        %v4184 = vcombine.low %v4090, %v4091
        %v4186 = vunpack.c.l.s4 1983009808
        %v4187 = vunpack.c.0.s8 %v4186
        %v4188 = vlaneseq
        %v4189 = vshrl.u32 %v4188, 7
        %v4190 = vsub.s32 %v4187, %v4189
        %v4191 = vrot.slane %v4184, %v4190
        %v4192 = vcombine.low %v4167, %v4175
        %v4193 = vcombine.high %v4167, %v4175
        %v4195 = vunpack.c.l.s4 1934713408
        %v4196 = vunpack.c.0.s8 %v4195
        %v4197 = vlaneseq
        %v4198 = vshrl.u32 %v4197, 7
        %v4199 = vsub.s32 %v4196, %v4198
        %v4200 = vrot.slane %v4192, %v4199
        %v4202 = vunpack.c.l.s4 1934713408
        %v4203 = vunpack.c.0.s8 %v4202
        %v4204 = vlaneseq
        %v4205 = vshrl.u32 %v4204, 7
        %v4206 = vsub.s32 %v4203, %v4205
        %v4207 = vrot.slane %v4193, %v4206
        %v4208 = vcombine.low %v4183, %v4191
        %v4209 = vcombine.high %v4183, %v4191
        %v4211 = vunpack.c.l.s4 1934713408
        %v4212 = vunpack.c.0.s8 %v4211
        %v4213 = vlaneseq
        %v4214 = vshrl.u32 %v4213, 7
        %v4215 = vsub.s32 %v4212, %v4214
        %v4216 = vrot.slane %v4208, %v4215
        %v4218 = vunpack.c.l.s4 1934713408
        %v4219 = vunpack.c.0.s8 %v4218
        %v4220 = vlaneseq
        %v4221 = vshrl.u32 %v4220, 7
        %v4222 = vsub.s32 %v4219, %v4221
        %v4223 = vrot.slane %v4209, %v4222
        %v4224 = vcombine.low %v4200, %v4216
        %v4225 = vcombine.high %v4200, %v4216
        %v4226 = vcombine.low %v4207, %v4223
        %v4227 = vcombine.high %v4207, %v4223
        %v4228 = vpack.c.bf16 %v4224, %v4156
        %v4229 = vpack.c.bf16 %v4225, %v4157
        %v4230 = vpack.c.bf16 %v4226, %v4158
        %v4231 = vpack.c.bf16 %v4227, %v4159
        %4234 = vrot.lane.b32.xlu0 %v3928, 96
        %v4235 = vpop.permute.xlu0 %4234
        %4236 = vrot.lane.b32.xlu0 %v3932, 96
        %v4237 = vpop.permute.xlu0 %4236
        %4240 = vrot.lane.b32.xlu0 %v3928, 64
        %v4241 = vpop.permute.xlu0 %4240
        %4242 = vrot.lane.b32.xlu0 %v3932, 64
        %v4243 = vpop.permute.xlu0 %4242
        %4246 = vrot.lane.b32.xlu0 %v3928, 32
        %v4247 = vpop.permute.xlu0 %4246
        %4248 = vrot.lane.b32.xlu0 %v3932, 32
        %v4249 = vpop.permute.xlu0 %4248
        %v4252 = vcombine.low %v3928, %v4241
        %v4253 = vcombine.high %v3928, %v4241
        %v4255 = vunpack.c.l.s4 1983009808
        %v4256 = vunpack.c.0.s8 %v4255
        %v4257 = vlaneseq
        %v4258 = vshrl.u32 %v4257, 7
        %v4259 = vsub.s32 %v4256, %v4258
        %v4260 = vrot.slane %v4252, %v4259
        %v4262 = vunpack.c.l.s4 1983009808
        %v4263 = vunpack.c.0.s8 %v4262
        %v4264 = vlaneseq
        %v4265 = vshrl.u32 %v4264, 7
        %v4266 = vsub.s32 %v4263, %v4265
        %v4267 = vrot.slane %v4253, %v4266
        %v4268 = vcombine.low %v4235, %v4247
        %v4269 = vcombine.high %v4235, %v4247
        %v4271 = vunpack.c.l.s4 1983009808
        %v4272 = vunpack.c.0.s8 %v4271
        %v4273 = vlaneseq
        %v4274 = vshrl.u32 %v4273, 7
        %v4275 = vsub.s32 %v4272, %v4274
        %v4276 = vrot.slane %v4268, %v4275
        %v4278 = vunpack.c.l.s4 1983009808
        %v4279 = vunpack.c.0.s8 %v4278
        %v4280 = vlaneseq
        %v4281 = vshrl.u32 %v4280, 7
        %v4282 = vsub.s32 %v4279, %v4281
        %v4283 = vrot.slane %v4269, %v4282
        %v4284 = vcombine.low %v4260, %v4276
        %v4285 = vcombine.high %v4260, %v4276
        %v4287 = vunpack.c.l.s4 1934713408
        %v4288 = vunpack.c.0.s8 %v4287
        %v4289 = vlaneseq
        %v4290 = vshrl.u32 %v4289, 7
        %v4291 = vsub.s32 %v4288, %v4290
        %v4292 = vrot.slane %v4284, %v4291
        %v4294 = vunpack.c.l.s4 1934713408
        %v4295 = vunpack.c.0.s8 %v4294
        %v4296 = vlaneseq
        %v4297 = vshrl.u32 %v4296, 7
        %v4298 = vsub.s32 %v4295, %v4297
        %v4299 = vrot.slane %v4285, %v4298
        %v4300 = vcombine.low %v4267, %v4283
        %v4301 = vcombine.high %v4267, %v4283
        %v4303 = vunpack.c.l.s4 1934713408
        %v4304 = vunpack.c.0.s8 %v4303
        %v4305 = vlaneseq
        %v4306 = vshrl.u32 %v4305, 7
        %v4307 = vsub.s32 %v4304, %v4306
        %v4308 = vrot.slane %v4300, %v4307
        %v4310 = vunpack.c.l.s4 1934713408
        %v4311 = vunpack.c.0.s8 %v4310
        %v4312 = vlaneseq
        %v4313 = vshrl.u32 %v4312, 7
        %v4314 = vsub.s32 %v4311, %v4313
        %v4315 = vrot.slane %v4301, %v4314
        %v4316 = vcombine.high %v4292, 0.0
        %v4317 = vcombine.high %v4299, 0.0
        %v4318 = vcombine.high %v4308, 0.0
        %v4319 = vcombine.high %v4315, 0.0
        %v4320 = vcombine.low %v3932, %v4243
        %v4321 = vcombine.high %v3932, %v4243
        %v4323 = vunpack.c.l.s4 1983009808
        %v4324 = vunpack.c.0.s8 %v4323
        %v4325 = vlaneseq
        %v4326 = vshrl.u32 %v4325, 7
        %v4327 = vsub.s32 %v4324, %v4326
        %v4328 = vrot.slane %v4320, %v4327
        %v4330 = vunpack.c.l.s4 1983009808
        %v4331 = vunpack.c.0.s8 %v4330
        %v4332 = vlaneseq
        %v4333 = vshrl.u32 %v4332, 7
        %v4334 = vsub.s32 %v4331, %v4333
        %v4335 = vrot.slane %v4321, %v4334
        %v4336 = vcombine.low %v4237, %v4249
        %v4337 = vcombine.high %v4237, %v4249
        %v4339 = vunpack.c.l.s4 1983009808
        %v4340 = vunpack.c.0.s8 %v4339
        %v4341 = vlaneseq
        %v4342 = vshrl.u32 %v4341, 7
        %v4343 = vsub.s32 %v4340, %v4342
        %v4344 = vrot.slane %v4336, %v4343
        %v4346 = vunpack.c.l.s4 1983009808
        %v4347 = vunpack.c.0.s8 %v4346
        %v4348 = vlaneseq
        %v4349 = vshrl.u32 %v4348, 7
        %v4350 = vsub.s32 %v4347, %v4349
        %v4351 = vrot.slane %v4337, %v4350
        %v4352 = vcombine.low %v4328, %v4344
        %v4353 = vcombine.high %v4328, %v4344
        %v4355 = vunpack.c.l.s4 1934713408
        %v4356 = vunpack.c.0.s8 %v4355
        %v4357 = vlaneseq
        %v4358 = vshrl.u32 %v4357, 7
        %v4359 = vsub.s32 %v4356, %v4358
        %v4360 = vrot.slane %v4352, %v4359
        %v4362 = vunpack.c.l.s4 1934713408
        %v4363 = vunpack.c.0.s8 %v4362
        %v4364 = vlaneseq
        %v4365 = vshrl.u32 %v4364, 7
        %v4366 = vsub.s32 %v4363, %v4365
        %v4367 = vrot.slane %v4353, %v4366
        %v4368 = vcombine.low %v4335, %v4351
        %v4369 = vcombine.high %v4335, %v4351
        %v4371 = vunpack.c.l.s4 1934713408
        %v4372 = vunpack.c.0.s8 %v4371
        %v4373 = vlaneseq
        %v4374 = vshrl.u32 %v4373, 7
        %v4375 = vsub.s32 %v4372, %v4374
        %v4376 = vrot.slane %v4368, %v4375
        %v4378 = vunpack.c.l.s4 1934713408
        %v4379 = vunpack.c.0.s8 %v4378
        %v4380 = vlaneseq
        %v4381 = vshrl.u32 %v4380, 7
        %v4382 = vsub.s32 %v4379, %v4381
        %v4383 = vrot.slane %v4369, %v4382
        %v4384 = vcombine.high %v4360, 0.0
        %v4385 = vcombine.high %v4367, 0.0
        %v4386 = vcombine.high %v4376, 0.0
        %v4387 = vcombine.high %v4383, 0.0
        %v4388 = vcombine.low %v4292, %v4299
        %v4390 = vunpack.c.l.s4 1983009808
        %v4391 = vunpack.c.0.s8 %v4390
        %v4392 = vlaneseq
        %v4393 = vshrl.u32 %v4392, 7
        %v4394 = vsub.s32 %v4391, %v4393
        %v4395 = vrot.slane %v4388, %v4394
        %v4396 = vcombine.low %v4316, %v4317
        %v4398 = vunpack.c.l.s4 1983009808
        %v4399 = vunpack.c.0.s8 %v4398
        %v4400 = vlaneseq
        %v4401 = vshrl.u32 %v4400, 7
        %v4402 = vsub.s32 %v4399, %v4401
        %v4403 = vrot.slane %v4396, %v4402
        %v4404 = vcombine.low %v4308, %v4315
        %v4406 = vunpack.c.l.s4 1983009808
        %v4407 = vunpack.c.0.s8 %v4406
        %v4408 = vlaneseq
        %v4409 = vshrl.u32 %v4408, 7
        %v4410 = vsub.s32 %v4407, %v4409
        %v4411 = vrot.slane %v4404, %v4410
        %v4412 = vcombine.low %v4318, %v4319
        %v4414 = vunpack.c.l.s4 1983009808
        %v4415 = vunpack.c.0.s8 %v4414
        %v4416 = vlaneseq
        %v4417 = vshrl.u32 %v4416, 7
        %v4418 = vsub.s32 %v4415, %v4417
        %v4419 = vrot.slane %v4412, %v4418
        %v4420 = vcombine.low %v4395, %v4403
        %v4421 = vcombine.high %v4395, %v4403
        %v4423 = vunpack.c.l.s4 1934713408
        %v4424 = vunpack.c.0.s8 %v4423
        %v4425 = vlaneseq
        %v4426 = vshrl.u32 %v4425, 7
        %v4427 = vsub.s32 %v4424, %v4426
        %v4428 = vrot.slane %v4420, %v4427
        %v4430 = vunpack.c.l.s4 1934713408
        %v4431 = vunpack.c.0.s8 %v4430
        %v4432 = vlaneseq
        %v4433 = vshrl.u32 %v4432, 7
        %v4434 = vsub.s32 %v4431, %v4433
        %v4435 = vrot.slane %v4421, %v4434
        %v4436 = vcombine.low %v4411, %v4419
        %v4437 = vcombine.high %v4411, %v4419
        %v4439 = vunpack.c.l.s4 1934713408
        %v4440 = vunpack.c.0.s8 %v4439
        %v4441 = vlaneseq
        %v4442 = vshrl.u32 %v4441, 7
        %v4443 = vsub.s32 %v4440, %v4442
        %v4444 = vrot.slane %v4436, %v4443
        %v4446 = vunpack.c.l.s4 1934713408
        %v4447 = vunpack.c.0.s8 %v4446
        %v4448 = vlaneseq
        %v4449 = vshrl.u32 %v4448, 7
        %v4450 = vsub.s32 %v4447, %v4449
        %v4451 = vrot.slane %v4437, %v4450
        %v4452 = vcombine.low %v4428, %v4444
        %v4453 = vcombine.high %v4428, %v4444
        %v4454 = vcombine.low %v4435, %v4451
        %v4455 = vcombine.high %v4435, %v4451
        %v4456 = vcombine.low %v4360, %v4367
        %v4458 = vunpack.c.l.s4 1983009808
        %v4459 = vunpack.c.0.s8 %v4458
        %v4460 = vlaneseq
        %v4461 = vshrl.u32 %v4460, 7
        %v4462 = vsub.s32 %v4459, %v4461
        %v4463 = vrot.slane %v4456, %v4462
        %v4464 = vcombine.low %v4384, %v4385
        %v4466 = vunpack.c.l.s4 1983009808
        %v4467 = vunpack.c.0.s8 %v4466
        %v4468 = vlaneseq
        %v4469 = vshrl.u32 %v4468, 7
        %v4470 = vsub.s32 %v4467, %v4469
        %v4471 = vrot.slane %v4464, %v4470
        %v4472 = vcombine.low %v4376, %v4383
        %v4474 = vunpack.c.l.s4 1983009808
        %v4475 = vunpack.c.0.s8 %v4474
        %v4476 = vlaneseq
        %v4477 = vshrl.u32 %v4476, 7
        %v4478 = vsub.s32 %v4475, %v4477
        %v4479 = vrot.slane %v4472, %v4478
        %v4480 = vcombine.low %v4386, %v4387
        %v4482 = vunpack.c.l.s4 1983009808
        %v4483 = vunpack.c.0.s8 %v4482
        %v4484 = vlaneseq
        %v4485 = vshrl.u32 %v4484, 7
        %v4486 = vsub.s32 %v4483, %v4485
        %v4487 = vrot.slane %v4480, %v4486
        %v4488 = vcombine.low %v4463, %v4471
        %v4489 = vcombine.high %v4463, %v4471
        %v4491 = vunpack.c.l.s4 1934713408
        %v4492 = vunpack.c.0.s8 %v4491
        %v4493 = vlaneseq
        %v4494 = vshrl.u32 %v4493, 7
        %v4495 = vsub.s32 %v4492, %v4494
        %v4496 = vrot.slane %v4488, %v4495
        %v4498 = vunpack.c.l.s4 1934713408
        %v4499 = vunpack.c.0.s8 %v4498
        %v4500 = vlaneseq
        %v4501 = vshrl.u32 %v4500, 7
        %v4502 = vsub.s32 %v4499, %v4501
        %v4503 = vrot.slane %v4489, %v4502
        %v4504 = vcombine.low %v4479, %v4487
        %v4505 = vcombine.high %v4479, %v4487
        %v4507 = vunpack.c.l.s4 1934713408
        %v4508 = vunpack.c.0.s8 %v4507
        %v4509 = vlaneseq
        %v4510 = vshrl.u32 %v4509, 7
        %v4511 = vsub.s32 %v4508, %v4510
        %v4512 = vrot.slane %v4504, %v4511
        %v4514 = vunpack.c.l.s4 1934713408
        %v4515 = vunpack.c.0.s8 %v4514
        %v4516 = vlaneseq
        %v4517 = vshrl.u32 %v4516, 7
        %v4518 = vsub.s32 %v4515, %v4517
        %v4519 = vrot.slane %v4505, %v4518
        %v4520 = vcombine.low %v4496, %v4512
        %v4521 = vcombine.high %v4496, %v4512
        %v4522 = vcombine.low %v4503, %v4519
        %v4523 = vcombine.high %v4503, %v4519
        %v4524 = vpack.c.bf16 %v4520, %v4452
        %v4525 = vpack.c.bf16 %v4521, %v4453
        %v4526 = vpack.c.bf16 %v4522, %v4454
        %v4527 = vpack.c.bf16 %v4523, %v4455
        %4530 = vrot.lane.b32.xlu0 %v3930, 96
        %v4531 = vpop.permute.xlu0 %4530
        %4532 = vrot.lane.b32.xlu0 %v3934, 96
        %v4533 = vpop.permute.xlu0 %4532
        %4536 = vrot.lane.b32.xlu0 %v3930, 64
        %v4537 = vpop.permute.xlu0 %4536
        %4538 = vrot.lane.b32.xlu0 %v3934, 64
        %v4539 = vpop.permute.xlu0 %4538
        %4542 = vrot.lane.b32.xlu0 %v3930, 32
        %v4543 = vpop.permute.xlu0 %4542
        %4544 = vrot.lane.b32.xlu0 %v3934, 32
        %v4545 = vpop.permute.xlu0 %4544
        %v4548 = vcombine.low %v3930, %v4537
        %v4549 = vcombine.high %v3930, %v4537
        %v4551 = vunpack.c.l.s4 1983009808
        %v4552 = vunpack.c.0.s8 %v4551
        %v4553 = vlaneseq
        %v4554 = vshrl.u32 %v4553, 7
        %v4555 = vsub.s32 %v4552, %v4554
        %v4556 = vrot.slane %v4548, %v4555
        %v4558 = vunpack.c.l.s4 1983009808
        %v4559 = vunpack.c.0.s8 %v4558
        %v4560 = vlaneseq
        %v4561 = vshrl.u32 %v4560, 7
        %v4562 = vsub.s32 %v4559, %v4561
        %v4563 = vrot.slane %v4549, %v4562
        %v4564 = vcombine.low %v4531, %v4543
        %v4565 = vcombine.high %v4531, %v4543
        %v4567 = vunpack.c.l.s4 1983009808
        %v4568 = vunpack.c.0.s8 %v4567
        %v4569 = vlaneseq
        %v4570 = vshrl.u32 %v4569, 7
        %v4571 = vsub.s32 %v4568, %v4570
        %v4572 = vrot.slane %v4564, %v4571
        %v4574 = vunpack.c.l.s4 1983009808
        %v4575 = vunpack.c.0.s8 %v4574
        %v4576 = vlaneseq
        %v4577 = vshrl.u32 %v4576, 7
        %v4578 = vsub.s32 %v4575, %v4577
        %v4579 = vrot.slane %v4565, %v4578
        %v4580 = vcombine.low %v4556, %v4572
        %v4581 = vcombine.high %v4556, %v4572
        %v4583 = vunpack.c.l.s4 1934713408
        %v4584 = vunpack.c.0.s8 %v4583
        %v4585 = vlaneseq
        %v4586 = vshrl.u32 %v4585, 7
        %v4587 = vsub.s32 %v4584, %v4586
        %v4588 = vrot.slane %v4580, %v4587
        %v4590 = vunpack.c.l.s4 1934713408
        %v4591 = vunpack.c.0.s8 %v4590
        %v4592 = vlaneseq
        %v4593 = vshrl.u32 %v4592, 7
        %v4594 = vsub.s32 %v4591, %v4593
        %v4595 = vrot.slane %v4581, %v4594
        %v4596 = vcombine.low %v4563, %v4579
        %v4597 = vcombine.high %v4563, %v4579
        %v4599 = vunpack.c.l.s4 1934713408
        %v4600 = vunpack.c.0.s8 %v4599
        %v4601 = vlaneseq
        %v4602 = vshrl.u32 %v4601, 7
        %v4603 = vsub.s32 %v4600, %v4602
        %v4604 = vrot.slane %v4596, %v4603
        %v4606 = vunpack.c.l.s4 1934713408
        %v4607 = vunpack.c.0.s8 %v4606
        %v4608 = vlaneseq
        %v4609 = vshrl.u32 %v4608, 7
        %v4610 = vsub.s32 %v4607, %v4609
        %v4611 = vrot.slane %v4597, %v4610
        %v4612 = vcombine.high %v4588, 0.0
        %v4613 = vcombine.high %v4595, 0.0
        %v4614 = vcombine.high %v4604, 0.0
        %v4615 = vcombine.high %v4611, 0.0
        %v4616 = vcombine.low %v3934, %v4539
        %v4617 = vcombine.high %v3934, %v4539
        %v4619 = vunpack.c.l.s4 1983009808
        %v4620 = vunpack.c.0.s8 %v4619
        %v4621 = vlaneseq
        %v4622 = vshrl.u32 %v4621, 7
        %v4623 = vsub.s32 %v4620, %v4622
        %v4624 = vrot.slane %v4616, %v4623
        %v4626 = vunpack.c.l.s4 1983009808
        %v4627 = vunpack.c.0.s8 %v4626
        %v4628 = vlaneseq
        %v4629 = vshrl.u32 %v4628, 7
        %v4630 = vsub.s32 %v4627, %v4629
        %v4631 = vrot.slane %v4617, %v4630
        %v4632 = vcombine.low %v4533, %v4545
        %v4633 = vcombine.high %v4533, %v4545
        %v4635 = vunpack.c.l.s4 1983009808
        %v4636 = vunpack.c.0.s8 %v4635
        %v4637 = vlaneseq
        %v4638 = vshrl.u32 %v4637, 7
        %v4639 = vsub.s32 %v4636, %v4638
        %v4640 = vrot.slane %v4632, %v4639
        %v4642 = vunpack.c.l.s4 1983009808
        %v4643 = vunpack.c.0.s8 %v4642
        %v4644 = vlaneseq
        %v4645 = vshrl.u32 %v4644, 7
        %v4646 = vsub.s32 %v4643, %v4645
        %v4647 = vrot.slane %v4633, %v4646
        %v4648 = vcombine.low %v4624, %v4640
        %v4649 = vcombine.high %v4624, %v4640
        %v4651 = vunpack.c.l.s4 1934713408
        %v4652 = vunpack.c.0.s8 %v4651
        %v4653 = vlaneseq
        %v4654 = vshrl.u32 %v4653, 7
        %v4655 = vsub.s32 %v4652, %v4654
        %v4656 = vrot.slane %v4648, %v4655
        %v4658 = vunpack.c.l.s4 1934713408
        %v4659 = vunpack.c.0.s8 %v4658
        %v4660 = vlaneseq
        %v4661 = vshrl.u32 %v4660, 7
        %v4662 = vsub.s32 %v4659, %v4661
        %v4663 = vrot.slane %v4649, %v4662
        %v4664 = vcombine.low %v4631, %v4647
        %v4665 = vcombine.high %v4631, %v4647
        %v4667 = vunpack.c.l.s4 1934713408
        %v4668 = vunpack.c.0.s8 %v4667
        %v4669 = vlaneseq
        %v4670 = vshrl.u32 %v4669, 7
        %v4671 = vsub.s32 %v4668, %v4670
        %v4672 = vrot.slane %v4664, %v4671
        %v4674 = vunpack.c.l.s4 1934713408
        %v4675 = vunpack.c.0.s8 %v4674
        %v4676 = vlaneseq
        %v4677 = vshrl.u32 %v4676, 7
        %v4678 = vsub.s32 %v4675, %v4677
        %v4679 = vrot.slane %v4665, %v4678
        %v4680 = vcombine.high %v4656, 0.0
        %v4681 = vcombine.high %v4663, 0.0
        %v4682 = vcombine.high %v4672, 0.0
        %v4683 = vcombine.high %v4679, 0.0
        %v4684 = vcombine.low %v4588, %v4595
        %v4686 = vunpack.c.l.s4 1983009808
        %v4687 = vunpack.c.0.s8 %v4686
        %v4688 = vlaneseq
        %v4689 = vshrl.u32 %v4688, 7
        %v4690 = vsub.s32 %v4687, %v4689
        %v4691 = vrot.slane %v4684, %v4690
        %v4692 = vcombine.low %v4612, %v4613
        %v4694 = vunpack.c.l.s4 1983009808
        %v4695 = vunpack.c.0.s8 %v4694
        %v4696 = vlaneseq
        %v4697 = vshrl.u32 %v4696, 7
        %v4698 = vsub.s32 %v4695, %v4697
        %v4699 = vrot.slane %v4692, %v4698
        %v4700 = vcombine.low %v4604, %v4611
        %v4702 = vunpack.c.l.s4 1983009808
        %v4703 = vunpack.c.0.s8 %v4702
        %v4704 = vlaneseq
        %v4705 = vshrl.u32 %v4704, 7
        %v4706 = vsub.s32 %v4703, %v4705
        %v4707 = vrot.slane %v4700, %v4706
        %v4708 = vcombine.low %v4614, %v4615
        %v4710 = vunpack.c.l.s4 1983009808
        %v4711 = vunpack.c.0.s8 %v4710
        %v4712 = vlaneseq
        %v4713 = vshrl.u32 %v4712, 7
        %v4714 = vsub.s32 %v4711, %v4713
        %v4715 = vrot.slane %v4708, %v4714
        %v4716 = vcombine.low %v4691, %v4699
        %v4717 = vcombine.high %v4691, %v4699
        %v4719 = vunpack.c.l.s4 1934713408
        %v4720 = vunpack.c.0.s8 %v4719
        %v4721 = vlaneseq
        %v4722 = vshrl.u32 %v4721, 7
        %v4723 = vsub.s32 %v4720, %v4722
        %v4724 = vrot.slane %v4716, %v4723
        %v4726 = vunpack.c.l.s4 1934713408
        %v4727 = vunpack.c.0.s8 %v4726
        %v4728 = vlaneseq
        %v4729 = vshrl.u32 %v4728, 7
        %v4730 = vsub.s32 %v4727, %v4729
        %v4731 = vrot.slane %v4717, %v4730
        %v4732 = vcombine.low %v4707, %v4715
        %v4733 = vcombine.high %v4707, %v4715
        %v4735 = vunpack.c.l.s4 1934713408
        %v4736 = vunpack.c.0.s8 %v4735
        %v4737 = vlaneseq
        %v4738 = vshrl.u32 %v4737, 7
        %v4739 = vsub.s32 %v4736, %v4738
        %v4740 = vrot.slane %v4732, %v4739
        %v4742 = vunpack.c.l.s4 1934713408
        %v4743 = vunpack.c.0.s8 %v4742
        %v4744 = vlaneseq
        %v4745 = vshrl.u32 %v4744, 7
        %v4746 = vsub.s32 %v4743, %v4745
        %v4747 = vrot.slane %v4733, %v4746
        %v4748 = vcombine.low %v4724, %v4740
        %v4749 = vcombine.high %v4724, %v4740
        %v4750 = vcombine.low %v4731, %v4747
        %v4751 = vcombine.high %v4731, %v4747
        %v4752 = vcombine.low %v4656, %v4663
        %v4754 = vunpack.c.l.s4 1983009808
        %v4755 = vunpack.c.0.s8 %v4754
        %v4756 = vlaneseq
        %v4757 = vshrl.u32 %v4756, 7
        %v4758 = vsub.s32 %v4755, %v4757
        %v4759 = vrot.slane %v4752, %v4758
        %v4760 = vcombine.low %v4680, %v4681
        %v4762 = vunpack.c.l.s4 1983009808
        %v4763 = vunpack.c.0.s8 %v4762
        %v4764 = vlaneseq
        %v4765 = vshrl.u32 %v4764, 7
        %v4766 = vsub.s32 %v4763, %v4765
        %v4767 = vrot.slane %v4760, %v4766
        %v4768 = vcombine.low %v4672, %v4679
        %v4770 = vunpack.c.l.s4 1983009808
        %v4771 = vunpack.c.0.s8 %v4770
        %v4772 = vlaneseq
        %v4773 = vshrl.u32 %v4772, 7
        %v4774 = vsub.s32 %v4771, %v4773
        %v4775 = vrot.slane %v4768, %v4774
        %v4776 = vcombine.low %v4682, %v4683
        %v4778 = vunpack.c.l.s4 1983009808
        %v4779 = vunpack.c.0.s8 %v4778
        %v4780 = vlaneseq
        %v4781 = vshrl.u32 %v4780, 7
        %v4782 = vsub.s32 %v4779, %v4781
        %v4783 = vrot.slane %v4776, %v4782
        %v4784 = vcombine.low %v4759, %v4767
        %v4785 = vcombine.high %v4759, %v4767
        %v4787 = vunpack.c.l.s4 1934713408
        %v4788 = vunpack.c.0.s8 %v4787
        %v4789 = vlaneseq
        %v4790 = vshrl.u32 %v4789, 7
        %v4791 = vsub.s32 %v4788, %v4790
        %v4792 = vrot.slane %v4784, %v4791
        %v4794 = vunpack.c.l.s4 1934713408
        %v4795 = vunpack.c.0.s8 %v4794
        %v4796 = vlaneseq
        %v4797 = vshrl.u32 %v4796, 7
        %v4798 = vsub.s32 %v4795, %v4797
        %v4799 = vrot.slane %v4785, %v4798
        %v4800 = vcombine.low %v4775, %v4783
        %v4801 = vcombine.high %v4775, %v4783
        %v4803 = vunpack.c.l.s4 1934713408
        %v4804 = vunpack.c.0.s8 %v4803
        %v4805 = vlaneseq
        %v4806 = vshrl.u32 %v4805, 7
        %v4807 = vsub.s32 %v4804, %v4806
        %v4808 = vrot.slane %v4800, %v4807
        %v4810 = vunpack.c.l.s4 1934713408
        %v4811 = vunpack.c.0.s8 %v4810
        %v4812 = vlaneseq
        %v4813 = vshrl.u32 %v4812, 7
        %v4814 = vsub.s32 %v4811, %v4813
        %v4815 = vrot.slane %v4801, %v4814
        %v4816 = vcombine.low %v4792, %v4808
        %v4817 = vcombine.high %v4792, %v4808
        %v4818 = vcombine.low %v4799, %v4815
        %v4819 = vcombine.high %v4799, %v4815
        %v4820 = vpack.c.bf16 %v4816, %v4748
        %v4821 = vpack.c.bf16 %v4817, %v4749
        %v4822 = vpack.c.bf16 %v4818, %v4750
        %v4823 = vpack.c.bf16 %v4819, %v4751
        %v4825 = vsel %vm2752, %v4228, 0
        %v4828 = vsel %vm2752, %v4524, 0
        %4830 = vmatprep.subr.bf16.mxu0 0
        %4831 = vmatpush1.bf16.xpose.msra.mxu0 0
        %4832 = vmatprep.subr.bf16.mxu0 0
        %4833 = vmatpush1.bf16.xpose.msra.mxu0 0
        %4834 = vmatprep.subr.bf16.mxu0 0
        %4835 = vmatpush1.bf16.xpose.msra.mxu0 0
        %4836 = vmatprep.subr.bf16.mxu0 0
        %4837 = vmatpush1.bf16.xpose.msra.mxu0 0
        %4838 = vmatprep.subr.bf16.mxu0 0
        %4839 = vmatpush1.bf16.xpose.msra.mxu0 0
        %4840 = vmatprep.subr.bf16.mxu0 0
        %4841 = vmatpush1.bf16.xpose.msra.mxu0 0
        %4842 = vmatprep.subr.bf16.mxu0 0
        %4843 = vmatpush1.bf16.xpose.msra.mxu0 0
        %4844 = vmatprep.subr.bf16.mxu0 0
        %4845 = vmatpush1.bf16.xpose.msra.mxu0 %v4828
        %4846 = vmatprep.subr.bf16.mxu0 0
        %4847 = vmatpush2.bf16.xpose.msra.mxu0 0
        %4848 = vmatprep.subr.bf16.mxu0 0
        %4849 = vmatpush2.bf16.xpose.msra.mxu0 0
        %4850 = vmatprep.subr.bf16.mxu0 0
        %4851 = vmatpush2.bf16.xpose.msra.mxu0 0
        %4852 = vmatprep.subr.bf16.mxu0 0
        %4853 = vmatpush2.bf16.xpose.msra.mxu0 0
        %4854 = vmatprep.subr.bf16.mxu0 0
        %4855 = vmatpush2.bf16.xpose.msra.mxu0 0
        %4856 = vmatprep.subr.bf16.mxu0 0
        %4857 = vmatpush2.bf16.xpose.msra.mxu0 0
        %4858 = vmatprep.subr.bf16.mxu0 0
        %4859 = vmatpush2.bf16.xpose.msra.mxu0 0
        %4860 = vmatprep.subr.bf16.mxu0 0
        %4861 = vmatpush2.bf16.xpose.msra.mxu0 0
        %4862 = vmatprep.mubr.bf16.mxu0 0
        %4863 = vmatmul.mubr.bf16.gmra.mxu0 %v4825
        %v4864 = vpop.f32.mrf.mxu0
        %v4865 = vadd.f32 %v1557, %v4864
        %v4866 = vpop.f32.mrf.mxu0
        %v4867 = vpop.f32.mrf.mxu0
        %v4868 = vadd.f32 %v1558, %v4867
        %v4869 = vpop.f32.mrf.mxu0
        %4870 = vdwg.mxu0
        %v4872 = vsel %vm2752, %v4229, 0
        %v4875 = vsel %vm2752, %v4525, 0
        %4877 = vmatprep.subr.bf16.mxu0 0
        %4878 = vmatpush1.bf16.xpose.msra.mxu0 0
        %4879 = vmatprep.subr.bf16.mxu0 0
        %4880 = vmatpush1.bf16.xpose.msra.mxu0 0
        %4881 = vmatprep.subr.bf16.mxu0 0
        %4882 = vmatpush1.bf16.xpose.msra.mxu0 0
        %4883 = vmatprep.subr.bf16.mxu0 0
        %4884 = vmatpush1.bf16.xpose.msra.mxu0 0
        %4885 = vmatprep.subr.bf16.mxu0 0
        %4886 = vmatpush1.bf16.xpose.msra.mxu0 0
        %4887 = vmatprep.subr.bf16.mxu0 0
        %4888 = vmatpush1.bf16.xpose.msra.mxu0 0
        %4889 = vmatprep.subr.bf16.mxu0 0
        %4890 = vmatpush1.bf16.xpose.msra.mxu0 0
        %4891 = vmatprep.subr.bf16.mxu0 0
        %4892 = vmatpush1.bf16.xpose.msra.mxu0 %v4875
        %4893 = vmatprep.subr.bf16.mxu0 0
        %4894 = vmatpush2.bf16.xpose.msra.mxu0 0
        %4895 = vmatprep.subr.bf16.mxu0 0
        %4896 = vmatpush2.bf16.xpose.msra.mxu0 0
        %4897 = vmatprep.subr.bf16.mxu0 0
        %4898 = vmatpush2.bf16.xpose.msra.mxu0 0
        %4899 = vmatprep.subr.bf16.mxu0 0
        %4900 = vmatpush2.bf16.xpose.msra.mxu0 0
        %4901 = vmatprep.subr.bf16.mxu0 0
        %4902 = vmatpush2.bf16.xpose.msra.mxu0 0
        %4903 = vmatprep.subr.bf16.mxu0 0
        %4904 = vmatpush2.bf16.xpose.msra.mxu0 0
        %4905 = vmatprep.subr.bf16.mxu0 0
        %4906 = vmatpush2.bf16.xpose.msra.mxu0 0
        %4907 = vmatprep.subr.bf16.mxu0 0
        %4908 = vmatpush2.bf16.xpose.msra.mxu0 0
        %4909 = vmatprep.mubr.bf16.mxu0 0
        %4910 = vmatmul.mubr.bf16.gmra.mxu0 %v4872
        %v4911 = vpop.f32.mrf.mxu0
        %v4912 = vadd.f32 %v1557, %v4911
        %v4913 = vpop.f32.mrf.mxu0
        %v4914 = vpop.f32.mrf.mxu0
        %v4915 = vadd.f32 %v1558, %v4914
        %v4916 = vpop.f32.mrf.mxu0
        %4917 = vdwg.mxu0
        %v4919 = vsel %vm2752, %v4230, 0
        %v4922 = vsel %vm2752, %v4526, 0
        %4924 = vmatprep.subr.bf16.mxu0 0
        %4925 = vmatpush1.bf16.xpose.msra.mxu0 0
        %4926 = vmatprep.subr.bf16.mxu0 0
        %4927 = vmatpush1.bf16.xpose.msra.mxu0 0
        %4928 = vmatprep.subr.bf16.mxu0 0
        %4929 = vmatpush1.bf16.xpose.msra.mxu0 0
        %4930 = vmatprep.subr.bf16.mxu0 0
        %4931 = vmatpush1.bf16.xpose.msra.mxu0 0
        %4932 = vmatprep.subr.bf16.mxu0 0
        %4933 = vmatpush1.bf16.xpose.msra.mxu0 0
        %4934 = vmatprep.subr.bf16.mxu0 0
        %4935 = vmatpush1.bf16.xpose.msra.mxu0 0
        %4936 = vmatprep.subr.bf16.mxu0 0
        %4937 = vmatpush1.bf16.xpose.msra.mxu0 0
        %4938 = vmatprep.subr.bf16.mxu0 0
        %4939 = vmatpush1.bf16.xpose.msra.mxu0 %v4922
        %4940 = vmatprep.subr.bf16.mxu0 0
        %4941 = vmatpush2.bf16.xpose.msra.mxu0 0
        %4942 = vmatprep.subr.bf16.mxu0 0
        %4943 = vmatpush2.bf16.xpose.msra.mxu0 0
        %4944 = vmatprep.subr.bf16.mxu0 0
        %4945 = vmatpush2.bf16.xpose.msra.mxu0 0
        %4946 = vmatprep.subr.bf16.mxu0 0
        %4947 = vmatpush2.bf16.xpose.msra.mxu0 0
        %4948 = vmatprep.subr.bf16.mxu0 0
        %4949 = vmatpush2.bf16.xpose.msra.mxu0 0
        %4950 = vmatprep.subr.bf16.mxu0 0
        %4951 = vmatpush2.bf16.xpose.msra.mxu0 0
        %4952 = vmatprep.subr.bf16.mxu0 0
        %4953 = vmatpush2.bf16.xpose.msra.mxu0 0
        %4954 = vmatprep.subr.bf16.mxu0 0
        %4955 = vmatpush2.bf16.xpose.msra.mxu0 0
        %4956 = vmatprep.mubr.bf16.mxu0 0
        %4957 = vmatmul.mubr.bf16.gmra.mxu0 %v4919
        %v4958 = vpop.f32.mrf.mxu0
        %v4959 = vadd.f32 %v1557, %v4958
        %v4960 = vpop.f32.mrf.mxu0
        %v4961 = vpop.f32.mrf.mxu0
        %v4962 = vadd.f32 %v1558, %v4961
        %v4963 = vpop.f32.mrf.mxu0
        %4964 = vdwg.mxu0
        %v4966 = vsel %vm2752, %v4231, 0
        %v4969 = vsel %vm2752, %v4527, 0
        %4971 = vmatprep.subr.bf16.mxu0 0
        %4972 = vmatpush1.bf16.xpose.msra.mxu0 0
        %4973 = vmatprep.subr.bf16.mxu0 0
        %4974 = vmatpush1.bf16.xpose.msra.mxu0 0
        %4975 = vmatprep.subr.bf16.mxu0 0
        %4976 = vmatpush1.bf16.xpose.msra.mxu0 0
        %4977 = vmatprep.subr.bf16.mxu0 0
        %4978 = vmatpush1.bf16.xpose.msra.mxu0 0
        %4979 = vmatprep.subr.bf16.mxu0 0
        %4980 = vmatpush1.bf16.xpose.msra.mxu0 0
        %4981 = vmatprep.subr.bf16.mxu0 0
        %4982 = vmatpush1.bf16.xpose.msra.mxu0 0
        %4983 = vmatprep.subr.bf16.mxu0 0
        %4984 = vmatpush1.bf16.xpose.msra.mxu0 0
        %4985 = vmatprep.subr.bf16.mxu0 0
        %4986 = vmatpush1.bf16.xpose.msra.mxu0 %v4969
        %4987 = vmatprep.subr.bf16.mxu0 0
        %4988 = vmatpush2.bf16.xpose.msra.mxu0 0
        %4989 = vmatprep.subr.bf16.mxu0 0
        %4990 = vmatpush2.bf16.xpose.msra.mxu0 0
        %4991 = vmatprep.subr.bf16.mxu0 0
        %4992 = vmatpush2.bf16.xpose.msra.mxu0 0
        %4993 = vmatprep.subr.bf16.mxu0 0
        %4994 = vmatpush2.bf16.xpose.msra.mxu0 0
        %4995 = vmatprep.subr.bf16.mxu0 0
        %4996 = vmatpush2.bf16.xpose.msra.mxu0 0
        %4997 = vmatprep.subr.bf16.mxu0 0
        %4998 = vmatpush2.bf16.xpose.msra.mxu0 0
        %4999 = vmatprep.subr.bf16.mxu0 0
        %5000 = vmatpush2.bf16.xpose.msra.mxu0 0
        %5001 = vmatprep.subr.bf16.mxu0 0
        %5002 = vmatpush2.bf16.xpose.msra.mxu0 0
        %5003 = vmatprep.mubr.bf16.mxu0 0
        %5004 = vmatmul.mubr.bf16.gmra.mxu0 %v4966
        %v5005 = vpop.f32.mrf.mxu0
        %v5006 = vadd.f32 %v1557, %v5005
        %v5007 = vpop.f32.mrf.mxu0
        %v5008 = vpop.f32.mrf.mxu0
        %v5009 = vadd.f32 %v1558, %v5008
        %v5010 = vpop.f32.mrf.mxu0
        %5011 = vdwg.mxu0
        %v5012 = vsel %vm2941, %v4865, -inf
        %5013 = vmax.xlane.f32.xlu0 %v5012
        %v5014 = vpop.xlane.xlu0 %5013
        %v5015 = vsel %vm2941, %v4868, -inf
        %5016 = vmax.xlane.f32.xlu0 %v5015
        %v5017 = vpop.xlane.xlu0 %5016
        %v5018 = vsel %vm2941, %v4912, -inf
        %5019 = vmax.xlane.f32.xlu0 %v5018
        %v5020 = vpop.xlane.xlu0 %5019
        %v5021 = vsel %vm2941, %v4915, -inf
        %5022 = vmax.xlane.f32.xlu0 %v5021
        %v5023 = vpop.xlane.xlu0 %5022
        %v5024 = vsel %vm2941, %v4959, -inf
        %5025 = vmax.xlane.f32.xlu0 %v5024
        %v5026 = vpop.xlane.xlu0 %5025
        %v5027 = vsel %vm2941, %v4962, -inf
        %5028 = vmax.xlane.f32.xlu0 %v5027
        %v5029 = vpop.xlane.xlu0 %5028
        %v5030 = vsel %vm2941, %v5006, -inf
        %5031 = vmax.xlane.f32.xlu0 %v5030
        %v5032 = vpop.xlane.xlu0 %5031
        %v5033 = vsel %vm2941, %v5009, -inf
        %5034 = vmax.xlane.f32.xlu0 %v5033
        %v5035 = vpop.xlane.xlu0 %5034
        %v5036 = vsub.f32 %v4865, %v5014
        %v5037 = vsub.f32 %v4868, %v5017
        %v5038 = vsub.f32 %v4912, %v5020
        %v5039 = vsub.f32 %v4915, %v5023
        %v5040 = vsub.f32 %v4959, %v5026
        %v5041 = vsub.f32 %v4962, %v5029
        %v5042 = vsub.f32 %v5006, %v5032
        %v5043 = vsub.f32 %v5009, %v5035
        %v5044 = vmul.f32 %v5036, 1.442695
        %v5045 = vpow.pop %v5044
        %v5046 = vmul.f32 %v5037, 1.442695
        %v5047 = vpow.pop %v5046
        %v5048 = vmul.f32 %v5038, 1.442695
        %v5049 = vpow.pop %v5048
        %v5050 = vmul.f32 %v5039, 1.442695
        %v5051 = vpow.pop %v5050
        %v5052 = vmul.f32 %v5040, 1.442695
        %v5053 = vpow.pop %v5052
        %v5054 = vmul.f32 %v5041, 1.442695
        %v5055 = vpow.pop %v5054
        %v5056 = vmul.f32 %v5042, 1.442695
        %v5057 = vpow.pop %v5056
        %v5058 = vmul.f32 %v5043, 1.442695
        %v5059 = vpow.pop %v5058
        %v5060 = vsel %vm2941, %v5045, 0.0
        %5061 = vadd.xlane.f32.xlu0 %v5060
        %v5062 = vpop.xlane.xlu0 %5061
        %v5063 = vsel %vm2941, %v5047, 0.0
        %5064 = vadd.xlane.f32.xlu0 %v5063
        %v5065 = vpop.xlane.xlu0 %5064
        %v5066 = vsel %vm2941, %v5049, 0.0
        %5067 = vadd.xlane.f32.xlu0 %v5066
        %v5068 = vpop.xlane.xlu0 %5067
        %v5069 = vsel %vm2941, %v5051, 0.0
        %5070 = vadd.xlane.f32.xlu0 %v5069
        %v5071 = vpop.xlane.xlu0 %5070
        %v5072 = vsel %vm2941, %v5053, 0.0
        %5073 = vadd.xlane.f32.xlu0 %v5072
        %v5074 = vpop.xlane.xlu0 %5073
        %v5075 = vsel %vm2941, %v5055, 0.0
        %5076 = vadd.xlane.f32.xlu0 %v5075
        %v5077 = vpop.xlane.xlu0 %5076
        %v5078 = vsel %vm2941, %v5057, 0.0
        %5079 = vadd.xlane.f32.xlu0 %v5078
        %v5080 = vpop.xlane.xlu0 %5079
        %v5081 = vsel %vm2941, %v5059, 0.0
        %5082 = vadd.xlane.f32.xlu0 %v5081
        %v5083 = vpop.xlane.xlu0 %5082
        %v5084 = vrcp.pop %v5062
        %v5085 = vrcp.pop %v5065
        %v5086 = vrcp.pop %v5068
        %v5087 = vrcp.pop %v5071
        %v5088 = vrcp.pop %v5074
        %v5089 = vrcp.pop %v5077
        %v5090 = vrcp.pop %v5080
        %v5091 = vrcp.pop %v5083
        %v5092 = vmul.f32 %v5045, %v5084
        %v5093 = vmul.f32 %v5047, %v5085
        %v5094 = vmul.f32 %v5049, %v5086
        %v5095 = vmul.f32 %v5051, %v5087
        %v5096 = vmul.f32 %v5053, %v5088
        %v5097 = vmul.f32 %v5055, %v5089
        %v5098 = vmul.f32 %v5057, %v5090
        %v5099 = vmul.f32 %v5059, %v5091
        %v5100 = vpack.c.bf16 %v5093, %v5092
        %v5101 = vpack.c.bf16 %v5095, %v5094
        %v5102 = vpack.c.bf16 %v5097, %v5096
        %v5103 = vpack.c.bf16 %v5099, %v5098
        %v5105 = vsel %vm2941, %v5100, 0
        %5107 = vmatprep.subr.bf16.mxu0 0
        %5108 = vmatpush1.bf16.msra.mxu0 0
        %5109 = vmatprep.subr.bf16.mxu0 0
        %5110 = vmatpush1.bf16.msra.mxu0 0
        %5111 = vmatprep.subr.bf16.mxu0 0
        %5112 = vmatpush1.bf16.msra.mxu0 0
        %5113 = vmatprep.subr.bf16.mxu0 0
        %5114 = vmatpush1.bf16.msra.mxu0 0
        %5115 = vmatprep.subr.bf16.mxu0 0
        %5116 = vmatpush1.bf16.msra.mxu0 0
        %5117 = vmatprep.subr.bf16.mxu0 0
        %5118 = vmatpush1.bf16.msra.mxu0 0
        %5119 = vmatprep.subr.bf16.mxu0 0
        %5120 = vmatpush1.bf16.msra.mxu0 0
        %5121 = vmatprep.subr.bf16.mxu0 0
        %5122 = vmatpush1.bf16.msra.mxu0 %v4820
        %5123 = vmatprep.subr.bf16.mxu0 0
        %5124 = vmatpush2.bf16.msra.mxu0 0
        %5125 = vmatprep.subr.bf16.mxu0 0
        %5126 = vmatpush2.bf16.msra.mxu0 0
        %5127 = vmatprep.subr.bf16.mxu0 0
        %5128 = vmatpush2.bf16.msra.mxu0 0
        %5129 = vmatprep.subr.bf16.mxu0 0
        %5130 = vmatpush2.bf16.msra.mxu0 0
        %5131 = vmatprep.subr.bf16.mxu0 0
        %5132 = vmatpush2.bf16.msra.mxu0 0
        %5133 = vmatprep.subr.bf16.mxu0 0
        %5134 = vmatpush2.bf16.msra.mxu0 0
        %5135 = vmatprep.subr.bf16.mxu0 0
        %5136 = vmatpush2.bf16.msra.mxu0 0
        %5137 = vmatprep.subr.bf16.mxu0 0
        %5138 = vmatpush2.bf16.msra.mxu0 0
        %5139 = vmatprep.mubr.bf16.mxu0 0
        %5140 = vmatmul.mubr.bf16.gmra.mxu0 %v5105
        %v5141 = vpop.f32.mrf.mxu0
        %v5142 = vadd.f32 0.0, %v5141
        %v5143 = vpop.f32.mrf.mxu0
        %v5144 = vpop.f32.mrf.mxu0
        %v5145 = vadd.f32 0.0, %v5144
        %v5146 = vpop.f32.mrf.mxu0
        %5147 = vdwg.mxu0
        %v5149 = vsel %vm2941, %v5101, 0
        %5151 = vmatprep.subr.bf16.mxu0 0
        %5152 = vmatpush1.bf16.msra.mxu0 0
        %5153 = vmatprep.subr.bf16.mxu0 0
        %5154 = vmatpush1.bf16.msra.mxu0 0
        %5155 = vmatprep.subr.bf16.mxu0 0
        %5156 = vmatpush1.bf16.msra.mxu0 0
        %5157 = vmatprep.subr.bf16.mxu0 0
        %5158 = vmatpush1.bf16.msra.mxu0 0
        %5159 = vmatprep.subr.bf16.mxu0 0
        %5160 = vmatpush1.bf16.msra.mxu0 0
        %5161 = vmatprep.subr.bf16.mxu0 0
        %5162 = vmatpush1.bf16.msra.mxu0 0
        %5163 = vmatprep.subr.bf16.mxu0 0
        %5164 = vmatpush1.bf16.msra.mxu0 0
        %5165 = vmatprep.subr.bf16.mxu0 0
        %5166 = vmatpush1.bf16.msra.mxu0 %v4821
        %5167 = vmatprep.subr.bf16.mxu0 0
        %5168 = vmatpush2.bf16.msra.mxu0 0
        %5169 = vmatprep.subr.bf16.mxu0 0
        %5170 = vmatpush2.bf16.msra.mxu0 0
        %5171 = vmatprep.subr.bf16.mxu0 0
        %5172 = vmatpush2.bf16.msra.mxu0 0
        %5173 = vmatprep.subr.bf16.mxu0 0
        %5174 = vmatpush2.bf16.msra.mxu0 0
        %5175 = vmatprep.subr.bf16.mxu0 0
        %5176 = vmatpush2.bf16.msra.mxu0 0
        %5177 = vmatprep.subr.bf16.mxu0 0
        %5178 = vmatpush2.bf16.msra.mxu0 0
        %5179 = vmatprep.subr.bf16.mxu0 0
        %5180 = vmatpush2.bf16.msra.mxu0 0
        %5181 = vmatprep.subr.bf16.mxu0 0
        %5182 = vmatpush2.bf16.msra.mxu0 0
        %5183 = vmatprep.mubr.bf16.mxu0 0
        %5184 = vmatmul.mubr.bf16.gmra.mxu0 %v5149
        %v5185 = vpop.f32.mrf.mxu0
        %v5186 = vadd.f32 0.0, %v5185
        %v5187 = vpop.f32.mrf.mxu0
        %v5188 = vpop.f32.mrf.mxu0
        %v5189 = vadd.f32 0.0, %v5188
        %v5190 = vpop.f32.mrf.mxu0
        %5191 = vdwg.mxu0
        %v5193 = vsel %vm2941, %v5102, 0
        %5195 = vmatprep.subr.bf16.mxu0 0
        %5196 = vmatpush1.bf16.msra.mxu0 0
        %5197 = vmatprep.subr.bf16.mxu0 0
        %5198 = vmatpush1.bf16.msra.mxu0 0
        %5199 = vmatprep.subr.bf16.mxu0 0
        %5200 = vmatpush1.bf16.msra.mxu0 0
        %5201 = vmatprep.subr.bf16.mxu0 0
        %5202 = vmatpush1.bf16.msra.mxu0 0
        %5203 = vmatprep.subr.bf16.mxu0 0
        %5204 = vmatpush1.bf16.msra.mxu0 0
        %5205 = vmatprep.subr.bf16.mxu0 0
        %5206 = vmatpush1.bf16.msra.mxu0 0
        %5207 = vmatprep.subr.bf16.mxu0 0
        %5208 = vmatpush1.bf16.msra.mxu0 0
        %5209 = vmatprep.subr.bf16.mxu0 0
        %5210 = vmatpush1.bf16.msra.mxu0 %v4822
        %5211 = vmatprep.subr.bf16.mxu0 0
        %5212 = vmatpush2.bf16.msra.mxu0 0
        %5213 = vmatprep.subr.bf16.mxu0 0
        %5214 = vmatpush2.bf16.msra.mxu0 0
        %5215 = vmatprep.subr.bf16.mxu0 0
        %5216 = vmatpush2.bf16.msra.mxu0 0
        %5217 = vmatprep.subr.bf16.mxu0 0
        %5218 = vmatpush2.bf16.msra.mxu0 0
        %5219 = vmatprep.subr.bf16.mxu0 0
        %5220 = vmatpush2.bf16.msra.mxu0 0
        %5221 = vmatprep.subr.bf16.mxu0 0
        %5222 = vmatpush2.bf16.msra.mxu0 0
        %5223 = vmatprep.subr.bf16.mxu0 0
        %5224 = vmatpush2.bf16.msra.mxu0 0
        %5225 = vmatprep.subr.bf16.mxu0 0
        %5226 = vmatpush2.bf16.msra.mxu0 0
        %5227 = vmatprep.mubr.bf16.mxu0 0
        %5228 = vmatmul.mubr.bf16.gmra.mxu0 %v5193
        %v5229 = vpop.f32.mrf.mxu0
        %v5230 = vadd.f32 0.0, %v5229
        %v5231 = vpop.f32.mrf.mxu0
        %v5232 = vpop.f32.mrf.mxu0
        %v5233 = vadd.f32 0.0, %v5232
        %v5234 = vpop.f32.mrf.mxu0
        %5235 = vdwg.mxu0
        %v5237 = vsel %vm2941, %v5103, 0
        %5239 = vmatprep.subr.bf16.mxu0 0
        %5240 = vmatpush1.bf16.msra.mxu0 0
        %5241 = vmatprep.subr.bf16.mxu0 0
        %5242 = vmatpush1.bf16.msra.mxu0 0
        %5243 = vmatprep.subr.bf16.mxu0 0
        %5244 = vmatpush1.bf16.msra.mxu0 0
        %5245 = vmatprep.subr.bf16.mxu0 0
        %5246 = vmatpush1.bf16.msra.mxu0 0
        %5247 = vmatprep.subr.bf16.mxu0 0
        %5248 = vmatpush1.bf16.msra.mxu0 0
        %5249 = vmatprep.subr.bf16.mxu0 0
        %5250 = vmatpush1.bf16.msra.mxu0 0
        %5251 = vmatprep.subr.bf16.mxu0 0
        %5252 = vmatpush1.bf16.msra.mxu0 0
        %5253 = vmatprep.subr.bf16.mxu0 0
        %5254 = vmatpush1.bf16.msra.mxu0 %v4823
        %5255 = vmatprep.subr.bf16.mxu0 0
        %5256 = vmatpush2.bf16.msra.mxu0 0
        %5257 = vmatprep.subr.bf16.mxu0 0
        %5258 = vmatpush2.bf16.msra.mxu0 0
        %5259 = vmatprep.subr.bf16.mxu0 0
        %5260 = vmatpush2.bf16.msra.mxu0 0
        %5261 = vmatprep.subr.bf16.mxu0 0
        %5262 = vmatpush2.bf16.msra.mxu0 0
        %5263 = vmatprep.subr.bf16.mxu0 0
        %5264 = vmatpush2.bf16.msra.mxu0 0
        %5265 = vmatprep.subr.bf16.mxu0 0
        %5266 = vmatpush2.bf16.msra.mxu0 0
        %5267 = vmatprep.subr.bf16.mxu0 0
        %5268 = vmatpush2.bf16.msra.mxu0 0
        %5269 = vmatprep.subr.bf16.mxu0 0
        %5270 = vmatpush2.bf16.msra.mxu0 0
        %5271 = vmatprep.mubr.bf16.mxu0 0
        %5272 = vmatmul.mubr.bf16.gmra.mxu0 %v5237
        %v5273 = vpop.f32.mrf.mxu0
        %v5274 = vadd.f32 0.0, %v5273
        %v5275 = vpop.f32.mrf.mxu0
        %v5276 = vpop.f32.mrf.mxu0
        %v5277 = vadd.f32 0.0, %v5276
        %v5278 = vpop.f32.mrf.mxu0
        %5279 = vdwg.mxu0
        %v5280 = vcombine.low %v5142, %v5230
        %v5281 = vcombine.high %v5142, %v5230
        %v5283 = vunpack.c.l.s4 1983009808
        %v5284 = vunpack.c.0.s8 %v5283
        %v5285 = vlaneseq
        %v5286 = vshrl.u32 %v5285, 7
        %v5287 = vsub.s32 %v5284, %v5286
        %v5288 = vrot.slane %v5280, %v5287
        %v5290 = vunpack.c.l.s4 1983009808
        %v5291 = vunpack.c.0.s8 %v5290
        %v5292 = vlaneseq
        %v5293 = vshrl.u32 %v5292, 7
        %v5294 = vsub.s32 %v5291, %v5293
        %v5295 = vrot.slane %v5281, %v5294
        %v5296 = vcombine.low %v5186, %v5274
        %v5297 = vcombine.high %v5186, %v5274
        %v5299 = vunpack.c.l.s4 1983009808
        %v5300 = vunpack.c.0.s8 %v5299
        %v5301 = vlaneseq
        %v5302 = vshrl.u32 %v5301, 7
        %v5303 = vsub.s32 %v5300, %v5302
        %v5304 = vrot.slane %v5296, %v5303
        %v5306 = vunpack.c.l.s4 1983009808
        %v5307 = vunpack.c.0.s8 %v5306
        %v5308 = vlaneseq
        %v5309 = vshrl.u32 %v5308, 7
        %v5310 = vsub.s32 %v5307, %v5309
        %v5311 = vrot.slane %v5297, %v5310
        %v5312 = vcombine.low %v5288, %v5304
        %v5313 = vcombine.high %v5288, %v5304
        %v5315 = vunpack.c.l.s4 1934713408
        %v5316 = vunpack.c.0.s8 %v5315
        %v5317 = vlaneseq
        %v5318 = vshrl.u32 %v5317, 7
        %v5319 = vsub.s32 %v5316, %v5318
        %v5320 = vrot.slane %v5312, %v5319
        %v5322 = vunpack.c.l.s4 1934713408
        %v5323 = vunpack.c.0.s8 %v5322
        %v5324 = vlaneseq
        %v5325 = vshrl.u32 %v5324, 7
        %v5326 = vsub.s32 %v5323, %v5325
        %v5327 = vrot.slane %v5313, %v5326
        %v5328 = vcombine.low %v5295, %v5311
        %v5329 = vcombine.high %v5295, %v5311
        %v5331 = vunpack.c.l.s4 1934713408
        %v5332 = vunpack.c.0.s8 %v5331
        %v5333 = vlaneseq
        %v5334 = vshrl.u32 %v5333, 7
        %v5335 = vsub.s32 %v5332, %v5334
        %v5336 = vrot.slane %v5328, %v5335
        %v5338 = vunpack.c.l.s4 1934713408
        %v5339 = vunpack.c.0.s8 %v5338
        %v5340 = vlaneseq
        %v5341 = vshrl.u32 %v5340, 7
        %v5342 = vsub.s32 %v5339, %v5341
        %v5343 = vrot.slane %v5329, %v5342
        %v5344 = vcombine.high %v5320, 0.0
        %v5345 = vcombine.high %v5327, 0.0
        %v5346 = vcombine.high %v5336, 0.0
        %v5347 = vcombine.high %v5343, 0.0
        %v5348 = vcombine.low %v5145, %v5233
        %v5349 = vcombine.high %v5145, %v5233
        %v5351 = vunpack.c.l.s4 1983009808
        %v5352 = vunpack.c.0.s8 %v5351
        %v5353 = vlaneseq
        %v5354 = vshrl.u32 %v5353, 7
        %v5355 = vsub.s32 %v5352, %v5354
        %v5356 = vrot.slane %v5348, %v5355
        %v5358 = vunpack.c.l.s4 1983009808
        %v5359 = vunpack.c.0.s8 %v5358
        %v5360 = vlaneseq
        %v5361 = vshrl.u32 %v5360, 7
        %v5362 = vsub.s32 %v5359, %v5361
        %v5363 = vrot.slane %v5349, %v5362
        %v5364 = vcombine.low %v5189, %v5277
        %v5365 = vcombine.high %v5189, %v5277
        %v5367 = vunpack.c.l.s4 1983009808
        %v5368 = vunpack.c.0.s8 %v5367
        %v5369 = vlaneseq
        %v5370 = vshrl.u32 %v5369, 7
        %v5371 = vsub.s32 %v5368, %v5370
        %v5372 = vrot.slane %v5364, %v5371
        %v5374 = vunpack.c.l.s4 1983009808
        %v5375 = vunpack.c.0.s8 %v5374
        %v5376 = vlaneseq
        %v5377 = vshrl.u32 %v5376, 7
        %v5378 = vsub.s32 %v5375, %v5377
        %v5379 = vrot.slane %v5365, %v5378
        %v5380 = vcombine.low %v5356, %v5372
        %v5381 = vcombine.high %v5356, %v5372
        %v5383 = vunpack.c.l.s4 1934713408
        %v5384 = vunpack.c.0.s8 %v5383
        %v5385 = vlaneseq
        %v5386 = vshrl.u32 %v5385, 7
        %v5387 = vsub.s32 %v5384, %v5386
        %v5388 = vrot.slane %v5380, %v5387
        %v5390 = vunpack.c.l.s4 1934713408
        %v5391 = vunpack.c.0.s8 %v5390
        %v5392 = vlaneseq
        %v5393 = vshrl.u32 %v5392, 7
        %v5394 = vsub.s32 %v5391, %v5393
        %v5395 = vrot.slane %v5381, %v5394
        %v5396 = vcombine.low %v5363, %v5379
        %v5397 = vcombine.high %v5363, %v5379
        %v5399 = vunpack.c.l.s4 1934713408
        %v5400 = vunpack.c.0.s8 %v5399
        %v5401 = vlaneseq
        %v5402 = vshrl.u32 %v5401, 7
        %v5403 = vsub.s32 %v5400, %v5402
        %v5404 = vrot.slane %v5396, %v5403
        %v5406 = vunpack.c.l.s4 1934713408
        %v5407 = vunpack.c.0.s8 %v5406
        %v5408 = vlaneseq
        %v5409 = vshrl.u32 %v5408, 7
        %v5410 = vsub.s32 %v5407, %v5409
        %v5411 = vrot.slane %v5397, %v5410
        %v5412 = vcombine.high %v5388, 0.0
        %v5413 = vcombine.high %v5395, 0.0
        %v5414 = vcombine.high %v5404, 0.0
        %v5415 = vcombine.high %v5411, 0.0
        %v5416 = vcombine.low %v5320, %v5327
        %v5418 = vunpack.c.l.s4 1983009808
        %v5419 = vunpack.c.0.s8 %v5418
        %v5420 = vlaneseq
        %v5421 = vshrl.u32 %v5420, 7
        %v5422 = vsub.s32 %v5419, %v5421
        %v5423 = vrot.slane %v5416, %v5422
        %v5424 = vcombine.low %v5344, %v5345
        %v5426 = vunpack.c.l.s4 1983009808
        %v5427 = vunpack.c.0.s8 %v5426
        %v5428 = vlaneseq
        %v5429 = vshrl.u32 %v5428, 7
        %v5430 = vsub.s32 %v5427, %v5429
        %v5431 = vrot.slane %v5424, %v5430
        %v5432 = vcombine.low %v5336, %v5343
        %v5434 = vunpack.c.l.s4 1983009808
        %v5435 = vunpack.c.0.s8 %v5434
        %v5436 = vlaneseq
        %v5437 = vshrl.u32 %v5436, 7
        %v5438 = vsub.s32 %v5435, %v5437
        %v5439 = vrot.slane %v5432, %v5438
        %v5440 = vcombine.low %v5346, %v5347
        %v5442 = vunpack.c.l.s4 1983009808
        %v5443 = vunpack.c.0.s8 %v5442
        %v5444 = vlaneseq
        %v5445 = vshrl.u32 %v5444, 7
        %v5446 = vsub.s32 %v5443, %v5445
        %v5447 = vrot.slane %v5440, %v5446
        %v5448 = vcombine.low %v5423, %v5431
        %v5449 = vcombine.high %v5423, %v5431
        %v5451 = vunpack.c.l.s4 1934713408
        %v5452 = vunpack.c.0.s8 %v5451
        %v5453 = vlaneseq
        %v5454 = vshrl.u32 %v5453, 7
        %v5455 = vsub.s32 %v5452, %v5454
        %v5456 = vrot.slane %v5448, %v5455
        %v5458 = vunpack.c.l.s4 1934713408
        %v5459 = vunpack.c.0.s8 %v5458
        %v5460 = vlaneseq
        %v5461 = vshrl.u32 %v5460, 7
        %v5462 = vsub.s32 %v5459, %v5461
        %v5463 = vrot.slane %v5449, %v5462
        %v5464 = vcombine.low %v5439, %v5447
        %v5465 = vcombine.high %v5439, %v5447
        %v5467 = vunpack.c.l.s4 1934713408
        %v5468 = vunpack.c.0.s8 %v5467
        %v5469 = vlaneseq
        %v5470 = vshrl.u32 %v5469, 7
        %v5471 = vsub.s32 %v5468, %v5470
        %v5472 = vrot.slane %v5464, %v5471
        %v5474 = vunpack.c.l.s4 1934713408
        %v5475 = vunpack.c.0.s8 %v5474
        %v5476 = vlaneseq
        %v5477 = vshrl.u32 %v5476, 7
        %v5478 = vsub.s32 %v5475, %v5477
        %v5479 = vrot.slane %v5465, %v5478
        %v5480 = vcombine.low %v5456, %v5472
        %v5481 = vcombine.high %v5456, %v5472
        %v5482 = vcombine.low %v5463, %v5479
        %v5483 = vcombine.high %v5463, %v5479
        %v5484 = vcombine.low %v5388, %v5395
        %v5486 = vunpack.c.l.s4 1983009808
        %v5487 = vunpack.c.0.s8 %v5486
        %v5488 = vlaneseq
        %v5489 = vshrl.u32 %v5488, 7
        %v5490 = vsub.s32 %v5487, %v5489
        %v5491 = vrot.slane %v5484, %v5490
        %v5492 = vcombine.low %v5412, %v5413
        %v5494 = vunpack.c.l.s4 1983009808
        %v5495 = vunpack.c.0.s8 %v5494
        %v5496 = vlaneseq
        %v5497 = vshrl.u32 %v5496, 7
        %v5498 = vsub.s32 %v5495, %v5497
        %v5499 = vrot.slane %v5492, %v5498
        %v5500 = vcombine.low %v5404, %v5411
        %v5502 = vunpack.c.l.s4 1983009808
        %v5503 = vunpack.c.0.s8 %v5502
        %v5504 = vlaneseq
        %v5505 = vshrl.u32 %v5504, 7
        %v5506 = vsub.s32 %v5503, %v5505
        %v5507 = vrot.slane %v5500, %v5506
        %v5508 = vcombine.low %v5414, %v5415
        %v5510 = vunpack.c.l.s4 1983009808
        %v5511 = vunpack.c.0.s8 %v5510
        %v5512 = vlaneseq
        %v5513 = vshrl.u32 %v5512, 7
        %v5514 = vsub.s32 %v5511, %v5513
        %v5515 = vrot.slane %v5508, %v5514
        %v5516 = vcombine.low %v5491, %v5499
        %v5517 = vcombine.high %v5491, %v5499
        %v5519 = vunpack.c.l.s4 1934713408
        %v5520 = vunpack.c.0.s8 %v5519
        %v5521 = vlaneseq
        %v5522 = vshrl.u32 %v5521, 7
        %v5523 = vsub.s32 %v5520, %v5522
        %v5524 = vrot.slane %v5516, %v5523
        %v5526 = vunpack.c.l.s4 1934713408
        %v5527 = vunpack.c.0.s8 %v5526
        %v5528 = vlaneseq
        %v5529 = vshrl.u32 %v5528, 7
        %v5530 = vsub.s32 %v5527, %v5529
        %v5531 = vrot.slane %v5517, %v5530
        %v5532 = vcombine.low %v5507, %v5515
        %v5533 = vcombine.high %v5507, %v5515
        %v5535 = vunpack.c.l.s4 1934713408
        %v5536 = vunpack.c.0.s8 %v5535
        %v5537 = vlaneseq
        %v5538 = vshrl.u32 %v5537, 7
        %v5539 = vsub.s32 %v5536, %v5538
        %v5540 = vrot.slane %v5532, %v5539
        %v5542 = vunpack.c.l.s4 1934713408
        %v5543 = vunpack.c.0.s8 %v5542
        %v5544 = vlaneseq
        %v5545 = vshrl.u32 %v5544, 7
        %v5546 = vsub.s32 %v5543, %v5545
        %v5547 = vrot.slane %v5533, %v5546
        %v5548 = vcombine.low %v5524, %v5540
        %v5549 = vcombine.high %v5524, %v5540
        %v5550 = vcombine.low %v5531, %v5547
        %v5551 = vcombine.high %v5531, %v5547
        %5554 = vrot.lane.b32.xlu0 %v5481, 32
        %v5555 = vpop.permute.xlu0 %5554
        %5556 = vrot.lane.b32.xlu0 %v5549, 32
        %v5557 = vpop.permute.xlu0 %5556
        %5562 = vrot.lane.b32.xlu0 %v5482, 64
        %v5563 = vpop.permute.xlu0 %5562
        %5564 = vrot.lane.b32.xlu0 %v5550, 64
        %v5565 = vpop.permute.xlu0 %5564
        %5570 = vrot.lane.b32.xlu0 %v5483, 96
        %v5571 = vpop.permute.xlu0 %5570
        %5572 = vrot.lane.b32.xlu0 %v5551, 96
        %v5573 = vpop.permute.xlu0 %5572
        %v5576 = vsel %vm2752, %v5480, %v5555
        %v5577 = vsel %vm2752, %v5548, %v5557
        %v5578 = vsel %vm3508, %v5576, %v5563
        %v5579 = vsel %vm3508, %v5577, %v5565
        %v5580 = vsel %vm3511, %v5578, %v5571
        %v5581 = vsel %vm3511, %v5579, %v5573
        %v5582 = vld [vmem:[%s1279] sm:$0xf]
        %v5583 = vld [vmem:[%s1279 + $0x4] sm:$0xf]
        %v5584 = vld [vmem:[%s1279 + $0x8] sm:$0xf]
        %v5585 = vld [vmem:[%s1279 + $0xc] sm:$0xf]
        %v5586 = vld [vmem:[%s1279 + $0x10] sm:$0xf]
        %v5587 = vld [vmem:[%s1279 + $0x14] sm:$0xf]
        %v5588 = vld [vmem:[%s1279 + $0x18] sm:$0xf]
        %v5589 = vld [vmem:[%s1279 + $0x1c] sm:$0xf]
        %v5590 = vld [vmem:[%s1279 + $0x20] sm:$0xf]
        %v5591 = vld [vmem:[%s1279 + $0x24] sm:$0xf]
        %v5592 = vld [vmem:[%s1279 + $0x28] sm:$0xf]
        %v5593 = vld [vmem:[%s1279 + $0x2c] sm:$0xf]
        %v5594 = vld [vmem:[%s1279 + $0x30] sm:$0xf]
        %v5595 = vld [vmem:[%s1279 + $0x34] sm:$0xf]
        %v5596 = vld [vmem:[%s1279 + $0x38] sm:$0xf]
        %v5597 = vld [vmem:[%s1279 + $0x3c] sm:$0xf]
        %v5598 = vpack.c.bf16 %v5581, %v5580
        %v5599 = vld [vmem:[%s1287] sm:$0x1]
        %v5601 = vlaneseq
        %v5602 = vshrl.u32 %v5601, 7
        %v5603 = vsub.s32 0, %v5602
        %v5604 = vrot.slane %v5599, %v5603
        %v5622 = vunpack.c.l.b16 %v5582
        %v5623 = vunpack.c.l.b16 %v5583
        %v5624 = vunpack.c.l.b16 %v5584
        %v5625 = vunpack.c.l.b16 %v5585
        %v5626 = vunpack.c.l.b16 %v5586
        %v5627 = vunpack.c.l.b16 %v5587
        %v5628 = vunpack.c.l.b16 %v5588
        %v5629 = vunpack.c.l.b16 %v5589
        %v5630 = vunpack.c.l.b16 %v5590
        %v5631 = vunpack.c.l.b16 %v5591
        %v5632 = vunpack.c.l.b16 %v5592
        %v5633 = vunpack.c.l.b16 %v5593
        %v5634 = vunpack.c.l.b16 %v5594
        %v5635 = vunpack.c.l.b16 %v5595
        %v5636 = vunpack.c.l.b16 %v5596
        %v5637 = vunpack.c.l.b16 %v5597
        %v5638 = vpack.c.b16 %v5623, %v5622
        %v5639 = vpack.c.b16 %v5625, %v5624
        %v5640 = vpack.c.b16 %v5627, %v5626
        %v5641 = vpack.c.b16 %v5629, %v5628
        %v5642 = vpack.c.b16 %v5631, %v5630
        %v5643 = vpack.c.b16 %v5633, %v5632
        %v5644 = vpack.c.b16 %v5635, %v5634
        %v5645 = vpack.c.b16 %v5637, %v5636
        %5654 = vmatprep.subr.bf16.mxu0 0
        %5655 = vmatpush1.bf16.msra.mxu0 %v5645
        %5656 = vmatprep.subr.bf16.mxu0 0
        %5657 = vmatpush1.bf16.msra.mxu0 %v5644
        %5658 = vmatprep.subr.bf16.mxu0 0
        %5659 = vmatpush1.bf16.msra.mxu0 %v5643
        %5660 = vmatprep.subr.bf16.mxu0 0
        %5661 = vmatpush1.bf16.msra.mxu0 %v5642
        %5662 = vmatprep.subr.bf16.mxu0 0
        %5663 = vmatpush1.bf16.msra.mxu0 %v5641
        %5664 = vmatprep.subr.bf16.mxu0 0
        %5665 = vmatpush1.bf16.msra.mxu0 %v5640
        %5666 = vmatprep.subr.bf16.mxu0 0
        %5667 = vmatpush1.bf16.msra.mxu0 %v5639
        %5668 = vmatprep.subr.bf16.mxu0 0
        %5669 = vmatpush1.bf16.msra.mxu0 %v5638
        %5670 = vmatprep.subr.bf16.mxu0 0
        %5671 = vmatpush2.bf16.msra.mxu0 0
        %5672 = vmatprep.subr.bf16.mxu0 0
        %5673 = vmatpush2.bf16.msra.mxu0 0
        %5674 = vmatprep.subr.bf16.mxu0 0
        %5675 = vmatpush2.bf16.msra.mxu0 0
        %5676 = vmatprep.subr.bf16.mxu0 0
        %5677 = vmatpush2.bf16.msra.mxu0 0
        %5678 = vmatprep.subr.bf16.mxu0 0
        %5679 = vmatpush2.bf16.msra.mxu0 0
        %5680 = vmatprep.subr.bf16.mxu0 0
        %5681 = vmatpush2.bf16.msra.mxu0 0
        %5682 = vmatprep.subr.bf16.mxu0 0
        %5683 = vmatpush2.bf16.msra.mxu0 0
        %5684 = vmatprep.subr.bf16.mxu0 0
        %5685 = vmatpush2.bf16.msra.mxu0 0
        %5686 = vmatprep.mubr.bf16.mxu0 0
        %5687 = vmatmul.mubr.bf16.gmra.mxu0 %v5598
        %v5688 = vpop.f32.mrf.mxu0
        %v5689 = vadd.f32 %v5604, %v5688
        %v5690 = vpop.f32.mrf.mxu0
        %v5691 = vpop.f32.mrf.mxu0
        %v5692 = vadd.f32 %v5604, %v5691
        %v5693 = vpop.f32.mrf.mxu0
        %5694 = vdwg.mxu0
        %v5695 = vadd.f32 %v3627, %v5689
        %v5696 = vadd.f32 %v3628, %v5692
        %v5697 = vld [vmem:[%s1295] sm:$0x1]
        %v5698 = vld [vmem:[%s1303] sm:$0x1]
        %5699 = vadd.xlane.f32.xlu0 %v5695
        %v5700 = vpop.xlane.xlu0 %5699
        %5701 = vadd.xlane.f32.xlu0 %v5696
        %v5702 = vpop.xlane.xlu0 %5701
        %v5703 = vmul.f32 %v5700, %v1565
        %v5704 = vmul.f32 %v5702, %v1565
        %v5705 = vsub.f32 %v5695, %v5703
        %v5706 = vsub.f32 %v5696, %v5704
        %v5707 = vmul.f32 %v5705, %v5705
        %v5708 = vmul.f32 %v5706, %v5706
        %5709 = vadd.xlane.f32.xlu0 %v5707
        %v5710 = vpop.xlane.xlu0 %5709
        %5711 = vadd.xlane.f32.xlu0 %v5708
        %v5712 = vpop.xlane.xlu0 %5711
        %v5713 = vmul.f32 %v5710, %v1565
        %v5714 = vmul.f32 %v5712, %v1565
        %v5715 = vadd.f32 %v5713, 1e-06
        %v5716 = vadd.f32 %v5714, 1e-06
        %v5717 = vrsqrt.pop %v5715
        %v5718 = vrsqrt.pop %v5716
        %v5719 = vmul.f32 %v5705, %v5717
        %v5720 = vmul.f32 %v5706, %v5718
        %v5722 = vlaneseq
        %v5723 = vshrl.u32 %v5722, 7
        %v5724 = vsub.s32 0, %v5723
        %v5725 = vrot.slane %v5697, %v5724
        %v5727 = vmul.f32 %v5719, %v5725
        %v5728 = vmul.f32 %v5720, %v5725
        %v5730 = vlaneseq
        %v5731 = vshrl.u32 %v5730, 7
        %v5732 = vsub.s32 0, %v5731
        %v5733 = vrot.slane %v5698, %v5732
        %v5735 = vadd.f32 %v5727, %v5733
        %v5736 = vadd.f32 %v5728, %v5733
        %v5737 = vld [vmem:[%s1312] sm:$0xff]
        %v5738 = vld [vmem:[%s1312 + $0x8] sm:$0xff]
        %v5739 = vld [vmem:[%s1312 + $0x10] sm:$0xff]
        %v5740 = vld [vmem:[%s1312 + $0x18] sm:$0xff]
        %v5741 = vld [vmem:[%s1312 + $0x20] sm:$0xff]
        %v5742 = vld [vmem:[%s1312 + $0x28] sm:$0xff]
        %v5743 = vld [vmem:[%s1312 + $0x30] sm:$0xff]
        %v5744 = vld [vmem:[%s1312 + $0x38] sm:$0xff]
        %v5745 = vld [vmem:[%s1312 + $0x40] sm:$0xff]
        %v5746 = vld [vmem:[%s1312 + $0x48] sm:$0xff]
        %v5747 = vld [vmem:[%s1312 + $0x50] sm:$0xff]
        %v5748 = vld [vmem:[%s1312 + $0x58] sm:$0xff]
        %v5749 = vld [vmem:[%s1312 + $0x60] sm:$0xff]
        %v5750 = vld [vmem:[%s1312 + $0x68] sm:$0xff]
        %v5751 = vld [vmem:[%s1312 + $0x70] sm:$0xff]
        %v5752 = vld [vmem:[%s1312 + $0x78] sm:$0xff]
        %v5753 = vpack.c.bf16 %v5736, %v5735
        %v5754 = vld [vmem:[%s1321] sm:$0x3]
        %v5756 = vlaneseq
        %v5757 = vshrl.u32 %v5756, 7
        %v5758 = vsub.s32 0, %v5757
        %v5759 = vrot.slane %v5754, %v5758
        %v5760 = vlaneseq
        %v5761 = vshrl.u32 %v5760, 7
        %v5762 = vsub.s32 1, %v5761
        %v5763 = vrot.slane %v5754, %v5762
        %v5782 = vunpack.c.l.b16 %v5737
        %v5783 = vunpack.c.h.b16 %v5737
        %v5784 = vunpack.c.l.b16 %v5738
        %v5785 = vunpack.c.h.b16 %v5738
        %v5786 = vunpack.c.l.b16 %v5739
        %v5787 = vunpack.c.h.b16 %v5739
        %v5788 = vunpack.c.l.b16 %v5740
        %v5789 = vunpack.c.h.b16 %v5740
        %v5790 = vunpack.c.l.b16 %v5741
        %v5791 = vunpack.c.h.b16 %v5741
        %v5792 = vunpack.c.l.b16 %v5742
        %v5793 = vunpack.c.h.b16 %v5742
        %v5794 = vunpack.c.l.b16 %v5743
        %v5795 = vunpack.c.h.b16 %v5743
        %v5796 = vunpack.c.l.b16 %v5744
        %v5797 = vunpack.c.h.b16 %v5744
        %v5798 = vunpack.c.l.b16 %v5745
        %v5799 = vunpack.c.h.b16 %v5745
        %v5800 = vunpack.c.l.b16 %v5746
        %v5801 = vunpack.c.h.b16 %v5746
        %v5802 = vunpack.c.l.b16 %v5747
        %v5803 = vunpack.c.h.b16 %v5747
        %v5804 = vunpack.c.l.b16 %v5748
        %v5805 = vunpack.c.h.b16 %v5748
        %v5806 = vunpack.c.l.b16 %v5749
        %v5807 = vunpack.c.h.b16 %v5749
        %v5808 = vunpack.c.l.b16 %v5750
        %v5809 = vunpack.c.h.b16 %v5750
        %v5810 = vunpack.c.l.b16 %v5751
        %v5811 = vunpack.c.h.b16 %v5751
        %v5812 = vunpack.c.l.b16 %v5752
        %v5813 = vunpack.c.h.b16 %v5752
        %v5814 = vpack.c.b16 %v5784, %v5782
        %v5815 = vpack.c.b16 %v5785, %v5783
        %v5816 = vpack.c.b16 %v5788, %v5786
        %v5817 = vpack.c.b16 %v5789, %v5787
        %v5818 = vpack.c.b16 %v5792, %v5790
        %v5819 = vpack.c.b16 %v5793, %v5791
        %v5820 = vpack.c.b16 %v5796, %v5794
        %v5821 = vpack.c.b16 %v5797, %v5795
        %v5822 = vpack.c.b16 %v5800, %v5798
        %v5823 = vpack.c.b16 %v5801, %v5799
        %v5824 = vpack.c.b16 %v5804, %v5802
        %v5825 = vpack.c.b16 %v5805, %v5803
        %v5826 = vpack.c.b16 %v5808, %v5806
        %v5827 = vpack.c.b16 %v5809, %v5807
        %v5828 = vpack.c.b16 %v5812, %v5810
        %v5829 = vpack.c.b16 %v5813, %v5811
        %5846 = vmatprep.subr.bf16.mxu0 %v5829
        %5847 = vmatpush1.bf16.msra.mxu0 %v5828
        %5848 = vmatprep.subr.bf16.mxu0 %v5827
        %5849 = vmatpush1.bf16.msra.mxu0 %v5826
        %5850 = vmatprep.subr.bf16.mxu0 %v5825
        %5851 = vmatpush1.bf16.msra.mxu0 %v5824
        %5852 = vmatprep.subr.bf16.mxu0 %v5823
        %5853 = vmatpush1.bf16.msra.mxu0 %v5822
        %5854 = vmatprep.subr.bf16.mxu0 %v5821
        %5855 = vmatpush1.bf16.msra.mxu0 %v5820
        %5856 = vmatprep.subr.bf16.mxu0 %v5819
        %5857 = vmatpush1.bf16.msra.mxu0 %v5818
        %5858 = vmatprep.subr.bf16.mxu0 %v5817
        %5859 = vmatpush1.bf16.msra.mxu0 %v5816
        %5860 = vmatprep.subr.bf16.mxu0 %v5815
        %5861 = vmatpush1.bf16.msra.mxu0 %v5814
        %5862 = vmatprep.subr.bf16.mxu0 0
        %5863 = vmatpush2.bf16.msra.mxu0 0
        %5864 = vmatprep.subr.bf16.mxu0 0
        %5865 = vmatpush2.bf16.msra.mxu0 0
        %5866 = vmatprep.subr.bf16.mxu0 0
        %5867 = vmatpush2.bf16.msra.mxu0 0
        %5868 = vmatprep.subr.bf16.mxu0 0
        %5869 = vmatpush2.bf16.msra.mxu0 0
        %5870 = vmatprep.subr.bf16.mxu0 0
        %5871 = vmatpush2.bf16.msra.mxu0 0
        %5872 = vmatprep.subr.bf16.mxu0 0
        %5873 = vmatpush2.bf16.msra.mxu0 0
        %5874 = vmatprep.subr.bf16.mxu0 0
        %5875 = vmatpush2.bf16.msra.mxu0 0
        %5876 = vmatprep.subr.bf16.mxu0 0
        %5877 = vmatpush2.bf16.msra.mxu0 0
        %5878 = vmatprep.mubr.bf16.mxu0 0
        %5879 = vmatmul.mubr.bf16.gmra.mxu0 %v5753
        %v5880 = vpop.f32.mrf.mxu0
        %v5881 = vadd.f32 %v5759, %v5880
        %v5882 = vpop.f32.mrf.mxu0
        %v5883 = vadd.f32 %v5763, %v5882
        %v5884 = vpop.f32.mrf.mxu0
        %v5885 = vadd.f32 %v5759, %v5884
        %v5886 = vpop.f32.mrf.mxu0
        %v5887 = vadd.f32 %v5763, %v5886
        %5888 = vdwg.mxu0
        %v5889 = vmax.f32 %v5881, 0.0
        %v5890 = vmax.f32 %v5883, 0.0
        %v5891 = vmax.f32 %v5885, 0.0
        %v5892 = vmax.f32 %v5887, 0.0
        %v5893 = vld [vmem:[%s1330] sm:$0xf]
        %v5894 = vld [vmem:[%s1330 + $0x4] sm:$0xf]
        %v5895 = vld [vmem:[%s1330 + $0x8] sm:$0xf]
        %v5896 = vld [vmem:[%s1330 + $0xc] sm:$0xf]
        %v5897 = vld [vmem:[%s1330 + $0x10] sm:$0xf]
        %v5898 = vld [vmem:[%s1330 + $0x14] sm:$0xf]
        %v5899 = vld [vmem:[%s1330 + $0x18] sm:$0xf]
        %v5900 = vld [vmem:[%s1330 + $0x1c] sm:$0xf]
        %v5901 = vld [vmem:[%s1330 + $0x20] sm:$0xf]
        %v5902 = vld [vmem:[%s1330 + $0x24] sm:$0xf]
        %v5903 = vld [vmem:[%s1330 + $0x28] sm:$0xf]
        %v5904 = vld [vmem:[%s1330 + $0x2c] sm:$0xf]
        %v5905 = vld [vmem:[%s1330 + $0x30] sm:$0xf]
        %v5906 = vld [vmem:[%s1330 + $0x34] sm:$0xf]
        %v5907 = vld [vmem:[%s1330 + $0x38] sm:$0xf]
        %v5908 = vld [vmem:[%s1330 + $0x3c] sm:$0xf]
        %v5909 = vld [vmem:[%s1330 + $0x40] sm:$0xf]
        %v5910 = vld [vmem:[%s1330 + $0x44] sm:$0xf]
        %v5911 = vld [vmem:[%s1330 + $0x48] sm:$0xf]
        %v5912 = vld [vmem:[%s1330 + $0x4c] sm:$0xf]
        %v5913 = vld [vmem:[%s1330 + $0x50] sm:$0xf]
        %v5914 = vld [vmem:[%s1330 + $0x54] sm:$0xf]
        %v5915 = vld [vmem:[%s1330 + $0x58] sm:$0xf]
        %v5916 = vld [vmem:[%s1330 + $0x5c] sm:$0xf]
        %v5917 = vld [vmem:[%s1330 + $0x60] sm:$0xf]
        %v5918 = vld [vmem:[%s1330 + $0x64] sm:$0xf]
        %v5919 = vld [vmem:[%s1330 + $0x68] sm:$0xf]
        %v5920 = vld [vmem:[%s1330 + $0x6c] sm:$0xf]
        %v5921 = vld [vmem:[%s1330 + $0x70] sm:$0xf]
        %v5922 = vld [vmem:[%s1330 + $0x74] sm:$0xf]
        %v5923 = vld [vmem:[%s1330 + $0x78] sm:$0xf]
        %v5924 = vld [vmem:[%s1330 + $0x7c] sm:$0xf]
        %v5925 = vpack.c.bf16 %v5891, %v5889
        %v5926 = vpack.c.bf16 %v5892, %v5890
        %v5927 = vld [vmem:[%s1338] sm:$0x1]
        %v5929 = vlaneseq
        %v5930 = vshrl.u32 %v5929, 7
        %v5931 = vsub.s32 0, %v5930
        %v5932 = vrot.slane %v5927, %v5931
        %v5966 = vunpack.c.l.b16 %v5893
        %v5967 = vunpack.c.l.b16 %v5894
        %v5968 = vunpack.c.l.b16 %v5895
        %v5969 = vunpack.c.l.b16 %v5896
        %v5970 = vunpack.c.l.b16 %v5897
        %v5971 = vunpack.c.l.b16 %v5898
        %v5972 = vunpack.c.l.b16 %v5899
        %v5973 = vunpack.c.l.b16 %v5900
        %v5974 = vunpack.c.l.b16 %v5901
        %v5975 = vunpack.c.l.b16 %v5902
        %v5976 = vunpack.c.l.b16 %v5903
        %v5977 = vunpack.c.l.b16 %v5904
        %v5978 = vunpack.c.l.b16 %v5905
        %v5979 = vunpack.c.l.b16 %v5906
        %v5980 = vunpack.c.l.b16 %v5907
        %v5981 = vunpack.c.l.b16 %v5908
        %v5982 = vunpack.c.l.b16 %v5909
        %v5983 = vunpack.c.l.b16 %v5910
        %v5984 = vunpack.c.l.b16 %v5911
        %v5985 = vunpack.c.l.b16 %v5912
        %v5986 = vunpack.c.l.b16 %v5913
        %v5987 = vunpack.c.l.b16 %v5914
        %v5988 = vunpack.c.l.b16 %v5915
        %v5989 = vunpack.c.l.b16 %v5916
        %v5990 = vunpack.c.l.b16 %v5917
        %v5991 = vunpack.c.l.b16 %v5918
        %v5992 = vunpack.c.l.b16 %v5919
        %v5993 = vunpack.c.l.b16 %v5920
        %v5994 = vunpack.c.l.b16 %v5921
        %v5995 = vunpack.c.l.b16 %v5922
        %v5996 = vunpack.c.l.b16 %v5923
        %v5997 = vunpack.c.l.b16 %v5924
        %v5998 = vpack.c.b16 %v5967, %v5966
        %v5999 = vpack.c.b16 %v5969, %v5968
        %v6000 = vpack.c.b16 %v5971, %v5970
        %v6001 = vpack.c.b16 %v5973, %v5972
        %v6002 = vpack.c.b16 %v5975, %v5974
        %v6003 = vpack.c.b16 %v5977, %v5976
        %v6004 = vpack.c.b16 %v5979, %v5978
        %v6005 = vpack.c.b16 %v5981, %v5980
        %v6006 = vpack.c.b16 %v5983, %v5982
        %v6007 = vpack.c.b16 %v5985, %v5984
        %v6008 = vpack.c.b16 %v5987, %v5986
        %v6009 = vpack.c.b16 %v5989, %v5988
        %v6010 = vpack.c.b16 %v5991, %v5990
        %v6011 = vpack.c.b16 %v5993, %v5992
        %v6012 = vpack.c.b16 %v5995, %v5994
        %v6013 = vpack.c.b16 %v5997, %v5996
        %6030 = vmatprep.subr.bf16.mxu0 0
        %6031 = vmatpush1.bf16.msra.mxu0 %v6005
        %6032 = vmatprep.subr.bf16.mxu0 0
        %6033 = vmatpush1.bf16.msra.mxu0 %v6004
        %6034 = vmatprep.subr.bf16.mxu0 0
        %6035 = vmatpush1.bf16.msra.mxu0 %v6003
        %6036 = vmatprep.subr.bf16.mxu0 0
        %6037 = vmatpush1.bf16.msra.mxu0 %v6002
        %6038 = vmatprep.subr.bf16.mxu0 0
        %6039 = vmatpush1.bf16.msra.mxu0 %v6001
        %6040 = vmatprep.subr.bf16.mxu0 0
        %6041 = vmatpush1.bf16.msra.mxu0 %v6000
        %6042 = vmatprep.subr.bf16.mxu0 0
        %6043 = vmatpush1.bf16.msra.mxu0 %v5999
        %6044 = vmatprep.subr.bf16.mxu0 0
        %6045 = vmatpush1.bf16.msra.mxu0 %v5998
        %6046 = vmatprep.subr.bf16.mxu0 0
        %6047 = vmatpush2.bf16.msra.mxu0 %v6013
        %6048 = vmatprep.subr.bf16.mxu0 0
        %6049 = vmatpush2.bf16.msra.mxu0 %v6012
        %6050 = vmatprep.subr.bf16.mxu0 0
        %6051 = vmatpush2.bf16.msra.mxu0 %v6011
        %6052 = vmatprep.subr.bf16.mxu0 0
        %6053 = vmatpush2.bf16.msra.mxu0 %v6010
        %6054 = vmatprep.subr.bf16.mxu0 0
        %6055 = vmatpush2.bf16.msra.mxu0 %v6009
        %6056 = vmatprep.subr.bf16.mxu0 0
        %6057 = vmatpush2.bf16.msra.mxu0 %v6008
        %6058 = vmatprep.subr.bf16.mxu0 0
        %6059 = vmatpush2.bf16.msra.mxu0 %v6007
        %6060 = vmatprep.subr.bf16.mxu0 0
        %6061 = vmatpush2.bf16.msra.mxu0 %v6006
        %6062 = vmatprep.mubr.bf16.mxu0 %v5926
        %6063 = vmatmul.mubr.bf16.gmra.mxu0 %v5925
        %v6064 = vpop.f32.mrf.mxu0
        %v6065 = vadd.f32 %v5932, %v6064
        %v6066 = vpop.f32.mrf.mxu0
        %v6067 = vpop.f32.mrf.mxu0
        %v6068 = vadd.f32 %v5932, %v6067
        %v6069 = vpop.f32.mrf.mxu0
        %6070 = vdwg.mxu0
        %v6071 = vadd.f32 %v5695, %v6065
        %v6072 = vadd.f32 %v5696, %v6068
        %6073 = vst [vmem:[#allocation2] sm:$0xff] %v6071
        %6074 = vst [vmem:[#allocation2 + $0x8] sm:$0xff] %v6072
        %p6075 = scmp.eq.s32.totalorder %s75, 1
        // Predicated region
        $region205: #{decoder_forward.1} parent=123 // pred_check
          %p6076 = pneg %p6075
        $region206: #{decoder_forward.1} parent=123 // pred_check_branch
          %6078 = sbr.rel (%p6076) target = $region208
        $region207: #{decoder_forward.1} parent=123 // pred_region
          %v6079 = vld [vmem:[%s24] sm:$0x1]
          %v6080 = vld [vmem:[#allocation32] sm:$0x1]
          %6081 = vadd.xlane.f32.xlu0 %v6071
          %v6082 = vpop.xlane.xlu0 %6081
          %6083 = vadd.xlane.f32.xlu0 %v6072
          %v6084 = vpop.xlane.xlu0 %6083
          %v6085 = vmul.f32 %v6082, %v1565
          %v6086 = vmul.f32 %v6084, %v1565
          %v6087 = vsub.f32 %v6071, %v6085
          %v6088 = vsub.f32 %v6072, %v6086
          %v6089 = vmul.f32 %v6087, %v6087
          %v6090 = vmul.f32 %v6088, %v6088
          %6091 = vadd.xlane.f32.xlu0 %v6089
          %v6092 = vpop.xlane.xlu0 %6091
          %6093 = vadd.xlane.f32.xlu0 %v6090
          %v6094 = vpop.xlane.xlu0 %6093
          %v6095 = vmul.f32 %v6092, %v1565
          %v6096 = vmul.f32 %v6094, %v1565
          %v6097 = vadd.f32 %v6095, 1e-06
          %v6098 = vadd.f32 %v6096, 1e-06
          %v6099 = vrsqrt.pop %v6097
          %v6100 = vrsqrt.pop %v6098
          %v6101 = vmul.f32 %v6087, %v6099
          %v6102 = vmul.f32 %v6088, %v6100
          %v6104 = vlaneseq
          %v6105 = vshrl.u32 %v6104, 7
          %v6106 = vsub.s32 0, %v6105
          %v6107 = vrot.slane %v6079, %v6106
          %v6109 = vmul.f32 %v6101, %v6107
          %v6110 = vmul.f32 %v6102, %v6107
          %v6112 = vlaneseq
          %v6113 = vshrl.u32 %v6112, 7
          %v6114 = vsub.s32 0, %v6113
          %v6115 = vrot.slane %v6080, %v6114
          %v6117 = vadd.f32 %v6109, %v6115
          %v6118 = vadd.f32 %v6110, %v6115
          %6119 = vst [vmem:[%s1513] sm:$0xff] %v6117
          %6120 = vst [vmem:[%s1513 + $0x8] sm:$0xff] %v6118
        $region208: #{decoder_forward.1} parent=123 // pred_fallthru
          _
        %s6121 = sand.u32 %s756, 1
        %s6122 = scalar_lea.sflag [#allocation5], %s6121
        %s6123 = sand.u32 %s756, 1
        %s6124 = smul.addr %s6123, 16
        %s6125 = scalar_lea.vmem [#allocation33], %s6124
        // Predicated region
        $region209: #{decoder_forward.1} parent=123 // pred_check
          %p6126 = pneg %p766
        $region210: #{decoder_forward.1} parent=123 // pred_check_branch
          %6128 = sbr.rel (%p6126) target = $region212
        $region211: #{decoder_forward.1} parent=123 // pred_region
          %s6130 = ssub.s32 256, 256
          %6131 = vsyncadd %s6122, %s6130
          %s6132 = smul.addr %s74, 2
          %s6133 = smul.addr %s6132, 128
          %s6134 = scalar_lea.hbm %s26, %s6133
          %s6135 = sshll.u32 %s6125, 4
          %s6136 = int_to_ptr.vmem [resolvable:$true] %s6135
          %6141 = dma.vmem_to_hbm [thread:$0]  %s6136, 256, %s6134, %s6122, 128, 128, 8
        $region212: #{decoder_forward.1} parent=123 // pred_fallthru
          _
      $region124: #{decoder_forward.1} parent=5 // pred_fallthru
        _
      %p6142 = scmp.le.s32.totalorder 2, %s65
      // Predicated region
      $region213: #{decoder_forward.1} parent=5 // pred_check
        %p6143 = pneg %p6142
      $region214: #{decoder_forward.1} parent=5 // pred_check_branch
        %6145 = sbr.rel (%p6143) target = $region216
      $region215: #{decoder_forward.1} parent=5 // pred_region
        %s6146 = ssub.s32 %s65, 2
        // Predicated region
        $region217: #{decoder_forward.1} parent=215 // pred_check
          %p6147 = pneg %p772
        $region218: #{decoder_forward.1} parent=215 // pred_check_branch
          %6149 = sbr.rel (%p6147) target = $region220
        $region219: #{decoder_forward.1} parent=215 // pred_region
          %s6150 = sand.u32 %s757, 1
          %s6151 = scalar_lea.sflag [#allocation5], %s6150
          %s6152 = sand.u32 %s757, 1
          %s6153 = smul.addr %s6152, 16
          %s6154 = scalar_lea.vmem [#allocation33], %s6153
          %6155 = dma.done %s6151, 256
        $region220: #{decoder_forward.1} parent=215 // pred_fallthru
          _
      $region216: #{decoder_forward.1} parent=5 // pred_fallthru
        _
    $region6: #{decoder_forward.1} parent=1 // loop_footer
      %s69 = sadd.s32 1, %s65
    $region7: #{decoder_forward.1} parent=1 // loop_footer_branch
      %64 = sbr.rel target = $region3
    $region8: #{decoder_forward.1} parent=1 // loop_exit
      _
    %6156 = vsyncpa [#allocation4], 1
    %s6157 = scalar_lea.sflag [#allocation4], 1
    %6158 = vsyncpa %s6157, 1
    %6159 = vsyncpa [#allocation7], 1
    %s6160 = scalar_lea.sflag [#allocation7], 1
    %6161 = vsyncpa %s6160, 1
    %6162 = vsyncpa [#allocation10], 1
    %s6163 = scalar_lea.sflag [#allocation10], 1
    %6164 = vsyncpa %s6163, 1
    %6165 = vsyncpa [#allocation13], 1
    %s6166 = scalar_lea.sflag [#allocation13], 1
    %6167 = vsyncpa %s6166, 1
    %6168 = vsyncpa [#allocation16], 1
    %s6169 = scalar_lea.sflag [#allocation16], 1
    %6170 = vsyncpa %s6169, 1
    %6171 = vsyncpa [#allocation19], 1
    %s6172 = scalar_lea.sflag [#allocation19], 1
    %6173 = vsyncpa %s6172, 1
    %6174 = vsyncpa [#allocation22], 1
    %s6175 = scalar_lea.sflag [#allocation22], 1
    %6176 = vsyncpa %s6175, 1
    %6177 = vsyncpa [#allocation25], 1
    %s6178 = scalar_lea.sflag [#allocation25], 1
    %6179 = vsyncpa %s6178, 1
    %6180 = vsyncpa [#allocation28], 1
    %s6181 = scalar_lea.sflag [#allocation28], 1
    %6182 = vsyncpa %s6181, 1
    %6183 = vsyncpa [#allocation31], 1
    %s6184 = scalar_lea.sflag [#allocation31], 1
    %6185 = vsyncpa %s6184, 1
    %6186 = vsyncpa [#allocation5], 1
    %s6187 = scalar_lea.sflag [#allocation5], 1
    %6188 = vsyncpa %s6187, 1

</llo_original>
